<compile_context>
chip_gen: v6e
topology: v6e:2x2x1
jax: 0.10.0
libtpu: 0.0.40
codegen_flags: <defaults>
</compile_context>

<pallas_src>
import functools

import jax
import jax.numpy as jnp
from jax.experimental import pallas as pl
from jax.experimental.pallas import tpu as pltpu

# ---------------------------------------------------------------------------
# Model hyper-parameters (match E3EGNN_edge defaults)
# ---------------------------------------------------------------------------
F = 11               # atom_features
DE = 4               # edge_dim
L = 4                # num_layers
DIN = 2 * F + 1 + DE # input dim of the edge MLPs
F2 = 2 * F           # fused width of the two edge-MLP branches
FX = F + 3           # fused width of [h | x]
SLAB = FX + 2 * F2   # gathered slab width: [hx | proj_i | proj_j] = 58 lanes

assert FX <= F2, "lane-mask message assembly assumes FX <= 2F"


def _silu(v):
    return v * jax.nn.sigmoid(v)


# ---------------------------------------------------------------------------
# Pallas kernel: full forward pass (4 EGCL layers + mean-pool + linear head)
# ---------------------------------------------------------------------------
def egnn_kernel(hx_ref, ea_ref, g2_ref, gdt_ref, p_ref,
                wgij_ref, wd2_ref, wea_ref, b1_ref,
                w2_ref, b2_ref, w3_ref, b3_ref,
                wu1_ref, bu1_ref, wu2_ref, bu2_ref,
                wlin_ref, blin_ref, out_ref):
    f32 = jnp.float32
    bf16 = jnp.bfloat16
    E = gdt_ref.shape[1]

    hx = hx_ref[...]                       # [N, FX]  = [h | x]  (f32 carried state)
    G2 = g2_ref[...]                       # [2E, N]  = [Gs ; Gd]   bf16 one-hot
    GdT = gdt_ref[...]                     # [N, E]   = Gd^T        bf16 one-hot

    # lane masks splitting the fused lane dim into h lanes (0:F) and x lanes (F:FX)
    lane = jax.lax.broadcasted_iota(jnp.int32, (1, FX), 1)
    x_mask = (lane >= F).astype(f32)       # [1, FX]
    h_mask = 1.0 - x_mask

    # edge-attr contribution (+bias) of every layer's first edge Linear, hoisted:
    # one matmul produces all L layers' [E, 2F] slabs side by side.
    ea_all = jnp.dot(ea_ref[...], wea_ref[...], preferred_element_type=f32) + b1_ref[...]

    for l in range(L):                     # statically unrolled layers
        # --- project-before-gather: both first-Linear endpoint weights at once ---
        proj = jnp.dot(hx, wgij_ref[l], preferred_element_type=f32)   # [N, 4F]
        slab = jnp.concatenate([hx, proj], axis=-1).astype(bf16)      # [N, SLAB]

        # --- gather both endpoints of every edge in ONE bf16 MXU push ------------
        g = jnp.dot(G2, slab, preferred_element_type=f32)             # [2E, SLAB]
        gj = g[:E]                                                    # source (j) rows
        gi = g[E:]                                                    # target (i) rows
        hx_j = gj[:, :FX]
        hx_i = gi[:, :FX]

        diffw = (hx_i - hx_j) * x_mask                                # x_i - x_j in x lanes
        d2 = jnp.sum(diffw * diffw, axis=-1, keepdims=True)           # [E, 1]  d_ij^2
        d = jnp.sqrt(d2)                                              # [E, 1]  d_ij

        # --- first Linear of both edge MLPs, assembled from gathered projections -
        z1 = (gi[:, FX:FX + F2]                       # h_i @ w1[0:F]
              + gj[:, FX + F2:FX + 2 * F2]            # h_j @ w1[F:2F]
              + d2 * wd2_ref[l]
              + ea_all[:, l * F2:(l + 1) * F2])                       # [E, 2F]
        m1 = _silu(z1)
        # fused second Linear (block-diagonal weight) + SiLU
        m2 = _silu(jnp.dot(m1, w2_ref[l], preferred_element_type=f32) + b2_ref[l])  # [E, 2F]
        # fused third stage: col 0 = attention logit, col 1 = msg_x scalar
        z3 = jnp.dot(m2, w3_ref[l], preferred_element_type=f32) + b3_ref[l]         # [E, 2]
        attn = jax.nn.sigmoid(z3[:, 0:1])
        mxs = z3[:, 1:2]

        # --- fused [msg_h | msg_x] message, concat-free via lane masks -----------
        inv = pl.reciprocal(d + 1.0, approx=True)                     # EUP, ~free
        msgs = attn * (m2[:, :FX] * h_mask) + diffw * (inv * mxs)     # [E, FX]

        # --- scatter-add to target nodes: pre-transposed Gd^T, bf16 MXU ---------
        agg = jnp.dot(GdT, msgs.astype(bf16), preferred_element_type=f32)  # [N, FX]

        # --- node update MLP on fused [hx | agg] (one stacked matmul) ------------
        hxa = jnp.concatenate([hx, agg], axis=-1)                     # [N, 2FX]
        u = _silu(jnp.dot(hxa, wu1_ref[l], preferred_element_type=f32)
                  + bu1_ref[l])                                       # [N, F]
        # fused residual update: h lanes += out_h, x lanes += agg_x
        hx = (hx + jnp.dot(u, wu2_ref[l], preferred_element_type=f32)
              + bu2_ref[l] + agg * x_mask)

    # global mean pool (P rows hold 1/count_g) + linear prediction head
    hg = jnp.dot(p_ref[...], hx, preferred_element_type=f32)          # [G, FX]
    out_ref[...] = (jnp.dot(hg, wlin_ref[...], preferred_element_type=f32)
                    + blin_ref[...])                                  # [G, 1]


# ---------------------------------------------------------------------------
# Wrapper: packs weights (block-diagonal / zero-padded / stacked) and calls kernel
# ---------------------------------------------------------------------------
@functools.partial(jax.jit, static_argnames=("num_graphs",))
def e3egnn_edge_forward(h, pos, edge_index, edge_attr, batch, params,
                        lin_w, lin_b, num_graphs):
    f32 = jnp.float32
    N = h.shape[0]
    E = edge_attr.shape[0]
    assert E % 8 == 0, "sublane slices g[:E]/g[E:] assume E % 8 == 0"

    src = edge_index[0]   # j (source)
    dst = edge_index[1]   # i (target), also the aggregation index

    # one-hot gather matrix [Gs ; Gd] and pre-transposed scatter matrix Gd^T, in bf16
    nid = jnp.arange(N)
    Gs = (src[:, None] == nid[None, :])
    Gd = (dst[:, None] == nid[None, :])
    G2 = jnp.concatenate([Gs, Gd], axis=0).astype(jnp.bfloat16)       # [2E, N]
    GdT = (nid[:, None] == dst[None, :]).astype(jnp.bfloat16)         # [N, E]

    onehot_b = (batch[None, :] == jnp.arange(num_graphs)[:, None]).astype(f32)  # [G, N]
    counts = jnp.sum(onehot_b, axis=1, keepdims=True)
    P = onehot_b / counts                                             # mean-pool matrix

    hx0 = jnp.concatenate([h, pos], axis=-1)                          # [N, F+3]

    # ---- pack / pre-split layer weights (all shapes static) ------------------
    w1p = jnp.concatenate([params["w1h"], params["w1x"]], axis=-1)    # [L, DIN, 2F]
    b1p = jnp.concatenate([params["b1h"], params["b1x"]], axis=-1)    # [L, 1, 2F]
    z3r = jnp.zeros((L, 3, F2), f32)
    w_gi = jnp.concatenate([w1p[:, 0:F, :], z3r], axis=1)             # [L, FX, 2F] (h_i rows)
    w_gj = jnp.concatenate([w1p[:, F:2 * F, :], z3r], axis=1)         # [L, FX, 2F] (h_j rows)
    w_gij = jnp.concatenate([w_gi, w_gj], axis=-1)                    # [L, FX, 4F] fused proj
    w_d2 = w1p[:, 2 * F:2 * F + 1, :]                                 # [L, 1, 2F]
    w_ea = w1p[:, 2 * F + 1:, :]                                      # [L, DE, 2F]
    w_ea_flat = jnp.transpose(w_ea, (1, 0, 2)).reshape(DE, L * F2)    # [DE, L*2F]
    b1_flat = jnp.transpose(b1p, (1, 0, 2)).reshape(1, L * F2)        # [1, L*2F]

    zff = jnp.zeros((L, F, F), f32)
    w2bd = jnp.concatenate(
        [jnp.concatenate([params["w2h"], zff], axis=-1),
         jnp.concatenate([zff, params["w2x"]], axis=-1)], axis=1)     # [L, 2F, 2F]
    b2p = jnp.concatenate([params["b2h"], params["b2x"]], axis=-1)    # [L, 1, 2F]

    zc = jnp.zeros((L, F, 1), f32)
    w3bd = jnp.concatenate(
        [jnp.concatenate([params["wa"], zc], axis=-1),
         jnp.concatenate([zc, params["w3x"]], axis=-1)], axis=1)      # [L, 2F, 2]
    b3p = jnp.concatenate([params["ba"], params["b3x"]], axis=-1)     # [L, 1, 2]

    # stacked node-update weight for the fused [hx | agg] ([N, 2FX]) matmul
    zuf = jnp.zeros((L, 3, F), f32)
    wu1s = jnp.concatenate([params["wu1"][:, 0:F, :], zuf,             # h rows, x rows(0)
                            params["wu1"][:, F:2 * F, :], zuf],        # agg_h rows, agg_x(0)
                           axis=1)                                     # [L, 2FX, F]
    wu2p = jnp.concatenate([params["wu2"], jnp.zeros((L, F, 3), f32)], axis=-1)  # [L, F, FX]
    bu2p = jnp.concatenate([params["bu2"], jnp.zeros((L, 1, 3), f32)], axis=-1)  # [L, 1, FX]

    wlinp = jnp.concatenate([lin_w, jnp.zeros((3, 1), f32)], axis=0)   # [FX, 1]

    ins = (hx0, edge_attr, G2, GdT, P,
           w_gij, w_d2, w_ea_flat, b1_flat,
           w2bd, b2p, w3bd, b3p,
           wu1s, params["bu1"], wu2p, bu2p,
           wlinp, lin_b)

    out = pl.pallas_call(
        egnn_kernel,
        out_shape=jax.ShapeDtypeStruct((num_graphs, 1), jnp.float32),
        in_specs=[pl.BlockSpec(memory_space=pltpu.MemorySpace.VMEM)] * len(ins),
        out_specs=pl.BlockSpec(memory_space=pltpu.MemorySpace.VMEM),
        # toy sizes fit easily; raise (with v7x 64 MiB headroom in mind) for real graphs
        compiler_params=pltpu.CompilerParams(vmem_limit_bytes=32 * 1024 * 1024),
    )(*ins)
    return out.reshape(-1)    # out.view(-1)


# ---------------------------------------------------------------------------
# Pure-JAX reference (same math, scatter via segment_sum) for validation
# ---------------------------------------------------------------------------
def reference_forward(h, pos, edge_index, edge_attr, batch, params,
                      lin_w, lin_b, num_graphs):
    src, dst = edge_index[0], edge_index[1]
    N = h.shape[0]
    x = pos
    for l in range(L):
        h_j, h_i = h[src], h[dst]
        x_j, x_i = x[src], x[dst]
        d2 = jnp.sum((x_j - x_i) ** 2, axis=-1, keepdims=True)
        d = jnp.sqrt(d2)
        feat = jnp.concatenate([h_i, h_j, d2, edge_attr], axis=-1)
        m = _silu(feat @ params["w1h"][l] + params["b1h"][l])
        m = _silu(m @ params["w2h"][l] + params["b2h"][l])
        attn = jax.nn.sigmoid(m @ params["wa"][l] + params["ba"][l])
        msg_h = attn * m
        mx = _silu(feat @ params["w1x"][l] + params["b1x"][l])
        mx = _silu(mx @ params["w2x"][l] + params["b2x"][l])
        mx = mx @ params["w3x"][l] + params["b3x"][l]
        msg_x = (x_i - x_j) / (d + 1.0) * mx
        agg_h = jax.ops.segment_sum(msg_h, dst, num_segments=N)
        agg_x = jax.ops.segment_sum(msg_x, dst, num_segments=N)
        u = _silu(jnp.concatenate([h, agg_h], axis=-1) @ params["wu1"][l]
                  + params["bu1"][l])
        out_h = u @ params["wu2"][l] + params["bu2"][l]
        h = h + out_h
        x = x + agg_x
    sums = jax.ops.segment_sum(h, batch, num_segments=num_graphs)
    counts = jax.ops.segment_sum(jnp.ones((N, 1), jnp.float32), batch,
                                 num_segments=num_graphs)
    hg = sums / counts
    return (hg @ lin_w + lin_b).reshape(-1)


# ---------------------------------------------------------------------------
# Deterministic parameter initialization
# ---------------------------------------------------------------------------
def init_params(key):
    shapes = {
        "w1h": (DIN, F), "b1h": (1, F),
        "w2h": (F, F),   "b2h": (1, F),
        "wa":  (F, 1),   "ba":  (1, 1),
        "w1x": (DIN, F), "b1x": (1, F),
        "w2x": (F, F),   "b2x": (1, F),
        "w3x": (F, 1),   "b3x": (1, 1),
        "wu1": (2 * F, F), "bu1": (1, F),
        "wu2": (F, F),   "bu2": (1, F),
    }
    params = {}
    for name, shp in shapes.items():
        key, sub = jax.random.split(key)
        fan_in = shp[0] if not name.startswith("b") else shapes["w" + name[1:]][0]
        scale = 1.0 / jnp.sqrt(jnp.float32(fan_in))
        params[name] = (jax.random.normal(sub, (L,) + shp, jnp.float32) * scale)
    key, k1, k2 = jax.random.split(key, 3)
    lin_w = jax.random.normal(k1, (F, 1), jnp.float32) / jnp.sqrt(jnp.float32(F))
    lin_b = jax.random.normal(k2, (1, 1), jnp.float32) * 0.1
    return params, lin_w, lin_b


# ---------------------------------------------------------------------------
# Main
# ---------------------------------------------------------------------------
if __name__ == "__main__":
    key = jax.random.PRNGKey(0)
    N, E, G = 16, 32, 2   # nodes, edges, graphs

    key, k_h, k_pos, k_ea, k_src, k_dst, k_par = jax.random.split(key, 7)
    h = jax.random.normal(k_h, (N, F), jnp.float32)          # data.x
    pos = jax.random.normal(k_pos, (N, 3), jnp.float32)      # data.pos
    edge_attr = jax.random.normal(k_ea, (E, DE), jnp.float32)

    # edges kept inside each graph's node range (8 nodes / graph)
    src_lo = jax.random.randint(k_src, (E // 2,), 0, N // 2)
    dst_lo = jax.random.randint(k_dst, (E // 2,), 0, N // 2)
    src = jnp.concatenate([src_lo, src_lo + N // 2])
    dst = jnp.concatenate([dst_lo, dst_lo + N // 2])
    edge_index = jnp.stack([src, dst]).astype(jnp.int32)      # [2, E]
    batch = jnp.concatenate([jnp.zeros(N // 2, jnp.int32),
                             jnp.ones(N // 2, jnp.int32)])    # data.batch

    params, lin_w, lin_b = init_params(k_par)

    out = e3egnn_edge_forward(h, pos, edge_index, edge_attr, batch,
                              params, lin_w, lin_b, num_graphs=G)
    out = jax.block_until_ready(out)

    ref = reference_forward(h, pos, edge_index, edge_attr, batch,
                            params, lin_w, lin_b, num_graphs=G)
    assert out.shape == (G,)
    assert jnp.all(jnp.isfinite(out))
    # bf16 MXU inputs (gather/scatter) + approx reciprocal add ~1e-3/layer rounding;
    # well inside the 2e-2 tolerance used against the f32 reference.
    assert jnp.allclose(out, ref, rtol=2e-2, atol=2e-2), (out, ref)

    print("KERNEL_OK")
</pallas_src>

<mosaic_0001>
module attributes {stable_mosaic.version = 11 : i64} {
  func.func @egnn_kernel(%arg0: memref<16x14xf32, #tpu.memory_space<vmem>>, %arg1: memref<32x4xf32, #tpu.memory_space<vmem>>, %arg2: memref<64x16xbf16, #tpu.memory_space<vmem>>, %arg3: memref<16x32xbf16, #tpu.memory_space<vmem>>, %arg4: memref<2x16xf32, #tpu.memory_space<vmem>>, %arg5: memref<4x14x44xf32, #tpu.memory_space<vmem>>, %arg6: memref<4x1x22xf32, #tpu.memory_space<vmem>>, %arg7: memref<4x88xf32, #tpu.memory_space<vmem>>, %arg8: memref<1x88xf32, #tpu.memory_space<vmem>>, %arg9: memref<4x22x22xf32, #tpu.memory_space<vmem>>, %arg10: memref<4x1x22xf32, #tpu.memory_space<vmem>>, %arg11: memref<4x22x2xf32, #tpu.memory_space<vmem>>, %arg12: memref<4x1x2xf32, #tpu.memory_space<vmem>>, %arg13: memref<4x28x11xf32, #tpu.memory_space<vmem>>, %arg14: memref<4x1x11xf32, #tpu.memory_space<vmem>>, %arg15: memref<4x11x14xf32, #tpu.memory_space<vmem>>, %arg16: memref<4x1x14xf32, #tpu.memory_space<vmem>>, %arg17: memref<14x1xf32, #tpu.memory_space<vmem>>, %arg18: memref<1x1xf32, #tpu.memory_space<vmem>>, %arg19: memref<2x1xf32, #tpu.memory_space<vmem>>) attributes {dimension_semantics = [], scalar_prefetch = 0 : i64, scratch_operands = 0 : i64, tpu.core_type = #tpu.core_type<tc>} {
    %c0 = arith.constant 0 : index
    %c0_0 = arith.constant 0 : index
    %0 = vector.load %arg0[%c0, %c0_0] : memref<16x14xf32, #tpu.memory_space<vmem>>, vector<16x14xf32>
    %c0_1 = arith.constant 0 : index
    %c0_2 = arith.constant 0 : index
    %1 = vector.load %arg2[%c0_1, %c0_2] : memref<64x16xbf16, #tpu.memory_space<vmem>>, vector<64x16xbf16>
    %c0_3 = arith.constant 0 : index
    %c0_4 = arith.constant 0 : index
    %2 = vector.load %arg3[%c0_3, %c0_4] : memref<16x32xbf16, #tpu.memory_space<vmem>>, vector<16x32xbf16>
    %3 = tpu.iota {dimensions = array<i32: 1>} : vector<1x14xi32>
    %c11_i32 = arith.constant 11 : i32
    %4 = vector.broadcast %c11_i32 : i32 to vector<1x14xi32>
    %5 = arith.cmpi sge, %3, %4 : vector<1x14xi32>
    %6 = arith.extui %5 : vector<1x14xi1> to vector<1x14xi32>
    %7 = arith.sitofp %6 : vector<1x14xi32> to vector<1x14xf32>
    %cst = arith.constant 1.000000e+00 : f32
    %8 = vector.broadcast %cst : f32 to vector<1x14xf32>
    %9 = arith.subf %8, %7 : vector<1x14xf32>
    %c0_5 = arith.constant 0 : index
    %c0_6 = arith.constant 0 : index
    %10 = vector.load %arg1[%c0_5, %c0_6] : memref<32x4xf32, #tpu.memory_space<vmem>>, vector<32x4xf32>
    %c0_7 = arith.constant 0 : index
    %c0_8 = arith.constant 0 : index
    %11 = vector.load %arg7[%c0_7, %c0_8] : memref<4x88xf32, #tpu.memory_space<vmem>>, vector<4x88xf32>
    %cst_9 = arith.constant dense<0.000000e+00> : vector<32x88xf32>
    %12 = tpu.matmul %10, %11, %cst_9 {dimension_numbers = #tpu.dot_dimension_numbers<[1], [0], [0], [1], [0, 0, 1, 1], [], []>} : vector<32x4xf32>, vector<4x88xf32>, vector<32x88xf32> -> vector<32x88xf32>
    %c0_10 = arith.constant 0 : index
    %c0_11 = arith.constant 0 : index
    %13 = vector.load %arg8[%c0_10, %c0_11] : memref<1x88xf32, #tpu.memory_space<vmem>>, vector<1x88xf32>
    %14 = vector.broadcast %13 : vector<1x88xf32> to vector<32x88xf32>
    %15 = arith.addf %12, %14 : vector<32x88xf32>
    %c0_12 = arith.constant 0 : index
    %c0_13 = arith.constant 0 : index
    %c0_14 = arith.constant 0 : index
    %16 = vector.load %arg5[%c0_12, %c0_13, %c0_14] : memref<4x14x44xf32, #tpu.memory_space<vmem>>, vector<1x14x44xf32>
    %17 = vector.shape_cast %16 : vector<1x14x44xf32> to vector<14x44xf32>
    %cst_15 = arith.constant dense<0.000000e+00> : vector<16x44xf32>
    %18 = tpu.matmul %0, %17, %cst_15 {dimension_numbers = #tpu.dot_dimension_numbers<[1], [0], [0], [1], [0, 0, 1, 1], [], []>} : vector<16x14xf32>, vector<14x44xf32>, vector<16x44xf32> -> vector<16x44xf32>
    %19 = tpu.concatenate %0, %18 in 1 : vector<16x14xf32>, vector<16x44xf32> -> vector<16x58xf32>
    %20 = arith.truncf %19 : vector<16x58xf32> to vector<16x58xbf16>
    %cst_16 = arith.constant dense<0.000000e+00> : vector<64x58xf32>
    %21 = tpu.matmul %1, %20, %cst_16 {dimension_numbers = #tpu.dot_dimension_numbers<[1], [0], [0], [1], [0, 0, 1, 1], [], []>} : vector<64x16xbf16>, vector<16x58xbf16>, vector<64x58xf32> -> vector<64x58xf32>
    %22 = vector.extract_strided_slice %21 {offsets = [0, 0], sizes = [32, 58], strides = [1, 1]} : vector<64x58xf32> to vector<32x58xf32>
    %23 = vector.extract_strided_slice %21 {offsets = [32, 0], sizes = [32, 58], strides = [1, 1]} : vector<64x58xf32> to vector<32x58xf32>
    %24 = vector.extract_strided_slice %22 {offsets = [0, 0], sizes = [32, 14], strides = [1, 1]} : vector<32x58xf32> to vector<32x14xf32>
    %25 = vector.extract_strided_slice %23 {offsets = [0, 0], sizes = [32, 14], strides = [1, 1]} : vector<32x58xf32> to vector<32x14xf32>
    %26 = arith.subf %25, %24 : vector<32x14xf32>
    %27 = vector.broadcast %7 : vector<1x14xf32> to vector<32x14xf32>
    %28 = arith.mulf %26, %27 : vector<32x14xf32>
    %29 = arith.mulf %28, %28 : vector<32x14xf32>
    %cst_17 = arith.constant dense<0.000000e+00> : vector<32xf32>
    %30 = vector.multi_reduction <add>, %29, %cst_17 [1] : vector<32x14xf32> to vector<32xf32>
    %31 = vector.shape_cast %30 : vector<32xf32> to vector<32x1xf32>
    %32 = math.sqrt %31 : vector<32x1xf32>
    %33 = vector.extract_strided_slice %23 {offsets = [0, 14], sizes = [32, 22], strides = [1, 1]} : vector<32x58xf32> to vector<32x22xf32>
    %34 = vector.extract_strided_slice %22 {offsets = [0, 36], sizes = [32, 22], strides = [1, 1]} : vector<32x58xf32> to vector<32x22xf32>
    %35 = arith.addf %33, %34 : vector<32x22xf32>
    %c0_18 = arith.constant 0 : index
    %c0_19 = arith.constant 0 : index
    %c0_20 = arith.constant 0 : index
    %36 = vector.load %arg6[%c0_18, %c0_19, %c0_20] : memref<4x1x22xf32, #tpu.memory_space<vmem>>, vector<1x1x22xf32>
    %37 = vector.shape_cast %36 : vector<1x1x22xf32> to vector<1x22xf32>
    %38 = vector.broadcast %31 : vector<32x1xf32> to vector<32x22xf32>
    %39 = vector.broadcast %37 : vector<1x22xf32> to vector<32x22xf32>
    %40 = arith.mulf %38, %39 : vector<32x22xf32>
    %41 = arith.addf %35, %40 : vector<32x22xf32>
    %42 = vector.extract_strided_slice %15 {offsets = [0, 0], sizes = [32, 22], strides = [1, 1]} : vector<32x88xf32> to vector<32x22xf32>
    %43 = arith.addf %41, %42 : vector<32x22xf32>
    %44 = arith.negf %43 : vector<32x22xf32>
    %45 = math.exp %44 : vector<32x22xf32>
    %cst_21 = arith.constant 1.000000e+00 : f32
    %46 = vector.broadcast %cst_21 : f32 to vector<32x22xf32>
    %47 = arith.addf %46, %45 : vector<32x22xf32>
    %48 = arith.divf %46, %47 : vector<32x22xf32>
    %49 = arith.mulf %43, %48 : vector<32x22xf32>
    %c0_22 = arith.constant 0 : index
    %c0_23 = arith.constant 0 : index
    %c0_24 = arith.constant 0 : index
    %50 = vector.load %arg9[%c0_22, %c0_23, %c0_24] : memref<4x22x22xf32, #tpu.memory_space<vmem>>, vector<1x22x22xf32>
    %51 = vector.shape_cast %50 : vector<1x22x22xf32> to vector<22x22xf32>
    %cst_25 = arith.constant dense<0.000000e+00> : vector<32x22xf32>
    %52 = tpu.matmul %49, %51, %cst_25 {dimension_numbers = #tpu.dot_dimension_numbers<[1], [0], [0], [1], [0, 0, 1, 1], [], []>} : vector<32x22xf32>, vector<22x22xf32>, vector<32x22xf32> -> vector<32x22xf32>
    %c0_26 = arith.constant 0 : index
    %c0_27 = arith.constant 0 : index
    %c0_28 = arith.constant 0 : index
    %53 = vector.load %arg10[%c0_26, %c0_27, %c0_28] : memref<4x1x22xf32, #tpu.memory_space<vmem>>, vector<1x1x22xf32>
    %54 = vector.shape_cast %53 : vector<1x1x22xf32> to vector<1x22xf32>
    %55 = vector.broadcast %54 : vector<1x22xf32> to vector<32x22xf32>
    %56 = arith.addf %52, %55 : vector<32x22xf32>
    %57 = arith.negf %56 : vector<32x22xf32>
    %58 = math.exp %57 : vector<32x22xf32>
    %cst_29 = arith.constant 1.000000e+00 : f32
    %59 = vector.broadcast %cst_29 : f32 to vector<32x22xf32>
    %60 = arith.addf %59, %58 : vector<32x22xf32>
    %61 = arith.divf %59, %60 : vector<32x22xf32>
    %62 = arith.mulf %56, %61 : vector<32x22xf32>
    %c0_30 = arith.constant 0 : index
    %c0_31 = arith.constant 0 : index
    %c0_32 = arith.constant 0 : index
    %63 = vector.load %arg11[%c0_30, %c0_31, %c0_32] : memref<4x22x2xf32, #tpu.memory_space<vmem>>, vector<1x22x2xf32>
    %64 = vector.shape_cast %63 : vector<1x22x2xf32> to vector<22x2xf32>
    %cst_33 = arith.constant dense<0.000000e+00> : vector<32x2xf32>
    %65 = tpu.matmul %62, %64, %cst_33 {dimension_numbers = #tpu.dot_dimension_numbers<[1], [0], [0], [1], [0, 0, 1, 1], [], []>} : vector<32x22xf32>, vector<22x2xf32>, vector<32x2xf32> -> vector<32x2xf32>
    %c0_34 = arith.constant 0 : index
    %c0_35 = arith.constant 0 : index
    %c0_36 = arith.constant 0 : index
    %66 = vector.load %arg12[%c0_34, %c0_35, %c0_36] : memref<4x1x2xf32, #tpu.memory_space<vmem>>, vector<1x1x2xf32>
    %67 = vector.shape_cast %66 : vector<1x1x2xf32> to vector<1x2xf32>
    %68 = vector.broadcast %67 : vector<1x2xf32> to vector<32x2xf32>
    %69 = arith.addf %65, %68 : vector<32x2xf32>
    %70 = vector.extract_strided_slice %69 {offsets = [0, 0], sizes = [32, 1], strides = [1, 1]} : vector<32x2xf32> to vector<32x1xf32>
    %71 = arith.negf %70 : vector<32x1xf32>
    %72 = math.exp %71 : vector<32x1xf32>
    %cst_37 = arith.constant 1.000000e+00 : f32
    %73 = vector.broadcast %cst_37 : f32 to vector<32x1xf32>
    %74 = arith.addf %73, %72 : vector<32x1xf32>
    %75 = arith.divf %73, %74 : vector<32x1xf32>
    %76 = vector.extract_strided_slice %69 {offsets = [0, 1], sizes = [32, 1], strides = [1, 1]} : vector<32x2xf32> to vector<32x1xf32>
    %cst_38 = arith.constant 1.000000e+00 : f32
    %77 = vector.broadcast %cst_38 : f32 to vector<32x1xf32>
    %78 = arith.addf %32, %77 : vector<32x1xf32>
    %79 = tpu.reciprocal %78 {approx = true} : vector<32x1xf32> -> vector<32x1xf32>
    %80 = vector.extract_strided_slice %62 {offsets = [0, 0], sizes = [32, 14], strides = [1, 1]} : vector<32x22xf32> to vector<32x14xf32>
    %81 = vector.broadcast %9 : vector<1x14xf32> to vector<32x14xf32>
    %82 = arith.mulf %80, %81 : vector<32x14xf32>
    %83 = vector.broadcast %75 : vector<32x1xf32> to vector<32x14xf32>
    %84 = arith.mulf %83, %82 : vector<32x14xf32>
    %85 = arith.mulf %79, %76 : vector<32x1xf32>
    %86 = vector.broadcast %85 : vector<32x1xf32> to vector<32x14xf32>
    %87 = arith.mulf %28, %86 : vector<32x14xf32>
    %88 = arith.addf %84, %87 : vector<32x14xf32>
    %89 = arith.truncf %88 : vector<32x14xf32> to vector<32x14xbf16>
    %cst_39 = arith.constant dense<0.000000e+00> : vector<16x14xf32>
    %90 = tpu.matmul %2, %89, %cst_39 {dimension_numbers = #tpu.dot_dimension_numbers<[1], [0], [0], [1], [0, 0, 1, 1], [], []>} : vector<16x32xbf16>, vector<32x14xbf16>, vector<16x14xf32> -> vector<16x14xf32>
    %91 = tpu.concatenate %0, %90 in 1 : vector<16x14xf32>, vector<16x14xf32> -> vector<16x28xf32>
    %c0_40 = arith.constant 0 : index
    %c0_41 = arith.constant 0 : index
    %c0_42 = arith.constant 0 : index
    %92 = vector.load %arg13[%c0_40, %c0_41, %c0_42] : memref<4x28x11xf32, #tpu.memory_space<vmem>>, vector<1x28x11xf32>
    %93 = vector.shape_cast %92 : vector<1x28x11xf32> to vector<28x11xf32>
    %cst_43 = arith.constant dense<0.000000e+00> : vector<16x11xf32>
    %94 = tpu.matmul %91, %93, %cst_43 {dimension_numbers = #tpu.dot_dimension_numbers<[1], [0], [0], [1], [0, 0, 1, 1], [], []>} : vector<16x28xf32>, vector<28x11xf32>, vector<16x11xf32> -> vector<16x11xf32>
    %c0_44 = arith.constant 0 : index
    %c0_45 = arith.constant 0 : index
    %c0_46 = arith.constant 0 : index
    %95 = vector.load %arg14[%c0_44, %c0_45, %c0_46] : memref<4x1x11xf32, #tpu.memory_space<vmem>>, vector<1x1x11xf32>
    %96 = vector.shape_cast %95 : vector<1x1x11xf32> to vector<1x11xf32>
    %97 = vector.broadcast %96 : vector<1x11xf32> to vector<16x11xf32>
    %98 = arith.addf %94, %97 : vector<16x11xf32>
    %99 = arith.negf %98 : vector<16x11xf32>
    %100 = math.exp %99 : vector<16x11xf32>
    %cst_47 = arith.constant 1.000000e+00 : f32
    %101 = vector.broadcast %cst_47 : f32 to vector<16x11xf32>
    %102 = arith.addf %101, %100 : vector<16x11xf32>
    %103 = arith.divf %101, %102 : vector<16x11xf32>
    %104 = arith.mulf %98, %103 : vector<16x11xf32>
    %c0_48 = arith.constant 0 : index
    %c0_49 = arith.constant 0 : index
    %c0_50 = arith.constant 0 : index
    %105 = vector.load %arg15[%c0_48, %c0_49, %c0_50] : memref<4x11x14xf32, #tpu.memory_space<vmem>>, vector<1x11x14xf32>
    %106 = vector.shape_cast %105 : vector<1x11x14xf32> to vector<11x14xf32>
    %cst_51 = arith.constant dense<0.000000e+00> : vector<16x14xf32>
    %107 = tpu.matmul %104, %106, %cst_51 {dimension_numbers = #tpu.dot_dimension_numbers<[1], [0], [0], [1], [0, 0, 1, 1], [], []>} : vector<16x11xf32>, vector<11x14xf32>, vector<16x14xf32> -> vector<16x14xf32>
    %108 = arith.addf %0, %107 : vector<16x14xf32>
    %c0_52 = arith.constant 0 : index
    %c0_53 = arith.constant 0 : index
    %c0_54 = arith.constant 0 : index
    %109 = vector.load %arg16[%c0_52, %c0_53, %c0_54] : memref<4x1x14xf32, #tpu.memory_space<vmem>>, vector<1x1x14xf32>
    %110 = vector.shape_cast %109 : vector<1x1x14xf32> to vector<1x14xf32>
    %111 = vector.broadcast %110 : vector<1x14xf32> to vector<16x14xf32>
    %112 = arith.addf %108, %111 : vector<16x14xf32>
    %113 = vector.broadcast %7 : vector<1x14xf32> to vector<16x14xf32>
    %114 = arith.mulf %90, %113 : vector<16x14xf32>
    %115 = arith.addf %112, %114 : vector<16x14xf32>
    %c1 = arith.constant 1 : index
    %c0_55 = arith.constant 0 : index
    %c0_56 = arith.constant 0 : index
    %116 = vector.load %arg5[%c1, %c0_55, %c0_56] : memref<4x14x44xf32, #tpu.memory_space<vmem>>, vector<1x14x44xf32>
    %117 = vector.shape_cast %116 : vector<1x14x44xf32> to vector<14x44xf32>
    %cst_57 = arith.constant dense<0.000000e+00> : vector<16x44xf32>
    %118 = tpu.matmul %115, %117, %cst_57 {dimension_numbers = #tpu.dot_dimension_numbers<[1], [0], [0], [1], [0, 0, 1, 1], [], []>} : vector<16x14xf32>, vector<14x44xf32>, vector<16x44xf32> -> vector<16x44xf32>
    %119 = tpu.concatenate %115, %118 in 1 : vector<16x14xf32>, vector<16x44xf32> -> vector<16x58xf32>
    %120 = arith.truncf %119 : vector<16x58xf32> to vector<16x58xbf16>
    %cst_58 = arith.constant dense<0.000000e+00> : vector<64x58xf32>
    %121 = tpu.matmul %1, %120, %cst_58 {dimension_numbers = #tpu.dot_dimension_numbers<[1], [0], [0], [1], [0, 0, 1, 1], [], []>} : vector<64x16xbf16>, vector<16x58xbf16>, vector<64x58xf32> -> vector<64x58xf32>
    %122 = vector.extract_strided_slice %121 {offsets = [0, 0], sizes = [32, 58], strides = [1, 1]} : vector<64x58xf32> to vector<32x58xf32>
    %123 = vector.extract_strided_slice %121 {offsets = [32, 0], sizes = [32, 58], strides = [1, 1]} : vector<64x58xf32> to vector<32x58xf32>
    %124 = vector.extract_strided_slice %122 {offsets = [0, 0], sizes = [32, 14], strides = [1, 1]} : vector<32x58xf32> to vector<32x14xf32>
    %125 = vector.extract_strided_slice %123 {offsets = [0, 0], sizes = [32, 14], strides = [1, 1]} : vector<32x58xf32> to vector<32x14xf32>
    %126 = arith.subf %125, %124 : vector<32x14xf32>
    %127 = vector.broadcast %7 : vector<1x14xf32> to vector<32x14xf32>
    %128 = arith.mulf %126, %127 : vector<32x14xf32>
    %129 = arith.mulf %128, %128 : vector<32x14xf32>
    %cst_59 = arith.constant dense<0.000000e+00> : vector<32xf32>
    %130 = vector.multi_reduction <add>, %129, %cst_59 [1] : vector<32x14xf32> to vector<32xf32>
    %131 = vector.shape_cast %130 : vector<32xf32> to vector<32x1xf32>
    %132 = math.sqrt %131 : vector<32x1xf32>
    %133 = vector.extract_strided_slice %123 {offsets = [0, 14], sizes = [32, 22], strides = [1, 1]} : vector<32x58xf32> to vector<32x22xf32>
    %134 = vector.extract_strided_slice %122 {offsets = [0, 36], sizes = [32, 22], strides = [1, 1]} : vector<32x58xf32> to vector<32x22xf32>
    %135 = arith.addf %133, %134 : vector<32x22xf32>
    %c1_60 = arith.constant 1 : index
    %c0_61 = arith.constant 0 : index
    %c0_62 = arith.constant 0 : index
    %136 = vector.load %arg6[%c1_60, %c0_61, %c0_62] : memref<4x1x22xf32, #tpu.memory_space<vmem>>, vector<1x1x22xf32>
    %137 = vector.shape_cast %136 : vector<1x1x22xf32> to vector<1x22xf32>
    %138 = vector.broadcast %131 : vector<32x1xf32> to vector<32x22xf32>
    %139 = vector.broadcast %137 : vector<1x22xf32> to vector<32x22xf32>
    %140 = arith.mulf %138, %139 : vector<32x22xf32>
    %141 = arith.addf %135, %140 : vector<32x22xf32>
    %142 = vector.extract_strided_slice %15 {offsets = [0, 22], sizes = [32, 22], strides = [1, 1]} : vector<32x88xf32> to vector<32x22xf32>
    %143 = arith.addf %141, %142 : vector<32x22xf32>
    %144 = arith.negf %143 : vector<32x22xf32>
    %145 = math.exp %144 : vector<32x22xf32>
    %cst_63 = arith.constant 1.000000e+00 : f32
    %146 = vector.broadcast %cst_63 : f32 to vector<32x22xf32>
    %147 = arith.addf %146, %145 : vector<32x22xf32>
    %148 = arith.divf %146, %147 : vector<32x22xf32>
    %149 = arith.mulf %143, %148 : vector<32x22xf32>
    %c1_64 = arith.constant 1 : index
    %c0_65 = arith.constant 0 : index
    %c0_66 = arith.constant 0 : index
    %150 = vector.load %arg9[%c1_64, %c0_65, %c0_66] : memref<4x22x22xf32, #tpu.memory_space<vmem>>, vector<1x22x22xf32>
    %151 = vector.shape_cast %150 : vector<1x22x22xf32> to vector<22x22xf32>
    %cst_67 = arith.constant dense<0.000000e+00> : vector<32x22xf32>
    %152 = tpu.matmul %149, %151, %cst_67 {dimension_numbers = #tpu.dot_dimension_numbers<[1], [0], [0], [1], [0, 0, 1, 1], [], []>} : vector<32x22xf32>, vector<22x22xf32>, vector<32x22xf32> -> vector<32x22xf32>
    %c1_68 = arith.constant 1 : index
    %c0_69 = arith.constant 0 : index
    %c0_70 = arith.constant 0 : index
    %153 = vector.load %arg10[%c1_68, %c0_69, %c0_70] : memref<4x1x22xf32, #tpu.memory_space<vmem>>, vector<1x1x22xf32>
    %154 = vector.shape_cast %153 : vector<1x1x22xf32> to vector<1x22xf32>
    %155 = vector.broadcast %154 : vector<1x22xf32> to vector<32x22xf32>
    %156 = arith.addf %152, %155 : vector<32x22xf32>
    %157 = arith.negf %156 : vector<32x22xf32>
    %158 = math.exp %157 : vector<32x22xf32>
    %cst_71 = arith.constant 1.000000e+00 : f32
    %159 = vector.broadcast %cst_71 : f32 to vector<32x22xf32>
    %160 = arith.addf %159, %158 : vector<32x22xf32>
    %161 = arith.divf %159, %160 : vector<32x22xf32>
    %162 = arith.mulf %156, %161 : vector<32x22xf32>
    %c1_72 = arith.constant 1 : index
    %c0_73 = arith.constant 0 : index
    %c0_74 = arith.constant 0 : index
    %163 = vector.load %arg11[%c1_72, %c0_73, %c0_74] : memref<4x22x2xf32, #tpu.memory_space<vmem>>, vector<1x22x2xf32>
    %164 = vector.shape_cast %163 : vector<1x22x2xf32> to vector<22x2xf32>
    %cst_75 = arith.constant dense<0.000000e+00> : vector<32x2xf32>
    %165 = tpu.matmul %162, %164, %cst_75 {dimension_numbers = #tpu.dot_dimension_numbers<[1], [0], [0], [1], [0, 0, 1, 1], [], []>} : vector<32x22xf32>, vector<22x2xf32>, vector<32x2xf32> -> vector<32x2xf32>
    %c1_76 = arith.constant 1 : index
    %c0_77 = arith.constant 0 : index
    %c0_78 = arith.constant 0 : index
    %166 = vector.load %arg12[%c1_76, %c0_77, %c0_78] : memref<4x1x2xf32, #tpu.memory_space<vmem>>, vector<1x1x2xf32>
    %167 = vector.shape_cast %166 : vector<1x1x2xf32> to vector<1x2xf32>
    %168 = vector.broadcast %167 : vector<1x2xf32> to vector<32x2xf32>
    %169 = arith.addf %165, %168 : vector<32x2xf32>
    %170 = vector.extract_strided_slice %169 {offsets = [0, 0], sizes = [32, 1], strides = [1, 1]} : vector<32x2xf32> to vector<32x1xf32>
    %171 = arith.negf %170 : vector<32x1xf32>
    %172 = math.exp %171 : vector<32x1xf32>
    %cst_79 = arith.constant 1.000000e+00 : f32
    %173 = vector.broadcast %cst_79 : f32 to vector<32x1xf32>
    %174 = arith.addf %173, %172 : vector<32x1xf32>
    %175 = arith.divf %173, %174 : vector<32x1xf32>
    %176 = vector.extract_strided_slice %169 {offsets = [0, 1], sizes = [32, 1], strides = [1, 1]} : vector<32x2xf32> to vector<32x1xf32>
    %cst_80 = arith.constant 1.000000e+00 : f32
    %177 = vector.broadcast %cst_80 : f32 to vector<32x1xf32>
    %178 = arith.addf %132, %177 : vector<32x1xf32>
    %179 = tpu.reciprocal %178 {approx = true} : vector<32x1xf32> -> vector<32x1xf32>
    %180 = vector.extract_strided_slice %162 {offsets = [0, 0], sizes = [32, 14], strides = [1, 1]} : vector<32x22xf32> to vector<32x14xf32>
    %181 = vector.broadcast %9 : vector<1x14xf32> to vector<32x14xf32>
    %182 = arith.mulf %180, %181 : vector<32x14xf32>
    %183 = vector.broadcast %175 : vector<32x1xf32> to vector<32x14xf32>
    %184 = arith.mulf %183, %182 : vector<32x14xf32>
    %185 = arith.mulf %179, %176 : vector<32x1xf32>
    %186 = vector.broadcast %185 : vector<32x1xf32> to vector<32x14xf32>
    %187 = arith.mulf %128, %186 : vector<32x14xf32>
    %188 = arith.addf %184, %187 : vector<32x14xf32>
    %189 = arith.truncf %188 : vector<32x14xf32> to vector<32x14xbf16>
    %cst_81 = arith.constant dense<0.000000e+00> : vector<16x14xf32>
    %190 = tpu.matmul %2, %189, %cst_81 {dimension_numbers = #tpu.dot_dimension_numbers<[1], [0], [0], [1], [0, 0, 1, 1], [], []>} : vector<16x32xbf16>, vector<32x14xbf16>, vector<16x14xf32> -> vector<16x14xf32>
    %191 = tpu.concatenate %115, %190 in 1 : vector<16x14xf32>, vector<16x14xf32> -> vector<16x28xf32>
    %c1_82 = arith.constant 1 : index
    %c0_83 = arith.constant 0 : index
    %c0_84 = arith.constant 0 : index
    %192 = vector.load %arg13[%c1_82, %c0_83, %c0_84] : memref<4x28x11xf32, #tpu.memory_space<vmem>>, vector<1x28x11xf32>
    %193 = vector.shape_cast %192 : vector<1x28x11xf32> to vector<28x11xf32>
    %cst_85 = arith.constant dense<0.000000e+00> : vector<16x11xf32>
    %194 = tpu.matmul %191, %193, %cst_85 {dimension_numbers = #tpu.dot_dimension_numbers<[1], [0], [0], [1], [0, 0, 1, 1], [], []>} : vector<16x28xf32>, vector<28x11xf32>, vector<16x11xf32> -> vector<16x11xf32>
    %c1_86 = arith.constant 1 : index
    %c0_87 = arith.constant 0 : index
    %c0_88 = arith.constant 0 : index
    %195 = vector.load %arg14[%c1_86, %c0_87, %c0_88] : memref<4x1x11xf32, #tpu.memory_space<vmem>>, vector<1x1x11xf32>
    %196 = vector.shape_cast %195 : vector<1x1x11xf32> to vector<1x11xf32>
    %197 = vector.broadcast %196 : vector<1x11xf32> to vector<16x11xf32>
    %198 = arith.addf %194, %197 : vector<16x11xf32>
    %199 = arith.negf %198 : vector<16x11xf32>
    %200 = math.exp %199 : vector<16x11xf32>
    %cst_89 = arith.constant 1.000000e+00 : f32
    %201 = vector.broadcast %cst_89 : f32 to vector<16x11xf32>
    %202 = arith.addf %201, %200 : vector<16x11xf32>
    %203 = arith.divf %201, %202 : vector<16x11xf32>
    %204 = arith.mulf %198, %203 : vector<16x11xf32>
    %c1_90 = arith.constant 1 : index
    %c0_91 = arith.constant 0 : index
    %c0_92 = arith.constant 0 : index
    %205 = vector.load %arg15[%c1_90, %c0_91, %c0_92] : memref<4x11x14xf32, #tpu.memory_space<vmem>>, vector<1x11x14xf32>
    %206 = vector.shape_cast %205 : vector<1x11x14xf32> to vector<11x14xf32>
    %cst_93 = arith.constant dense<0.000000e+00> : vector<16x14xf32>
    %207 = tpu.matmul %204, %206, %cst_93 {dimension_numbers = #tpu.dot_dimension_numbers<[1], [0], [0], [1], [0, 0, 1, 1], [], []>} : vector<16x11xf32>, vector<11x14xf32>, vector<16x14xf32> -> vector<16x14xf32>
    %208 = arith.addf %115, %207 : vector<16x14xf32>
    %c1_94 = arith.constant 1 : index
    %c0_95 = arith.constant 0 : index
    %c0_96 = arith.constant 0 : index
    %209 = vector.load %arg16[%c1_94, %c0_95, %c0_96] : memref<4x1x14xf32, #tpu.memory_space<vmem>>, vector<1x1x14xf32>
    %210 = vector.shape_cast %209 : vector<1x1x14xf32> to vector<1x14xf32>
    %211 = vector.broadcast %210 : vector<1x14xf32> to vector<16x14xf32>
    %212 = arith.addf %208, %211 : vector<16x14xf32>
    %213 = vector.broadcast %7 : vector<1x14xf32> to vector<16x14xf32>
    %214 = arith.mulf %190, %213 : vector<16x14xf32>
    %215 = arith.addf %212, %214 : vector<16x14xf32>
    %c2 = arith.constant 2 : index
    %c0_97 = arith.constant 0 : index
    %c0_98 = arith.constant 0 : index
    %216 = vector.load %arg5[%c2, %c0_97, %c0_98] : memref<4x14x44xf32, #tpu.memory_space<vmem>>, vector<1x14x44xf32>
    %217 = vector.shape_cast %216 : vector<1x14x44xf32> to vector<14x44xf32>
    %cst_99 = arith.constant dense<0.000000e+00> : vector<16x44xf32>
    %218 = tpu.matmul %215, %217, %cst_99 {dimension_numbers = #tpu.dot_dimension_numbers<[1], [0], [0], [1], [0, 0, 1, 1], [], []>} : vector<16x14xf32>, vector<14x44xf32>, vector<16x44xf32> -> vector<16x44xf32>
    %219 = tpu.concatenate %215, %218 in 1 : vector<16x14xf32>, vector<16x44xf32> -> vector<16x58xf32>
    %220 = arith.truncf %219 : vector<16x58xf32> to vector<16x58xbf16>
    %cst_100 = arith.constant dense<0.000000e+00> : vector<64x58xf32>
    %221 = tpu.matmul %1, %220, %cst_100 {dimension_numbers = #tpu.dot_dimension_numbers<[1], [0], [0], [1], [0, 0, 1, 1], [], []>} : vector<64x16xbf16>, vector<16x58xbf16>, vector<64x58xf32> -> vector<64x58xf32>
    %222 = vector.extract_strided_slice %221 {offsets = [0, 0], sizes = [32, 58], strides = [1, 1]} : vector<64x58xf32> to vector<32x58xf32>
    %223 = vector.extract_strided_slice %221 {offsets = [32, 0], sizes = [32, 58], strides = [1, 1]} : vector<64x58xf32> to vector<32x58xf32>
    %224 = vector.extract_strided_slice %222 {offsets = [0, 0], sizes = [32, 14], strides = [1, 1]} : vector<32x58xf32> to vector<32x14xf32>
    %225 = vector.extract_strided_slice %223 {offsets = [0, 0], sizes = [32, 14], strides = [1, 1]} : vector<32x58xf32> to vector<32x14xf32>
    %226 = arith.subf %225, %224 : vector<32x14xf32>
    %227 = vector.broadcast %7 : vector<1x14xf32> to vector<32x14xf32>
    %228 = arith.mulf %226, %227 : vector<32x14xf32>
    %229 = arith.mulf %228, %228 : vector<32x14xf32>
    %cst_101 = arith.constant dense<0.000000e+00> : vector<32xf32>
    %230 = vector.multi_reduction <add>, %229, %cst_101 [1] : vector<32x14xf32> to vector<32xf32>
    %231 = vector.shape_cast %230 : vector<32xf32> to vector<32x1xf32>
    %232 = math.sqrt %231 : vector<32x1xf32>
    %233 = vector.extract_strided_slice %223 {offsets = [0, 14], sizes = [32, 22], strides = [1, 1]} : vector<32x58xf32> to vector<32x22xf32>
    %234 = vector.extract_strided_slice %222 {offsets = [0, 36], sizes = [32, 22], strides = [1, 1]} : vector<32x58xf32> to vector<32x22xf32>
    %235 = arith.addf %233, %234 : vector<32x22xf32>
    %c2_102 = arith.constant 2 : index
    %c0_103 = arith.constant 0 : index
    %c0_104 = arith.constant 0 : index
    %236 = vector.load %arg6[%c2_102, %c0_103, %c0_104] : memref<4x1x22xf32, #tpu.memory_space<vmem>>, vector<1x1x22xf32>
    %237 = vector.shape_cast %236 : vector<1x1x22xf32> to vector<1x22xf32>
    %238 = vector.broadcast %231 : vector<32x1xf32> to vector<32x22xf32>
    %239 = vector.broadcast %237 : vector<1x22xf32> to vector<32x22xf32>
    %240 = arith.mulf %238, %239 : vector<32x22xf32>
    %241 = arith.addf %235, %240 : vector<32x22xf32>
    %242 = vector.extract_strided_slice %15 {offsets = [0, 44], sizes = [32, 22], strides = [1, 1]} : vector<32x88xf32> to vector<32x22xf32>
    %243 = arith.addf %241, %242 : vector<32x22xf32>
    %244 = arith.negf %243 : vector<32x22xf32>
    %245 = math.exp %244 : vector<32x22xf32>
    %cst_105 = arith.constant 1.000000e+00 : f32
    %246 = vector.broadcast %cst_105 : f32 to vector<32x22xf32>
    %247 = arith.addf %246, %245 : vector<32x22xf32>
    %248 = arith.divf %246, %247 : vector<32x22xf32>
    %249 = arith.mulf %243, %248 : vector<32x22xf32>
    %c2_106 = arith.constant 2 : index
    %c0_107 = arith.constant 0 : index
    %c0_108 = arith.constant 0 : index
    %250 = vector.load %arg9[%c2_106, %c0_107, %c0_108] : memref<4x22x22xf32, #tpu.memory_space<vmem>>, vector<1x22x22xf32>
    %251 = vector.shape_cast %250 : vector<1x22x22xf32> to vector<22x22xf32>
    %cst_109 = arith.constant dense<0.000000e+00> : vector<32x22xf32>
    %252 = tpu.matmul %249, %251, %cst_109 {dimension_numbers = #tpu.dot_dimension_numbers<[1], [0], [0], [1], [0, 0, 1, 1], [], []>} : vector<32x22xf32>, vector<22x22xf32>, vector<32x22xf32> -> vector<32x22xf32>
    %c2_110 = arith.constant 2 : index
    %c0_111 = arith.constant 0 : index
    %c0_112 = arith.constant 0 : index
    %253 = vector.load %arg10[%c2_110, %c0_111, %c0_112] : memref<4x1x22xf32, #tpu.memory_space<vmem>>, vector<1x1x22xf32>
    %254 = vector.shape_cast %253 : vector<1x1x22xf32> to vector<1x22xf32>
    %255 = vector.broadcast %254 : vector<1x22xf32> to vector<32x22xf32>
    %256 = arith.addf %252, %255 : vector<32x22xf32>
    %257 = arith.negf %256 : vector<32x22xf32>
    %258 = math.exp %257 : vector<32x22xf32>
    %cst_113 = arith.constant 1.000000e+00 : f32
    %259 = vector.broadcast %cst_113 : f32 to vector<32x22xf32>
    %260 = arith.addf %259, %258 : vector<32x22xf32>
    %261 = arith.divf %259, %260 : vector<32x22xf32>
    %262 = arith.mulf %256, %261 : vector<32x22xf32>
    %c2_114 = arith.constant 2 : index
    %c0_115 = arith.constant 0 : index
    %c0_116 = arith.constant 0 : index
    %263 = vector.load %arg11[%c2_114, %c0_115, %c0_116] : memref<4x22x2xf32, #tpu.memory_space<vmem>>, vector<1x22x2xf32>
    %264 = vector.shape_cast %263 : vector<1x22x2xf32> to vector<22x2xf32>
    %cst_117 = arith.constant dense<0.000000e+00> : vector<32x2xf32>
    %265 = tpu.matmul %262, %264, %cst_117 {dimension_numbers = #tpu.dot_dimension_numbers<[1], [0], [0], [1], [0, 0, 1, 1], [], []>} : vector<32x22xf32>, vector<22x2xf32>, vector<32x2xf32> -> vector<32x2xf32>
    %c2_118 = arith.constant 2 : index
    %c0_119 = arith.constant 0 : index
    %c0_120 = arith.constant 0 : index
    %266 = vector.load %arg12[%c2_118, %c0_119, %c0_120] : memref<4x1x2xf32, #tpu.memory_space<vmem>>, vector<1x1x2xf32>
    %267 = vector.shape_cast %266 : vector<1x1x2xf32> to vector<1x2xf32>
    %268 = vector.broadcast %267 : vector<1x2xf32> to vector<32x2xf32>
    %269 = arith.addf %265, %268 : vector<32x2xf32>
    %270 = vector.extract_strided_slice %269 {offsets = [0, 0], sizes = [32, 1], strides = [1, 1]} : vector<32x2xf32> to vector<32x1xf32>
    %271 = arith.negf %270 : vector<32x1xf32>
    %272 = math.exp %271 : vector<32x1xf32>
    %cst_121 = arith.constant 1.000000e+00 : f32
    %273 = vector.broadcast %cst_121 : f32 to vector<32x1xf32>
    %274 = arith.addf %273, %272 : vector<32x1xf32>
    %275 = arith.divf %273, %274 : vector<32x1xf32>
    %276 = vector.extract_strided_slice %269 {offsets = [0, 1], sizes = [32, 1], strides = [1, 1]} : vector<32x2xf32> to vector<32x1xf32>
    %cst_122 = arith.constant 1.000000e+00 : f32
    %277 = vector.broadcast %cst_122 : f32 to vector<32x1xf32>
    %278 = arith.addf %232, %277 : vector<32x1xf32>
    %279 = tpu.reciprocal %278 {approx = true} : vector<32x1xf32> -> vector<32x1xf32>
    %280 = vector.extract_strided_slice %262 {offsets = [0, 0], sizes = [32, 14], strides = [1, 1]} : vector<32x22xf32> to vector<32x14xf32>
    %281 = vector.broadcast %9 : vector<1x14xf32> to vector<32x14xf32>
    %282 = arith.mulf %280, %281 : vector<32x14xf32>
    %283 = vector.broadcast %275 : vector<32x1xf32> to vector<32x14xf32>
    %284 = arith.mulf %283, %282 : vector<32x14xf32>
    %285 = arith.mulf %279, %276 : vector<32x1xf32>
    %286 = vector.broadcast %285 : vector<32x1xf32> to vector<32x14xf32>
    %287 = arith.mulf %228, %286 : vector<32x14xf32>
    %288 = arith.addf %284, %287 : vector<32x14xf32>
    %289 = arith.truncf %288 : vector<32x14xf32> to vector<32x14xbf16>
    %cst_123 = arith.constant dense<0.000000e+00> : vector<16x14xf32>
    %290 = tpu.matmul %2, %289, %cst_123 {dimension_numbers = #tpu.dot_dimension_numbers<[1], [0], [0], [1], [0, 0, 1, 1], [], []>} : vector<16x32xbf16>, vector<32x14xbf16>, vector<16x14xf32> -> vector<16x14xf32>
    %291 = tpu.concatenate %215, %290 in 1 : vector<16x14xf32>, vector<16x14xf32> -> vector<16x28xf32>
    %c2_124 = arith.constant 2 : index
    %c0_125 = arith.constant 0 : index
    %c0_126 = arith.constant 0 : index
    %292 = vector.load %arg13[%c2_124, %c0_125, %c0_126] : memref<4x28x11xf32, #tpu.memory_space<vmem>>, vector<1x28x11xf32>
    %293 = vector.shape_cast %292 : vector<1x28x11xf32> to vector<28x11xf32>
    %cst_127 = arith.constant dense<0.000000e+00> : vector<16x11xf32>
    %294 = tpu.matmul %291, %293, %cst_127 {dimension_numbers = #tpu.dot_dimension_numbers<[1], [0], [0], [1], [0, 0, 1, 1], [], []>} : vector<16x28xf32>, vector<28x11xf32>, vector<16x11xf32> -> vector<16x11xf32>
    %c2_128 = arith.constant 2 : index
    %c0_129 = arith.constant 0 : index
    %c0_130 = arith.constant 0 : index
    %295 = vector.load %arg14[%c2_128, %c0_129, %c0_130] : memref<4x1x11xf32, #tpu.memory_space<vmem>>, vector<1x1x11xf32>
    %296 = vector.shape_cast %295 : vector<1x1x11xf32> to vector<1x11xf32>
    %297 = vector.broadcast %296 : vector<1x11xf32> to vector<16x11xf32>
    %298 = arith.addf %294, %297 : vector<16x11xf32>
    %299 = arith.negf %298 : vector<16x11xf32>
    %300 = math.exp %299 : vector<16x11xf32>
    %cst_131 = arith.constant 1.000000e+00 : f32
    %301 = vector.broadcast %cst_131 : f32 to vector<16x11xf32>
    %302 = arith.addf %301, %300 : vector<16x11xf32>
    %303 = arith.divf %301, %302 : vector<16x11xf32>
    %304 = arith.mulf %298, %303 : vector<16x11xf32>
    %c2_132 = arith.constant 2 : index
    %c0_133 = arith.constant 0 : index
    %c0_134 = arith.constant 0 : index
    %305 = vector.load %arg15[%c2_132, %c0_133, %c0_134] : memref<4x11x14xf32, #tpu.memory_space<vmem>>, vector<1x11x14xf32>
    %306 = vector.shape_cast %305 : vector<1x11x14xf32> to vector<11x14xf32>
    %cst_135 = arith.constant dense<0.000000e+00> : vector<16x14xf32>
    %307 = tpu.matmul %304, %306, %cst_135 {dimension_numbers = #tpu.dot_dimension_numbers<[1], [0], [0], [1], [0, 0, 1, 1], [], []>} : vector<16x11xf32>, vector<11x14xf32>, vector<16x14xf32> -> vector<16x14xf32>
    %308 = arith.addf %215, %307 : vector<16x14xf32>
    %c2_136 = arith.constant 2 : index
    %c0_137 = arith.constant 0 : index
    %c0_138 = arith.constant 0 : index
    %309 = vector.load %arg16[%c2_136, %c0_137, %c0_138] : memref<4x1x14xf32, #tpu.memory_space<vmem>>, vector<1x1x14xf32>
    %310 = vector.shape_cast %309 : vector<1x1x14xf32> to vector<1x14xf32>
    %311 = vector.broadcast %310 : vector<1x14xf32> to vector<16x14xf32>
    %312 = arith.addf %308, %311 : vector<16x14xf32>
    %313 = vector.broadcast %7 : vector<1x14xf32> to vector<16x14xf32>
    %314 = arith.mulf %290, %313 : vector<16x14xf32>
    %315 = arith.addf %312, %314 : vector<16x14xf32>
    %c3 = arith.constant 3 : index
    %c0_139 = arith.constant 0 : index
    %c0_140 = arith.constant 0 : index
    %316 = vector.load %arg5[%c3, %c0_139, %c0_140] : memref<4x14x44xf32, #tpu.memory_space<vmem>>, vector<1x14x44xf32>
    %317 = vector.shape_cast %316 : vector<1x14x44xf32> to vector<14x44xf32>
    %cst_141 = arith.constant dense<0.000000e+00> : vector<16x44xf32>
    %318 = tpu.matmul %315, %317, %cst_141 {dimension_numbers = #tpu.dot_dimension_numbers<[1], [0], [0], [1], [0, 0, 1, 1], [], []>} : vector<16x14xf32>, vector<14x44xf32>, vector<16x44xf32> -> vector<16x44xf32>
    %319 = tpu.concatenate %315, %318 in 1 : vector<16x14xf32>, vector<16x44xf32> -> vector<16x58xf32>
    %320 = arith.truncf %319 : vector<16x58xf32> to vector<16x58xbf16>
    %cst_142 = arith.constant dense<0.000000e+00> : vector<64x58xf32>
    %321 = tpu.matmul %1, %320, %cst_142 {dimension_numbers = #tpu.dot_dimension_numbers<[1], [0], [0], [1], [0, 0, 1, 1], [], []>} : vector<64x16xbf16>, vector<16x58xbf16>, vector<64x58xf32> -> vector<64x58xf32>
    %322 = vector.extract_strided_slice %321 {offsets = [0, 0], sizes = [32, 58], strides = [1, 1]} : vector<64x58xf32> to vector<32x58xf32>
    %323 = vector.extract_strided_slice %321 {offsets = [32, 0], sizes = [32, 58], strides = [1, 1]} : vector<64x58xf32> to vector<32x58xf32>
    %324 = vector.extract_strided_slice %322 {offsets = [0, 0], sizes = [32, 14], strides = [1, 1]} : vector<32x58xf32> to vector<32x14xf32>
    %325 = vector.extract_strided_slice %323 {offsets = [0, 0], sizes = [32, 14], strides = [1, 1]} : vector<32x58xf32> to vector<32x14xf32>
    %326 = arith.subf %325, %324 : vector<32x14xf32>
    %327 = vector.broadcast %7 : vector<1x14xf32> to vector<32x14xf32>
    %328 = arith.mulf %326, %327 : vector<32x14xf32>
    %329 = arith.mulf %328, %328 : vector<32x14xf32>
    %cst_143 = arith.constant dense<0.000000e+00> : vector<32xf32>
    %330 = vector.multi_reduction <add>, %329, %cst_143 [1] : vector<32x14xf32> to vector<32xf32>
    %331 = vector.shape_cast %330 : vector<32xf32> to vector<32x1xf32>
    %332 = math.sqrt %331 : vector<32x1xf32>
    %333 = vector.extract_strided_slice %323 {offsets = [0, 14], sizes = [32, 22], strides = [1, 1]} : vector<32x58xf32> to vector<32x22xf32>
    %334 = vector.extract_strided_slice %322 {offsets = [0, 36], sizes = [32, 22], strides = [1, 1]} : vector<32x58xf32> to vector<32x22xf32>
    %335 = arith.addf %333, %334 : vector<32x22xf32>
    %c3_144 = arith.constant 3 : index
    %c0_145 = arith.constant 0 : index
    %c0_146 = arith.constant 0 : index
    %336 = vector.load %arg6[%c3_144, %c0_145, %c0_146] : memref<4x1x22xf32, #tpu.memory_space<vmem>>, vector<1x1x22xf32>
    %337 = vector.shape_cast %336 : vector<1x1x22xf32> to vector<1x22xf32>
    %338 = vector.broadcast %331 : vector<32x1xf32> to vector<32x22xf32>
    %339 = vector.broadcast %337 : vector<1x22xf32> to vector<32x22xf32>
    %340 = arith.mulf %338, %339 : vector<32x22xf32>
    %341 = arith.addf %335, %340 : vector<32x22xf32>
    %342 = vector.extract_strided_slice %15 {offsets = [0, 66], sizes = [32, 22], strides = [1, 1]} : vector<32x88xf32> to vector<32x22xf32>
    %343 = arith.addf %341, %342 : vector<32x22xf32>
    %344 = arith.negf %343 : vector<32x22xf32>
    %345 = math.exp %344 : vector<32x22xf32>
    %cst_147 = arith.constant 1.000000e+00 : f32
    %346 = vector.broadcast %cst_147 : f32 to vector<32x22xf32>
    %347 = arith.addf %346, %345 : vector<32x22xf32>
    %348 = arith.divf %346, %347 : vector<32x22xf32>
    %349 = arith.mulf %343, %348 : vector<32x22xf32>
    %c3_148 = arith.constant 3 : index
    %c0_149 = arith.constant 0 : index
    %c0_150 = arith.constant 0 : index
    %350 = vector.load %arg9[%c3_148, %c0_149, %c0_150] : memref<4x22x22xf32, #tpu.memory_space<vmem>>, vector<1x22x22xf32>
    %351 = vector.shape_cast %350 : vector<1x22x22xf32> to vector<22x22xf32>
    %cst_151 = arith.constant dense<0.000000e+00> : vector<32x22xf32>
    %352 = tpu.matmul %349, %351, %cst_151 {dimension_numbers = #tpu.dot_dimension_numbers<[1], [0], [0], [1], [0, 0, 1, 1], [], []>} : vector<32x22xf32>, vector<22x22xf32>, vector<32x22xf32> -> vector<32x22xf32>
    %c3_152 = arith.constant 3 : index
    %c0_153 = arith.constant 0 : index
    %c0_154 = arith.constant 0 : index
    %353 = vector.load %arg10[%c3_152, %c0_153, %c0_154] : memref<4x1x22xf32, #tpu.memory_space<vmem>>, vector<1x1x22xf32>
    %354 = vector.shape_cast %353 : vector<1x1x22xf32> to vector<1x22xf32>
    %355 = vector.broadcast %354 : vector<1x22xf32> to vector<32x22xf32>
    %356 = arith.addf %352, %355 : vector<32x22xf32>
    %357 = arith.negf %356 : vector<32x22xf32>
    %358 = math.exp %357 : vector<32x22xf32>
    %cst_155 = arith.constant 1.000000e+00 : f32
    %359 = vector.broadcast %cst_155 : f32 to vector<32x22xf32>
    %360 = arith.addf %359, %358 : vector<32x22xf32>
    %361 = arith.divf %359, %360 : vector<32x22xf32>
    %362 = arith.mulf %356, %361 : vector<32x22xf32>
    %c3_156 = arith.constant 3 : index
    %c0_157 = arith.constant 0 : index
    %c0_158 = arith.constant 0 : index
    %363 = vector.load %arg11[%c3_156, %c0_157, %c0_158] : memref<4x22x2xf32, #tpu.memory_space<vmem>>, vector<1x22x2xf32>
    %364 = vector.shape_cast %363 : vector<1x22x2xf32> to vector<22x2xf32>
    %cst_159 = arith.constant dense<0.000000e+00> : vector<32x2xf32>
    %365 = tpu.matmul %362, %364, %cst_159 {dimension_numbers = #tpu.dot_dimension_numbers<[1], [0], [0], [1], [0, 0, 1, 1], [], []>} : vector<32x22xf32>, vector<22x2xf32>, vector<32x2xf32> -> vector<32x2xf32>
    %c3_160 = arith.constant 3 : index
    %c0_161 = arith.constant 0 : index
    %c0_162 = arith.constant 0 : index
    %366 = vector.load %arg12[%c3_160, %c0_161, %c0_162] : memref<4x1x2xf32, #tpu.memory_space<vmem>>, vector<1x1x2xf32>
    %367 = vector.shape_cast %366 : vector<1x1x2xf32> to vector<1x2xf32>
    %368 = vector.broadcast %367 : vector<1x2xf32> to vector<32x2xf32>
    %369 = arith.addf %365, %368 : vector<32x2xf32>
    %370 = vector.extract_strided_slice %369 {offsets = [0, 0], sizes = [32, 1], strides = [1, 1]} : vector<32x2xf32> to vector<32x1xf32>
    %371 = arith.negf %370 : vector<32x1xf32>
    %372 = math.exp %371 : vector<32x1xf32>
    %cst_163 = arith.constant 1.000000e+00 : f32
    %373 = vector.broadcast %cst_163 : f32 to vector<32x1xf32>
    %374 = arith.addf %373, %372 : vector<32x1xf32>
    %375 = arith.divf %373, %374 : vector<32x1xf32>
    %376 = vector.extract_strided_slice %369 {offsets = [0, 1], sizes = [32, 1], strides = [1, 1]} : vector<32x2xf32> to vector<32x1xf32>
    %cst_164 = arith.constant 1.000000e+00 : f32
    %377 = vector.broadcast %cst_164 : f32 to vector<32x1xf32>
    %378 = arith.addf %332, %377 : vector<32x1xf32>
    %379 = tpu.reciprocal %378 {approx = true} : vector<32x1xf32> -> vector<32x1xf32>
    %380 = vector.extract_strided_slice %362 {offsets = [0, 0], sizes = [32, 14], strides = [1, 1]} : vector<32x22xf32> to vector<32x14xf32>
    %381 = vector.broadcast %9 : vector<1x14xf32> to vector<32x14xf32>
    %382 = arith.mulf %380, %381 : vector<32x14xf32>
    %383 = vector.broadcast %375 : vector<32x1xf32> to vector<32x14xf32>
    %384 = arith.mulf %383, %382 : vector<32x14xf32>
    %385 = arith.mulf %379, %376 : vector<32x1xf32>
    %386 = vector.broadcast %385 : vector<32x1xf32> to vector<32x14xf32>
    %387 = arith.mulf %328, %386 : vector<32x14xf32>
    %388 = arith.addf %384, %387 : vector<32x14xf32>
    %389 = arith.truncf %388 : vector<32x14xf32> to vector<32x14xbf16>
    %cst_165 = arith.constant dense<0.000000e+00> : vector<16x14xf32>
    %390 = tpu.matmul %2, %389, %cst_165 {dimension_numbers = #tpu.dot_dimension_numbers<[1], [0], [0], [1], [0, 0, 1, 1], [], []>} : vector<16x32xbf16>, vector<32x14xbf16>, vector<16x14xf32> -> vector<16x14xf32>
    %391 = tpu.concatenate %315, %390 in 1 : vector<16x14xf32>, vector<16x14xf32> -> vector<16x28xf32>
    %c3_166 = arith.constant 3 : index
    %c0_167 = arith.constant 0 : index
    %c0_168 = arith.constant 0 : index
    %392 = vector.load %arg13[%c3_166, %c0_167, %c0_168] : memref<4x28x11xf32, #tpu.memory_space<vmem>>, vector<1x28x11xf32>
    %393 = vector.shape_cast %392 : vector<1x28x11xf32> to vector<28x11xf32>
    %cst_169 = arith.constant dense<0.000000e+00> : vector<16x11xf32>
    %394 = tpu.matmul %391, %393, %cst_169 {dimension_numbers = #tpu.dot_dimension_numbers<[1], [0], [0], [1], [0, 0, 1, 1], [], []>} : vector<16x28xf32>, vector<28x11xf32>, vector<16x11xf32> -> vector<16x11xf32>
    %c3_170 = arith.constant 3 : index
    %c0_171 = arith.constant 0 : index
    %c0_172 = arith.constant 0 : index
    %395 = vector.load %arg14[%c3_170, %c0_171, %c0_172] : memref<4x1x11xf32, #tpu.memory_space<vmem>>, vector<1x1x11xf32>
    %396 = vector.shape_cast %395 : vector<1x1x11xf32> to vector<1x11xf32>
    %397 = vector.broadcast %396 : vector<1x11xf32> to vector<16x11xf32>
    %398 = arith.addf %394, %397 : vector<16x11xf32>
    %399 = arith.negf %398 : vector<16x11xf32>
    %400 = math.exp %399 : vector<16x11xf32>
    %cst_173 = arith.constant 1.000000e+00 : f32
    %401 = vector.broadcast %cst_173 : f32 to vector<16x11xf32>
    %402 = arith.addf %401, %400 : vector<16x11xf32>
    %403 = arith.divf %401, %402 : vector<16x11xf32>
    %404 = arith.mulf %398, %403 : vector<16x11xf32>
    %c3_174 = arith.constant 3 : index
    %c0_175 = arith.constant 0 : index
    %c0_176 = arith.constant 0 : index
    %405 = vector.load %arg15[%c3_174, %c0_175, %c0_176] : memref<4x11x14xf32, #tpu.memory_space<vmem>>, vector<1x11x14xf32>
    %406 = vector.shape_cast %405 : vector<1x11x14xf32> to vector<11x14xf32>
    %cst_177 = arith.constant dense<0.000000e+00> : vector<16x14xf32>
    %407 = tpu.matmul %404, %406, %cst_177 {dimension_numbers = #tpu.dot_dimension_numbers<[1], [0], [0], [1], [0, 0, 1, 1], [], []>} : vector<16x11xf32>, vector<11x14xf32>, vector<16x14xf32> -> vector<16x14xf32>
    %408 = arith.addf %315, %407 : vector<16x14xf32>
    %c3_178 = arith.constant 3 : index
    %c0_179 = arith.constant 0 : index
    %c0_180 = arith.constant 0 : index
    %409 = vector.load %arg16[%c3_178, %c0_179, %c0_180] : memref<4x1x14xf32, #tpu.memory_space<vmem>>, vector<1x1x14xf32>
    %410 = vector.shape_cast %409 : vector<1x1x14xf32> to vector<1x14xf32>
    %411 = vector.broadcast %410 : vector<1x14xf32> to vector<16x14xf32>
    %412 = arith.addf %408, %411 : vector<16x14xf32>
    %413 = vector.broadcast %7 : vector<1x14xf32> to vector<16x14xf32>
    %414 = arith.mulf %390, %413 : vector<16x14xf32>
    %415 = arith.addf %412, %414 : vector<16x14xf32>
    %c0_181 = arith.constant 0 : index
    %c0_182 = arith.constant 0 : index
    %416 = vector.load %arg4[%c0_181, %c0_182] : memref<2x16xf32, #tpu.memory_space<vmem>>, vector<2x16xf32>
    %cst_183 = arith.constant dense<0.000000e+00> : vector<2x14xf32>
    %417 = tpu.matmul %416, %415, %cst_183 {dimension_numbers = #tpu.dot_dimension_numbers<[1], [0], [0], [1], [0, 0, 1, 1], [], []>} : vector<2x16xf32>, vector<16x14xf32>, vector<2x14xf32> -> vector<2x14xf32>
    %c0_184 = arith.constant 0 : index
    %c0_185 = arith.constant 0 : index
    %418 = vector.load %arg17[%c0_184, %c0_185] : memref<14x1xf32, #tpu.memory_space<vmem>>, vector<14x1xf32>
    %cst_186 = arith.constant dense<0.000000e+00> : vector<2x1xf32>
    %419 = tpu.matmul %417, %418, %cst_186 {dimension_numbers = #tpu.dot_dimension_numbers<[1], [0], [0], [1], [0, 0, 1, 1], [], []>} : vector<2x14xf32>, vector<14x1xf32>, vector<2x1xf32> -> vector<2x1xf32>
    %c0_187 = arith.constant 0 : index
    %c0_188 = arith.constant 0 : index
    %420 = vector.load %arg18[%c0_187, %c0_188] : memref<1x1xf32, #tpu.memory_space<vmem>>, vector<1x1xf32>
    %421 = vector.broadcast %420 : vector<1x1xf32> to vector<2x1xf32>
    %422 = arith.addf %419, %421 : vector<2x1xf32>
    %c0_189 = arith.constant 0 : index
    %c0_190 = arith.constant 0 : index
    %423 = vector.load %arg19[%c0_189, %c0_190] : memref<2x1xf32, #tpu.memory_space<vmem>>, vector<2x1xf32>
    tpu.vector_store %arg19[%c0_189, %c0_190], %422 {strides = array<i32>} : memref<2x1xf32, #tpu.memory_space<vmem>>, vector<2x1xf32>,
    return
  }
}

</mosaic_0001>

<llo_original>
// kernel: e3egnn_edge_forward.1
$region0: #{e3egnn_edge_forward.1}
  #allocation0 [shape = 'u32[]', space=smem, size = 0x4, offset = 0x4, fixed_abs, tag = 'smem constant byte address 0x4 - core index']
  #allocation1 [shape = 'u32[144,128]{1,0:T(1,128)}', space=vmem, size = 0x12000, scoped, tag = 'internal scratch']
  #allocation2 [shape = 'f32[1,1]{1,0:T(1,128)S(1)}', space=vmem, size = 0x200, scoped, tag = 'scoped memory for e3egnn_edge_forward.1']
  %s0 = inlined_call_operand.vmem [shape: f32[16,14], index: 0, kind: input, shape index: {}]
  %s1 = inlined_call_operand.vmem [shape: f32[32,4], index: 1, kind: input, shape index: {}]
  %s2 = inlined_call_operand.vmem [shape: bf16[64,16], index: 2, kind: input, shape index: {}]
  %s3 = inlined_call_operand.vmem [shape: bf16[16,32], index: 3, kind: input, shape index: {}]
  %s4 = inlined_call_operand.vmem [shape: f32[2,16], index: 4, kind: input, shape index: {}]
  %s5 = inlined_call_operand.vmem [shape: f32[4,14,44], index: 5, kind: input, shape index: {}]
  %s6 = inlined_call_operand.vmem [shape: f32[4,1,22], index: 6, kind: input, shape index: {}]
  %s7 = inlined_call_operand.vmem [shape: f32[4,88], index: 7, kind: input, shape index: {}]
  %s8 = inlined_call_operand.vmem [shape: f32[1,88], index: 8, kind: input, shape index: {}]
  %s9 = inlined_call_operand.vmem [shape: f32[4,22,22], index: 9, kind: input, shape index: {}]
  %s10 = inlined_call_operand.vmem [shape: f32[4,1,22], index: 10, kind: input, shape index: {}]
  %s11 = inlined_call_operand.vmem [shape: f32[4,22,2], index: 11, kind: input, shape index: {}]
  %s12 = inlined_call_operand.vmem [shape: f32[4,1,2], index: 12, kind: input, shape index: {}]
  %s13 = inlined_call_operand.vmem [shape: f32[4,28,11], index: 13, kind: input, shape index: {}]
  %s14 = inlined_call_operand.vmem [shape: f32[4,1,11], index: 14, kind: input, shape index: {}]
  %s15 = inlined_call_operand.vmem [shape: f32[4,11,14], index: 15, kind: input, shape index: {}]
  %s16 = inlined_call_operand.vmem [shape: f32[4,1,14], index: 16, kind: input, shape index: {}]
  %s17 = inlined_call_operand.vmem [shape: f32[14,1], index: 17, kind: input, shape index: {}]
  %s18 = inlined_call_operand.<no memory space> [shape: f32[1,1], index: 18, kind: input, shape index: {}]
  %s19 = inlined_call_operand.vmem [shape: f32[2,1], index: 19, kind: output, shape index: {}]
  %s20 = sld [smem:[#allocation0]]
  $region86: #{e3egnn_edge_forward.1} parent=0
    _
  %s22 = ssub.s32 1, %s20
  %s23 = scalar_select 0, %s22, %s20
  %v24 = vstv %s18
  %25 = vst [vmem:[#allocation2] sm:$0x1] %v24
  // Predicated region
  $region2: #{e3egnn_edge_forward.1} parent=0 // pred_check
    _
  $region3: #{e3egnn_edge_forward.1} parent=0 // pred_check_branch
    %27 = sbr.rel (0) target = $region5
  $region4: #{e3egnn_edge_forward.1} parent=0 // pred_region
    _
  $region5: #{e3egnn_edge_forward.1} parent=0 // pred_fallthru
    _
  // Predicated region
  $region6: #{e3egnn_edge_forward.1} parent=0 // pred_check
    _
  $region7: #{e3egnn_edge_forward.1} parent=0 // pred_check_branch
    %29 = sbr.rel (0) target = $region9
  $region8: #{e3egnn_edge_forward.1} parent=0 // pred_region
    _
  $region9: #{e3egnn_edge_forward.1} parent=0 // pred_fallthru
    _
  // Predicated region
  $region10: #{e3egnn_edge_forward.1} parent=0 // pred_check
    _
  $region11: #{e3egnn_edge_forward.1} parent=0 // pred_check_branch
    %31 = sbr.rel (0) target = $region13
  $region12: #{e3egnn_edge_forward.1} parent=0 // pred_region
    _
  $region13: #{e3egnn_edge_forward.1} parent=0 // pred_fallthru
    _
  // Predicated region
  $region14: #{e3egnn_edge_forward.1} parent=0 // pred_check
    _
  $region15: #{e3egnn_edge_forward.1} parent=0 // pred_check_branch
    %33 = sbr.rel (0) target = $region17
  $region16: #{e3egnn_edge_forward.1} parent=0 // pred_region
    _
  $region17: #{e3egnn_edge_forward.1} parent=0 // pred_fallthru
    _
  // Predicated region
  $region18: #{e3egnn_edge_forward.1} parent=0 // pred_check
    _
  $region19: #{e3egnn_edge_forward.1} parent=0 // pred_check_branch
    %35 = sbr.rel (0) target = $region21
  $region20: #{e3egnn_edge_forward.1} parent=0 // pred_region
    _
  $region21: #{e3egnn_edge_forward.1} parent=0 // pred_fallthru
    _
  // Predicated region
  $region22: #{e3egnn_edge_forward.1} parent=0 // pred_check
    _
  $region23: #{e3egnn_edge_forward.1} parent=0 // pred_check_branch
    %37 = sbr.rel (0) target = $region25
  $region24: #{e3egnn_edge_forward.1} parent=0 // pred_region
    _
  $region25: #{e3egnn_edge_forward.1} parent=0 // pred_fallthru
    _
  // Predicated region
  $region26: #{e3egnn_edge_forward.1} parent=0 // pred_check
    _
  $region27: #{e3egnn_edge_forward.1} parent=0 // pred_check_branch
    %39 = sbr.rel (0) target = $region29
  $region28: #{e3egnn_edge_forward.1} parent=0 // pred_region
    _
  $region29: #{e3egnn_edge_forward.1} parent=0 // pred_fallthru
    _
  // Predicated region
  $region30: #{e3egnn_edge_forward.1} parent=0 // pred_check
    _
  $region31: #{e3egnn_edge_forward.1} parent=0 // pred_check_branch
    %41 = sbr.rel (0) target = $region33
  $region32: #{e3egnn_edge_forward.1} parent=0 // pred_region
    _
  $region33: #{e3egnn_edge_forward.1} parent=0 // pred_fallthru
    _
  // Predicated region
  $region34: #{e3egnn_edge_forward.1} parent=0 // pred_check
    _
  $region35: #{e3egnn_edge_forward.1} parent=0 // pred_check_branch
    %43 = sbr.rel (0) target = $region37
  $region36: #{e3egnn_edge_forward.1} parent=0 // pred_region
    _
  $region37: #{e3egnn_edge_forward.1} parent=0 // pred_fallthru
    _
  // Predicated region
  $region38: #{e3egnn_edge_forward.1} parent=0 // pred_check
    _
  $region39: #{e3egnn_edge_forward.1} parent=0 // pred_check_branch
    %45 = sbr.rel (0) target = $region41
  $region40: #{e3egnn_edge_forward.1} parent=0 // pred_region
    _
  $region41: #{e3egnn_edge_forward.1} parent=0 // pred_fallthru
    _
  // Predicated region
  $region42: #{e3egnn_edge_forward.1} parent=0 // pred_check
    _
  $region43: #{e3egnn_edge_forward.1} parent=0 // pred_check_branch
    %47 = sbr.rel (0) target = $region45
  $region44: #{e3egnn_edge_forward.1} parent=0 // pred_region
    _
  $region45: #{e3egnn_edge_forward.1} parent=0 // pred_fallthru
    _
  // Predicated region
  $region46: #{e3egnn_edge_forward.1} parent=0 // pred_check
    _
  $region47: #{e3egnn_edge_forward.1} parent=0 // pred_check_branch
    %49 = sbr.rel (0) target = $region49
  $region48: #{e3egnn_edge_forward.1} parent=0 // pred_region
    _
  $region49: #{e3egnn_edge_forward.1} parent=0 // pred_fallthru
    _
  // Predicated region
  $region50: #{e3egnn_edge_forward.1} parent=0 // pred_check
    _
  $region51: #{e3egnn_edge_forward.1} parent=0 // pred_check_branch
    %51 = sbr.rel (0) target = $region53
  $region52: #{e3egnn_edge_forward.1} parent=0 // pred_region
    _
  $region53: #{e3egnn_edge_forward.1} parent=0 // pred_fallthru
    _
  // Predicated region
  $region54: #{e3egnn_edge_forward.1} parent=0 // pred_check
    _
  $region55: #{e3egnn_edge_forward.1} parent=0 // pred_check_branch
    %53 = sbr.rel (0) target = $region57
  $region56: #{e3egnn_edge_forward.1} parent=0 // pred_region
    _
  $region57: #{e3egnn_edge_forward.1} parent=0 // pred_fallthru
    _
  // Predicated region
  $region58: #{e3egnn_edge_forward.1} parent=0 // pred_check
    _
  $region59: #{e3egnn_edge_forward.1} parent=0 // pred_check_branch
    %55 = sbr.rel (0) target = $region61
  $region60: #{e3egnn_edge_forward.1} parent=0 // pred_region
    _
  $region61: #{e3egnn_edge_forward.1} parent=0 // pred_fallthru
    _
  // Predicated region
  $region62: #{e3egnn_edge_forward.1} parent=0 // pred_check
    _
  $region63: #{e3egnn_edge_forward.1} parent=0 // pred_check_branch
    %57 = sbr.rel (0) target = $region65
  $region64: #{e3egnn_edge_forward.1} parent=0 // pred_region
    _
  $region65: #{e3egnn_edge_forward.1} parent=0 // pred_fallthru
    _
  // Predicated region
  $region66: #{e3egnn_edge_forward.1} parent=0 // pred_check
    _
  $region67: #{e3egnn_edge_forward.1} parent=0 // pred_check_branch
    %59 = sbr.rel (0) target = $region69
  $region68: #{e3egnn_edge_forward.1} parent=0 // pred_region
    _
  $region69: #{e3egnn_edge_forward.1} parent=0 // pred_fallthru
    _
  // Predicated region
  $region70: #{e3egnn_edge_forward.1} parent=0 // pred_check
    _
  $region71: #{e3egnn_edge_forward.1} parent=0 // pred_check_branch
    %61 = sbr.rel (0) target = $region73
  $region72: #{e3egnn_edge_forward.1} parent=0 // pred_region
    _
  $region73: #{e3egnn_edge_forward.1} parent=0 // pred_fallthru
    _
  // Predicated region
  $region74: #{e3egnn_edge_forward.1} parent=0 // pred_check
    _
  $region75: #{e3egnn_edge_forward.1} parent=0 // pred_check_branch
    %63 = sbr.rel (0) target = $region77
  $region76: #{e3egnn_edge_forward.1} parent=0 // pred_region
    _
  $region77: #{e3egnn_edge_forward.1} parent=0 // pred_fallthru
    _
  %v65 = vld [vmem:[%s0] sm:$0xff]
  %v66 = vld [vmem:[%s0 + $0x8] sm:$0xff]
  %v67 = vld [vmem:[%s2] sm:$0xf]
  %v68 = vld [vmem:[%s2 + $0x4] sm:$0xf]
  %v69 = vld [vmem:[%s2 + $0x8] sm:$0xf]
  %v70 = vld [vmem:[%s2 + $0xc] sm:$0xf]
  %v71 = vld [vmem:[%s2 + $0x10] sm:$0xf]
  %v72 = vld [vmem:[%s2 + $0x14] sm:$0xf]
  %v73 = vld [vmem:[%s2 + $0x18] sm:$0xf]
  %v74 = vld [vmem:[%s2 + $0x1c] sm:$0xf]
  %v75 = vld [vmem:[%s3] sm:$0xf]
  %v76 = vld [vmem:[%s3 + $0x4] sm:$0xf]
  %v77 = vlaneseq
  %v78 = vand.u32 %v77, 127
  %vm79 = vcmp.ge.s32.totalorder %v78, 11
  %v80 = vsel %vm79, 1, 0
  %v81 = vcvt.s32.f32 %v80
  %v82 = vsub.f32 1.0, %v81
  %v83 = vld [vmem:[%s1] sm:$0xff]
  %v84 = vld [vmem:[%s1 + $0x8] sm:$0xff]
  %v85 = vld [vmem:[%s1 + $0x10] sm:$0xff]
  %v86 = vld [vmem:[%s1 + $0x18] sm:$0xff]
  %v87 = vld [vmem:[%s7] sm:$0xf]
  %v88 = vld [vmem:[%s8] sm:$0x1]
  %v90 = vlaneseq
  %v91 = vshrl.u32 %v90, 7
  %v92 = vsub.s32 0, %v91
  %v93 = vrot.slane %v88, %v92
  %vm95 = vcmask 31744
  %v97 = vsel %vm95, %v83, 0
  %v100 = vsel %vm95, %v84, 0
  %v103 = vsel %vm95, %v85, 0
  %v106 = vsel %vm95, %v86, 0
  %vm108 = vcmask 1043456
  %v110 = vsel %vm108, %v87, 0
  %112 = vmatprep.subr.mxu0 0.0
  %113 = vmatpush1.msra.mxu0 0.0
  %114 = vmatprep.subr.mxu0 0.0
  %115 = vmatpush1.msra.mxu0 0.0
  %116 = vmatprep.subr.mxu0 0.0
  %117 = vmatpush1.msra.mxu0 0.0
  %118 = vmatprep.subr.mxu0 0.0
  %119 = vmatpush1.msra.mxu0 0.0
  %120 = vmatprep.subr.mxu0 0.0
  %121 = vmatpush1.msra.mxu0 0.0
  %122 = vmatprep.subr.mxu0 0.0
  %123 = vmatpush1.msra.mxu0 0.0
  %124 = vmatprep.subr.mxu0 0.0
  %125 = vmatpush1.msra.mxu0 0.0
  %126 = vmatprep.subr.mxu0 0.0
  %127 = vmatpush1.msra.mxu0 0.0
  %128 = vmatprep.subr.mxu0 0.0
  %129 = vmatpush1.msra.mxu0 0.0
  %130 = vmatprep.subr.mxu0 0.0
  %131 = vmatpush1.msra.mxu0 0.0
  %132 = vmatprep.subr.mxu0 0.0
  %133 = vmatpush1.msra.mxu0 0.0
  %134 = vmatprep.subr.mxu0 0.0
  %135 = vmatpush1.msra.mxu0 0.0
  %136 = vmatprep.subr.mxu0 0.0
  %137 = vmatpush1.msra.mxu0 0.0
  %138 = vmatprep.subr.mxu0 0.0
  %139 = vmatpush1.msra.mxu0 0.0
  %140 = vmatprep.subr.mxu0 0.0
  %141 = vmatpush1.msra.mxu0 0.0
  %142 = vmatprep.subr.mxu0 0.0
  %143 = vmatpush1.msra.mxu0 %v110
  %144 = vmatprep.subr.mxu0 0.0
  %145 = vmatpush2.msra.mxu0 0.0
  %146 = vmatprep.subr.mxu0 0.0
  %147 = vmatpush2.msra.mxu0 0.0
  %148 = vmatprep.subr.mxu0 0.0
  %149 = vmatpush2.msra.mxu0 0.0
  %150 = vmatprep.subr.mxu0 0.0
  %151 = vmatpush2.msra.mxu0 0.0
  %152 = vmatprep.subr.mxu0 0.0
  %153 = vmatpush2.msra.mxu0 0.0
  %154 = vmatprep.subr.mxu0 0.0
  %155 = vmatpush2.msra.mxu0 0.0
  %156 = vmatprep.subr.mxu0 0.0
  %157 = vmatpush2.msra.mxu0 0.0
  %158 = vmatprep.subr.mxu0 0.0
  %159 = vmatpush2.msra.mxu0 0.0
  %160 = vmatprep.subr.mxu0 0.0
  %161 = vmatpush2.msra.mxu0 0.0
  %162 = vmatprep.subr.mxu0 0.0
  %163 = vmatpush2.msra.mxu0 0.0
  %164 = vmatprep.subr.mxu0 0.0
  %165 = vmatpush2.msra.mxu0 0.0
  %166 = vmatprep.subr.mxu0 0.0
  %167 = vmatpush2.msra.mxu0 0.0
  %168 = vmatprep.subr.mxu0 0.0
  %169 = vmatpush2.msra.mxu0 0.0
  %170 = vmatprep.subr.mxu0 0.0
  %171 = vmatpush2.msra.mxu0 0.0
  %172 = vmatprep.subr.mxu0 0.0
  %173 = vmatpush2.msra.mxu0 0.0
  %174 = vmatprep.subr.mxu0 0.0
  %175 = vmatpush2.msra.mxu0 0.0
  %176 = vmatprep.mubr.f32.mxu0 0.0
  %177 = vmatmul.mubr.f32.gmra.mxu0 %v97
  %v178 = vpop.f32.mrf.mxu0
  %v179 = vadd.f32 %v93, %v178
  %v180 = vpop.f32.mrf.mxu0
  %181 = vmatprep.mubr.f32.mxu0 0.0
  %182 = vmatmul.mubr.f32.gmra.mxu0 %v100
  %v183 = vpop.f32.mrf.mxu0
  %v184 = vadd.f32 %v93, %v183
  %v185 = vpop.f32.mrf.mxu0
  %186 = vmatprep.mubr.f32.mxu0 0.0
  %187 = vmatmul.mubr.f32.gmra.mxu0 %v103
  %v188 = vpop.f32.mrf.mxu0
  %v189 = vadd.f32 %v93, %v188
  %v190 = vpop.f32.mrf.mxu0
  %191 = vmatprep.mubr.f32.mxu0 0.0
  %192 = vmatmul.mubr.f32.gmra.mxu0 %v106
  %v193 = vpop.f32.mrf.mxu0
  %v194 = vadd.f32 %v93, %v193
  %v195 = vpop.f32.mrf.mxu0
  %196 = vdwg.mxu0
  %v197 = vld [vmem:[%s5] sm:$0xff]
  %v198 = vld [vmem:[%s5 + $0x8] sm:$0x3f]
  %vm199 = vcmask 113664
  %v201 = vsel %vm199, %v65, 0
  %v204 = vsel %vm199, %v66, 0
  %vm206 = vcmask 1045504
  %v208 = vsel %vm206, %v198, 0
  %210 = vmatprep.subr.mxu0 0.0
  %211 = vmatpush1.msra.mxu0 0.0
  %212 = vmatprep.subr.mxu0 0.0
  %213 = vmatpush1.msra.mxu0 0.0
  %214 = vmatprep.subr.mxu0 0.0
  %215 = vmatpush1.msra.mxu0 0.0
  %216 = vmatprep.subr.mxu0 0.0
  %217 = vmatpush1.msra.mxu0 0.0
  %218 = vmatprep.subr.mxu0 0.0
  %219 = vmatpush1.msra.mxu0 0.0
  %220 = vmatprep.subr.mxu0 0.0
  %221 = vmatpush1.msra.mxu0 0.0
  %222 = vmatprep.subr.mxu0 0.0
  %223 = vmatpush1.msra.mxu0 0.0
  %224 = vmatprep.subr.mxu0 0.0
  %225 = vmatpush1.msra.mxu0 0.0
  %226 = vmatprep.subr.mxu0 0.0
  %227 = vmatpush1.msra.mxu0 0.0
  %228 = vmatprep.subr.mxu0 0.0
  %229 = vmatpush1.msra.mxu0 0.0
  %230 = vmatprep.subr.mxu0 0.0
  %231 = vmatpush1.msra.mxu0 0.0
  %232 = vmatprep.subr.mxu0 0.0
  %233 = vmatpush1.msra.mxu0 0.0
  %234 = vmatprep.subr.mxu0 0.0
  %235 = vmatpush1.msra.mxu0 0.0
  %236 = vmatprep.subr.mxu0 0.0
  %237 = vmatpush1.msra.mxu0 0.0
  %238 = vmatprep.subr.mxu0 0.0
  %239 = vmatpush1.msra.mxu0 %v208
  %240 = vmatprep.subr.mxu0 0.0
  %241 = vmatpush1.msra.mxu0 %v197
  %242 = vmatprep.subr.mxu0 0.0
  %243 = vmatpush2.msra.mxu0 0.0
  %244 = vmatprep.subr.mxu0 0.0
  %245 = vmatpush2.msra.mxu0 0.0
  %246 = vmatprep.subr.mxu0 0.0
  %247 = vmatpush2.msra.mxu0 0.0
  %248 = vmatprep.subr.mxu0 0.0
  %249 = vmatpush2.msra.mxu0 0.0
  %250 = vmatprep.subr.mxu0 0.0
  %251 = vmatpush2.msra.mxu0 0.0
  %252 = vmatprep.subr.mxu0 0.0
  %253 = vmatpush2.msra.mxu0 0.0
  %254 = vmatprep.subr.mxu0 0.0
  %255 = vmatpush2.msra.mxu0 0.0
  %256 = vmatprep.subr.mxu0 0.0
  %257 = vmatpush2.msra.mxu0 0.0
  %258 = vmatprep.subr.mxu0 0.0
  %259 = vmatpush2.msra.mxu0 0.0
  %260 = vmatprep.subr.mxu0 0.0
  %261 = vmatpush2.msra.mxu0 0.0
  %262 = vmatprep.subr.mxu0 0.0
  %263 = vmatpush2.msra.mxu0 0.0
  %264 = vmatprep.subr.mxu0 0.0
  %265 = vmatpush2.msra.mxu0 0.0
  %266 = vmatprep.subr.mxu0 0.0
  %267 = vmatpush2.msra.mxu0 0.0
  %268 = vmatprep.subr.mxu0 0.0
  %269 = vmatpush2.msra.mxu0 0.0
  %270 = vmatprep.subr.mxu0 0.0
  %271 = vmatpush2.msra.mxu0 0.0
  %272 = vmatprep.subr.mxu0 0.0
  %273 = vmatpush2.msra.mxu0 0.0
  %274 = vmatprep.mubr.f32.mxu0 0.0
  %275 = vmatmul.mubr.f32.gmra.mxu0 %v201
  %v276 = vpop.f32.mrf.mxu0
  %v277 = vadd.f32 0.0, %v276
  %v278 = vpop.f32.mrf.mxu0
  %279 = vmatprep.mubr.f32.mxu0 0.0
  %280 = vmatmul.mubr.f32.gmra.mxu0 %v204
  %v281 = vpop.f32.mrf.mxu0
  %v282 = vadd.f32 0.0, %v281
  %v283 = vpop.f32.mrf.mxu0
  %284 = vdwg.mxu0
  %287 = vrot.lane.b32.xlu0 %v277, 14
  %v288 = vpop.permute.xlu0 %287
  %289 = vrot.lane.b32.xlu0 %v282, 14
  %v290 = vpop.permute.xlu0 %289
  %v293 = vsel %vm199, %v65, %v288
  %v294 = vsel %vm199, %v66, %v290
  %v295 = vpack.c.bf16 %v294, %v293
  %v304 = vunpack.c.l.b16 %v67
  %v305 = vunpack.c.l.b16 %v68
  %v306 = vunpack.c.l.b16 %v69
  %v307 = vunpack.c.l.b16 %v70
  %v308 = vunpack.c.l.b16 %v71
  %v309 = vunpack.c.l.b16 %v72
  %v310 = vunpack.c.l.b16 %v73
  %v311 = vunpack.c.l.b16 %v74
  %v312 = vpack.c.b16 %v305, %v304
  %v313 = vpack.c.b16 %v307, %v306
  %v314 = vpack.c.b16 %v309, %v308
  %v315 = vpack.c.b16 %v311, %v310
  %vm316 = vcmask 130048
  %v318 = vsel %vm316, %v312, 0
  %v321 = vsel %vm316, %v313, 0
  %v324 = vsel %vm316, %v314, 0
  %v327 = vsel %vm316, %v315, 0
  %329 = vmatprep.subr.bf16.mxu0 0
  %330 = vmatpush1.bf16.msra.mxu0 0
  %331 = vmatprep.subr.bf16.mxu0 0
  %332 = vmatpush1.bf16.msra.mxu0 0
  %333 = vmatprep.subr.bf16.mxu0 0
  %334 = vmatpush1.bf16.msra.mxu0 0
  %335 = vmatprep.subr.bf16.mxu0 0
  %336 = vmatpush1.bf16.msra.mxu0 0
  %337 = vmatprep.subr.bf16.mxu0 0
  %338 = vmatpush1.bf16.msra.mxu0 0
  %339 = vmatprep.subr.bf16.mxu0 0
  %340 = vmatpush1.bf16.msra.mxu0 0
  %341 = vmatprep.subr.bf16.mxu0 0
  %342 = vmatpush1.bf16.msra.mxu0 0
  %343 = vmatprep.subr.bf16.mxu0 0
  %344 = vmatpush1.bf16.msra.mxu0 %v295
  %345 = vmatprep.subr.bf16.mxu0 0
  %346 = vmatpush2.bf16.msra.mxu0 0
  %347 = vmatprep.subr.bf16.mxu0 0
  %348 = vmatpush2.bf16.msra.mxu0 0
  %349 = vmatprep.subr.bf16.mxu0 0
  %350 = vmatpush2.bf16.msra.mxu0 0
  %351 = vmatprep.subr.bf16.mxu0 0
  %352 = vmatpush2.bf16.msra.mxu0 0
  %353 = vmatprep.subr.bf16.mxu0 0
  %354 = vmatpush2.bf16.msra.mxu0 0
  %355 = vmatprep.subr.bf16.mxu0 0
  %356 = vmatpush2.bf16.msra.mxu0 0
  %357 = vmatprep.subr.bf16.mxu0 0
  %358 = vmatpush2.bf16.msra.mxu0 0
  %359 = vmatprep.subr.bf16.mxu0 0
  %360 = vmatpush2.bf16.msra.mxu0 0
  %361 = vmatprep.mubr.bf16.mxu0 0
  %362 = vmatmul.mubr.bf16.gmra.mxu0 %v318
  %v363 = vpop.f32.mrf.mxu0
  %v364 = vadd.f32 0.0, %v363
  %v365 = vpop.f32.mrf.mxu0
  %v366 = vpop.f32.mrf.mxu0
  %v367 = vadd.f32 0.0, %v366
  %v368 = vpop.f32.mrf.mxu0
  %369 = vmatprep.mubr.bf16.mxu0 0
  %370 = vmatmul.mubr.bf16.gmra.mxu0 %v321
  %v371 = vpop.f32.mrf.mxu0
  %v372 = vadd.f32 0.0, %v371
  %v373 = vpop.f32.mrf.mxu0
  %v374 = vpop.f32.mrf.mxu0
  %v375 = vadd.f32 0.0, %v374
  %v376 = vpop.f32.mrf.mxu0
  %377 = vmatprep.mubr.bf16.mxu0 0
  %378 = vmatmul.mubr.bf16.gmra.mxu0 %v324
  %v379 = vpop.f32.mrf.mxu0
  %v380 = vadd.f32 0.0, %v379
  %v381 = vpop.f32.mrf.mxu0
  %v382 = vpop.f32.mrf.mxu0
  %v383 = vadd.f32 0.0, %v382
  %v384 = vpop.f32.mrf.mxu0
  %385 = vmatprep.mubr.bf16.mxu0 0
  %386 = vmatmul.mubr.bf16.gmra.mxu0 %v327
  %v387 = vpop.f32.mrf.mxu0
  %v388 = vadd.f32 0.0, %v387
  %v389 = vpop.f32.mrf.mxu0
  %v390 = vpop.f32.mrf.mxu0
  %v391 = vadd.f32 0.0, %v390
  %v392 = vpop.f32.mrf.mxu0
  %393 = vdwg.mxu0
  %v394 = vsub.f32 %v380, %v364
  %v395 = vsub.f32 %v383, %v367
  %v396 = vsub.f32 %v388, %v372
  %v397 = vsub.f32 %v391, %v375
  %v398 = vmul.f32 %v394, %v81
  %v399 = vmul.f32 %v395, %v81
  %v400 = vmul.f32 %v396, %v81
  %v401 = vmul.f32 %v397, %v81
  %v402 = vmul.f32 %v398, %v398
  %v403 = vmul.f32 %v399, %v399
  %v404 = vmul.f32 %v400, %v400
  %v405 = vmul.f32 %v401, %v401
  %v406 = vsel %vm199, %v402, 0.0
  %407 = vadd.xlane.f32.xlu0 %v406
  %v408 = vpop.xlane.xlu0 %407
  %v409 = vsel %vm199, %v403, 0.0
  %410 = vadd.xlane.f32.xlu0 %v409
  %v411 = vpop.xlane.xlu0 %410
  %v412 = vsel %vm199, %v404, 0.0
  %413 = vadd.xlane.f32.xlu0 %v412
  %v414 = vpop.xlane.xlu0 %413
  %v415 = vsel %vm199, %v405, 0.0
  %416 = vadd.xlane.f32.xlu0 %v415
  %v417 = vpop.xlane.xlu0 %416
  %v418 = vrsqrt.pop %v408
  %v419 = vmul.f32 %v408, %v418
  %vm420 = vcmp.eq.f32.partialorder %v408, inf
  %v421 = vsel %vm420, %v408, %v419
  %vm422 = vcmp.eq.f32.partialorder %v408, 0.0
  %v423 = vand.u32 %v408, 2147483648
  %v424 = vsel %vm422, %v423, %v421
  %v425 = vrsqrt.pop %v411
  %v426 = vmul.f32 %v411, %v425
  %vm427 = vcmp.eq.f32.partialorder %v411, inf
  %v428 = vsel %vm427, %v411, %v426
  %vm429 = vcmp.eq.f32.partialorder %v411, 0.0
  %v430 = vand.u32 %v411, 2147483648
  %v431 = vsel %vm429, %v430, %v428
  %v432 = vrsqrt.pop %v414
  %v433 = vmul.f32 %v414, %v432
  %vm434 = vcmp.eq.f32.partialorder %v414, inf
  %v435 = vsel %vm434, %v414, %v433
  %vm436 = vcmp.eq.f32.partialorder %v414, 0.0
  %v437 = vand.u32 %v414, 2147483648
  %v438 = vsel %vm436, %v437, %v435
  %v439 = vrsqrt.pop %v417
  %v440 = vmul.f32 %v417, %v439
  %vm441 = vcmp.eq.f32.partialorder %v417, inf
  %v442 = vsel %vm441, %v417, %v440
  %vm443 = vcmp.eq.f32.partialorder %v417, 0.0
  %v444 = vand.u32 %v417, 2147483648
  %v445 = vsel %vm443, %v444, %v442
  %450 = vrot.lane.b32.xlu0 %v364, 106
  %v451 = vpop.permute.xlu0 %450
  %452 = vrot.lane.b32.xlu0 %v367, 106
  %v453 = vpop.permute.xlu0 %452
  %454 = vrot.lane.b32.xlu0 %v372, 106
  %v455 = vpop.permute.xlu0 %454
  %456 = vrot.lane.b32.xlu0 %v375, 106
  %v457 = vpop.permute.xlu0 %456
  %v462 = vadd.f32 %v380, %v451
  %v463 = vadd.f32 %v383, %v453
  %v464 = vadd.f32 %v388, %v455
  %v465 = vadd.f32 %v391, %v457
  %v466 = vld [vmem:[%s6] sm:$0x1]
  %v468 = vlaneseq
  %v469 = vshrl.u32 %v468, 7
  %v470 = vsub.s32 0, %v469
  %v471 = vrot.slane %v466, %v470
  %v473 = vmul.f32 %v408, %v471
  %v474 = vmul.f32 %v411, %v471
  %v475 = vmul.f32 %v414, %v471
  %v476 = vmul.f32 %v417, %v471
  %481 = vrot.lane.b32.xlu0 %v473, 14
  %v482 = vpop.permute.xlu0 %481
  %483 = vrot.lane.b32.xlu0 %v474, 14
  %v484 = vpop.permute.xlu0 %483
  %485 = vrot.lane.b32.xlu0 %v475, 14
  %v486 = vpop.permute.xlu0 %485
  %487 = vrot.lane.b32.xlu0 %v476, 14
  %v488 = vpop.permute.xlu0 %487
  %v493 = vadd.f32 %v462, %v482
  %v494 = vadd.f32 %v463, %v484
  %v495 = vadd.f32 %v464, %v486
  %v496 = vadd.f32 %v465, %v488
  %501 = vrot.lane.b32.xlu0 %v179, 14
  %v502 = vpop.permute.xlu0 %501
  %503 = vrot.lane.b32.xlu0 %v184, 14
  %v504 = vpop.permute.xlu0 %503
  %505 = vrot.lane.b32.xlu0 %v189, 14
  %v506 = vpop.permute.xlu0 %505
  %507 = vrot.lane.b32.xlu0 %v194, 14
  %v508 = vpop.permute.xlu0 %507
  %v513 = vadd.f32 %v493, %v502
  %v514 = vadd.f32 %v494, %v504
  %v515 = vadd.f32 %v495, %v506
  %v516 = vadd.f32 %v496, %v508
  %v517 = vxor.u32 %v513, 2147483648
  %v518 = vxor.u32 %v514, 2147483648
  %v519 = vxor.u32 %v515, 2147483648
  %v520 = vxor.u32 %v516, 2147483648
  %v521 = vmul.f32 %v517, 1.442695
  %v522 = vpow.pop %v521
  %v523 = vmul.f32 %v518, 1.442695
  %v524 = vpow.pop %v523
  %v525 = vmul.f32 %v519, 1.442695
  %v526 = vpow.pop %v525
  %v527 = vmul.f32 %v520, 1.442695
  %v528 = vpow.pop %v527
  %v529 = vadd.f32 %v522, 1.0
  %v530 = vadd.f32 %v524, 1.0
  %v531 = vadd.f32 %v526, 1.0
  %v532 = vadd.f32 %v528, 1.0
  %v533 = vrcp.pop %v529
  %v534 = vmul.f32 1.0, %v533
  %v535 = vrcp.pop %v530
  %v536 = vmul.f32 1.0, %v535
  %v537 = vrcp.pop %v531
  %v538 = vmul.f32 1.0, %v537
  %v539 = vrcp.pop %v532
  %v540 = vmul.f32 1.0, %v539
  %v541 = vmul.f32 %v513, %v534
  %v542 = vmul.f32 %v514, %v536
  %v543 = vmul.f32 %v515, %v538
  %v544 = vmul.f32 %v516, %v540
  %v545 = vld [vmem:[%s9] sm:$0xff]
  %v546 = vld [vmem:[%s9 + $0x8] sm:$0xff]
  %v547 = vld [vmem:[%s9 + $0x10] sm:$0x3f]
  %v548 = vld [vmem:[%s10] sm:$0x1]
  %v550 = vlaneseq
  %v551 = vshrl.u32 %v550, 7
  %v552 = vsub.s32 0, %v551
  %v553 = vrot.slane %v548, %v552
  %559 = vrot.lane.b32.xlu0 %v541, 114
  %v560 = vpop.permute.xlu0 %559
  %561 = vrot.lane.b32.xlu0 %v542, 114
  %v562 = vpop.permute.xlu0 %561
  %563 = vrot.lane.b32.xlu0 %v543, 114
  %v564 = vpop.permute.xlu0 %563
  %565 = vrot.lane.b32.xlu0 %v544, 114
  %v566 = vpop.permute.xlu0 %565
  %vm567 = vcmask 179200
  %v568 = vsel %vm567, %v560, 0
  %v570 = vsel %vm567, %v562, 0
  %v572 = vsel %vm567, %v564, 0
  %v574 = vsel %vm567, %v566, 0
  %v577 = vsel %vm206, %v547, 0
  %579 = vmatprep.subr.mxu0 0.0
  %580 = vmatpush1.msra.mxu0 0.0
  %581 = vmatprep.subr.mxu0 0.0
  %582 = vmatpush1.msra.mxu0 0.0
  %583 = vmatprep.subr.mxu0 0.0
  %584 = vmatpush1.msra.mxu0 0.0
  %585 = vmatprep.subr.mxu0 0.0
  %586 = vmatpush1.msra.mxu0 0.0
  %587 = vmatprep.subr.mxu0 0.0
  %588 = vmatpush1.msra.mxu0 0.0
  %589 = vmatprep.subr.mxu0 0.0
  %590 = vmatpush1.msra.mxu0 0.0
  %591 = vmatprep.subr.mxu0 0.0
  %592 = vmatpush1.msra.mxu0 0.0
  %593 = vmatprep.subr.mxu0 0.0
  %594 = vmatpush1.msra.mxu0 0.0
  %595 = vmatprep.subr.mxu0 0.0
  %596 = vmatpush1.msra.mxu0 0.0
  %597 = vmatprep.subr.mxu0 0.0
  %598 = vmatpush1.msra.mxu0 0.0
  %599 = vmatprep.subr.mxu0 0.0
  %600 = vmatpush1.msra.mxu0 0.0
  %601 = vmatprep.subr.mxu0 0.0
  %602 = vmatpush1.msra.mxu0 0.0
  %603 = vmatprep.subr.mxu0 0.0
  %604 = vmatpush1.msra.mxu0 0.0
  %605 = vmatprep.subr.mxu0 0.0
  %606 = vmatpush1.msra.mxu0 %v577
  %607 = vmatprep.subr.mxu0 0.0
  %608 = vmatpush1.msra.mxu0 %v546
  %609 = vmatprep.subr.mxu0 0.0
  %610 = vmatpush1.msra.mxu0 %v545
  %611 = vmatprep.subr.mxu0 0.0
  %612 = vmatpush2.msra.mxu0 0.0
  %613 = vmatprep.subr.mxu0 0.0
  %614 = vmatpush2.msra.mxu0 0.0
  %615 = vmatprep.subr.mxu0 0.0
  %616 = vmatpush2.msra.mxu0 0.0
  %617 = vmatprep.subr.mxu0 0.0
  %618 = vmatpush2.msra.mxu0 0.0
  %619 = vmatprep.subr.mxu0 0.0
  %620 = vmatpush2.msra.mxu0 0.0
  %621 = vmatprep.subr.mxu0 0.0
  %622 = vmatpush2.msra.mxu0 0.0
  %623 = vmatprep.subr.mxu0 0.0
  %624 = vmatpush2.msra.mxu0 0.0
  %625 = vmatprep.subr.mxu0 0.0
  %626 = vmatpush2.msra.mxu0 0.0
  %627 = vmatprep.subr.mxu0 0.0
  %628 = vmatpush2.msra.mxu0 0.0
  %629 = vmatprep.subr.mxu0 0.0
  %630 = vmatpush2.msra.mxu0 0.0
  %631 = vmatprep.subr.mxu0 0.0
  %632 = vmatpush2.msra.mxu0 0.0
  %633 = vmatprep.subr.mxu0 0.0
  %634 = vmatpush2.msra.mxu0 0.0
  %635 = vmatprep.subr.mxu0 0.0
  %636 = vmatpush2.msra.mxu0 0.0
  %637 = vmatprep.subr.mxu0 0.0
  %638 = vmatpush2.msra.mxu0 0.0
  %639 = vmatprep.subr.mxu0 0.0
  %640 = vmatpush2.msra.mxu0 0.0
  %641 = vmatprep.subr.mxu0 0.0
  %642 = vmatpush2.msra.mxu0 0.0
  %643 = vmatprep.mubr.f32.mxu0 0.0
  %644 = vmatmul.mubr.f32.gmra.mxu0 %v568
  %v645 = vpop.f32.mrf.mxu0
  %v646 = vadd.f32 %v553, %v645
  %v647 = vpop.f32.mrf.mxu0
  %648 = vmatprep.mubr.f32.mxu0 0.0
  %649 = vmatmul.mubr.f32.gmra.mxu0 %v570
  %v650 = vpop.f32.mrf.mxu0
  %v651 = vadd.f32 %v553, %v650
  %v652 = vpop.f32.mrf.mxu0
  %653 = vmatprep.mubr.f32.mxu0 0.0
  %654 = vmatmul.mubr.f32.gmra.mxu0 %v572
  %v655 = vpop.f32.mrf.mxu0
  %v656 = vadd.f32 %v553, %v655
  %v657 = vpop.f32.mrf.mxu0
  %658 = vmatprep.mubr.f32.mxu0 0.0
  %659 = vmatmul.mubr.f32.gmra.mxu0 %v574
  %v660 = vpop.f32.mrf.mxu0
  %v661 = vadd.f32 %v553, %v660
  %v662 = vpop.f32.mrf.mxu0
  %663 = vdwg.mxu0
  %v664 = vxor.u32 %v646, 2147483648
  %v665 = vxor.u32 %v651, 2147483648
  %v666 = vxor.u32 %v656, 2147483648
  %v667 = vxor.u32 %v661, 2147483648
  %v668 = vmul.f32 %v664, 1.442695
  %v669 = vpow.pop %v668
  %v670 = vmul.f32 %v665, 1.442695
  %v671 = vpow.pop %v670
  %v672 = vmul.f32 %v666, 1.442695
  %v673 = vpow.pop %v672
  %v674 = vmul.f32 %v667, 1.442695
  %v675 = vpow.pop %v674
  %v676 = vadd.f32 %v669, 1.0
  %v677 = vadd.f32 %v671, 1.0
  %v678 = vadd.f32 %v673, 1.0
  %v679 = vadd.f32 %v675, 1.0
  %v680 = vrcp.pop %v676
  %v681 = vmul.f32 1.0, %v680
  %v682 = vrcp.pop %v677
  %v683 = vmul.f32 1.0, %v682
  %v684 = vrcp.pop %v678
  %v685 = vmul.f32 1.0, %v684
  %v686 = vrcp.pop %v679
  %v687 = vmul.f32 1.0, %v686
  %v688 = vmul.f32 %v646, %v681
  %v689 = vmul.f32 %v651, %v683
  %v690 = vmul.f32 %v656, %v685
  %v691 = vmul.f32 %v661, %v687
  %v692 = vld [vmem:[%s11] sm:$0xff]
  %v693 = vld [vmem:[%s11 + $0x8] sm:$0xff]
  %v694 = vld [vmem:[%s11 + $0x10] sm:$0x3f]
  %v695 = vld [vmem:[%s12] sm:$0x1]
  %v697 = vlaneseq
  %v698 = vshrl.u32 %v697, 7
  %v699 = vsub.s32 0, %v698
  %v700 = vrot.slane %v695, %v699
  %v703 = vsel %vm567, %v688, 0
  %v706 = vsel %vm567, %v689, 0
  %v709 = vsel %vm567, %v690, 0
  %v712 = vsel %vm567, %v691, 0
  %v715 = vsel %vm206, %v694, 0
  %717 = vmatprep.subr.mxu0 0.0
  %718 = vmatpush1.msra.mxu0 0.0
  %719 = vmatprep.subr.mxu0 0.0
  %720 = vmatpush1.msra.mxu0 0.0
  %721 = vmatprep.subr.mxu0 0.0
  %722 = vmatpush1.msra.mxu0 0.0
  %723 = vmatprep.subr.mxu0 0.0
  %724 = vmatpush1.msra.mxu0 0.0
  %725 = vmatprep.subr.mxu0 0.0
  %726 = vmatpush1.msra.mxu0 0.0
  %727 = vmatprep.subr.mxu0 0.0
  %728 = vmatpush1.msra.mxu0 0.0
  %729 = vmatprep.subr.mxu0 0.0
  %730 = vmatpush1.msra.mxu0 0.0
  %731 = vmatprep.subr.mxu0 0.0
  %732 = vmatpush1.msra.mxu0 0.0
  %733 = vmatprep.subr.mxu0 0.0
  %734 = vmatpush1.msra.mxu0 0.0
  %735 = vmatprep.subr.mxu0 0.0
  %736 = vmatpush1.msra.mxu0 0.0
  %737 = vmatprep.subr.mxu0 0.0
  %738 = vmatpush1.msra.mxu0 0.0
  %739 = vmatprep.subr.mxu0 0.0
  %740 = vmatpush1.msra.mxu0 0.0
  %741 = vmatprep.subr.mxu0 0.0
  %742 = vmatpush1.msra.mxu0 0.0
  %743 = vmatprep.subr.mxu0 0.0
  %744 = vmatpush1.msra.mxu0 %v715
  %745 = vmatprep.subr.mxu0 0.0
  %746 = vmatpush1.msra.mxu0 %v693
  %747 = vmatprep.subr.mxu0 0.0
  %748 = vmatpush1.msra.mxu0 %v692
  %749 = vmatprep.subr.mxu0 0.0
  %750 = vmatpush2.msra.mxu0 0.0
  %751 = vmatprep.subr.mxu0 0.0
  %752 = vmatpush2.msra.mxu0 0.0
  %753 = vmatprep.subr.mxu0 0.0
  %754 = vmatpush2.msra.mxu0 0.0
  %755 = vmatprep.subr.mxu0 0.0
  %756 = vmatpush2.msra.mxu0 0.0
  %757 = vmatprep.subr.mxu0 0.0
  %758 = vmatpush2.msra.mxu0 0.0
  %759 = vmatprep.subr.mxu0 0.0
  %760 = vmatpush2.msra.mxu0 0.0
  %761 = vmatprep.subr.mxu0 0.0
  %762 = vmatpush2.msra.mxu0 0.0
  %763 = vmatprep.subr.mxu0 0.0
  %764 = vmatpush2.msra.mxu0 0.0
  %765 = vmatprep.subr.mxu0 0.0
  %766 = vmatpush2.msra.mxu0 0.0
  %767 = vmatprep.subr.mxu0 0.0
  %768 = vmatpush2.msra.mxu0 0.0
  %769 = vmatprep.subr.mxu0 0.0
  %770 = vmatpush2.msra.mxu0 0.0
  %771 = vmatprep.subr.mxu0 0.0
  %772 = vmatpush2.msra.mxu0 0.0
  %773 = vmatprep.subr.mxu0 0.0
  %774 = vmatpush2.msra.mxu0 0.0
  %775 = vmatprep.subr.mxu0 0.0
  %776 = vmatpush2.msra.mxu0 0.0
  %777 = vmatprep.subr.mxu0 0.0
  %778 = vmatpush2.msra.mxu0 0.0
  %779 = vmatprep.subr.mxu0 0.0
  %780 = vmatpush2.msra.mxu0 0.0
  %781 = vmatprep.mubr.f32.mxu0 0.0
  %782 = vmatmul.mubr.f32.gmra.mxu0 %v703
  %v783 = vpop.f32.mrf.mxu0
  %v784 = vadd.f32 %v700, %v783
  %v785 = vpop.f32.mrf.mxu0
  %786 = vmatprep.mubr.f32.mxu0 0.0
  %787 = vmatmul.mubr.f32.gmra.mxu0 %v706
  %v788 = vpop.f32.mrf.mxu0
  %v789 = vadd.f32 %v700, %v788
  %v790 = vpop.f32.mrf.mxu0
  %791 = vmatprep.mubr.f32.mxu0 0.0
  %792 = vmatmul.mubr.f32.gmra.mxu0 %v709
  %v793 = vpop.f32.mrf.mxu0
  %v794 = vadd.f32 %v700, %v793
  %v795 = vpop.f32.mrf.mxu0
  %796 = vmatprep.mubr.f32.mxu0 0.0
  %797 = vmatmul.mubr.f32.gmra.mxu0 %v712
  %v798 = vpop.f32.mrf.mxu0
  %v799 = vadd.f32 %v700, %v798
  %v800 = vpop.f32.mrf.mxu0
  %801 = vdwg.mxu0
  %v802 = vxor.u32 %v784, 2147483648
  %v803 = vxor.u32 %v789, 2147483648
  %v804 = vxor.u32 %v794, 2147483648
  %v805 = vxor.u32 %v799, 2147483648
  %v806 = vmul.f32 %v802, 1.442695
  %v807 = vpow.pop %v806
  %v808 = vmul.f32 %v803, 1.442695
  %v809 = vpow.pop %v808
  %v810 = vmul.f32 %v804, 1.442695
  %v811 = vpow.pop %v810
  %v812 = vmul.f32 %v805, 1.442695
  %v813 = vpow.pop %v812
  %v814 = vadd.f32 %v807, 1.0
  %v815 = vadd.f32 %v809, 1.0
  %v816 = vadd.f32 %v811, 1.0
  %v817 = vadd.f32 %v813, 1.0
  %v818 = vrcp.pop %v814
  %v819 = vmul.f32 1.0, %v818
  %v820 = vrcp.pop %v815
  %v821 = vmul.f32 1.0, %v820
  %v822 = vrcp.pop %v816
  %v823 = vmul.f32 1.0, %v822
  %v824 = vrcp.pop %v817
  %v825 = vmul.f32 1.0, %v824
  %v826 = vadd.f32 %v424, 1.0
  %v827 = vadd.f32 %v431, 1.0
  %v828 = vadd.f32 %v438, 1.0
  %v829 = vadd.f32 %v445, 1.0
  %v830 = vrcp.pop %v826
  %v831 = vrcp.pop %v827
  %v832 = vrcp.pop %v828
  %v833 = vrcp.pop %v829
  %v834 = vmul.f32 %v688, %v82
  %v835 = vmul.f32 %v689, %v82
  %v836 = vmul.f32 %v690, %v82
  %v837 = vmul.f32 %v691, %v82
  %839 = vset.pattern.permute.xlu0 0
  %840 = vperm.xlu0 %839, %v819
  %v841 = vpop.permute.xlu0 %840
  %844 = vset.pattern.permute.xlu0 0
  %845 = vperm.xlu0 %844, %v821
  %v846 = vpop.permute.xlu0 %845
  %849 = vset.pattern.permute.xlu0 0
  %850 = vperm.xlu0 %849, %v823
  %v851 = vpop.permute.xlu0 %850
  %854 = vset.pattern.permute.xlu0 0
  %855 = vperm.xlu0 %854, %v825
  %v856 = vpop.permute.xlu0 %855
  %v858 = vmul.f32 %v841, %v834
  %v859 = vmul.f32 %v846, %v835
  %v860 = vmul.f32 %v851, %v836
  %v861 = vmul.f32 %v856, %v837
  %v862 = vmul.f32 %v830, %v784
  %v863 = vmul.f32 %v831, %v789
  %v864 = vmul.f32 %v832, %v794
  %v865 = vmul.f32 %v833, %v799
  %867 = vset.pattern.permute.xlu0 1
  %868 = vperm.xlu0 %867, %v862
  %v869 = vpop.permute.xlu0 %868
  %872 = vset.pattern.permute.xlu0 1
  %873 = vperm.xlu0 %872, %v863
  %v874 = vpop.permute.xlu0 %873
  %877 = vset.pattern.permute.xlu0 1
  %878 = vperm.xlu0 %877, %v864
  %v879 = vpop.permute.xlu0 %878
  %882 = vset.pattern.permute.xlu0 1
  %883 = vperm.xlu0 %882, %v865
  %v884 = vpop.permute.xlu0 %883
  %v886 = vmul.f32 %v398, %v869
  %v887 = vmul.f32 %v399, %v874
  %v888 = vmul.f32 %v400, %v879
  %v889 = vmul.f32 %v401, %v884
  %v890 = vadd.f32 %v858, %v886
  %v891 = vadd.f32 %v859, %v887
  %v892 = vadd.f32 %v860, %v888
  %v893 = vadd.f32 %v861, %v889
  %v894 = vpack.c.bf16 %v891, %v890
  %v895 = vpack.c.bf16 %v893, %v892
  %v898 = vunpack.c.l.b16 %v75
  %v899 = vunpack.c.l.b16 %v76
  %v900 = vpack.c.b16 %v899, %v898
  %vm901 = vcmask 261120
  %v903 = vsel %vm901, %v900, 0
  %905 = vmatprep.subr.bf16.mxu0 0
  %906 = vmatpush1.bf16.msra.mxu0 0
  %907 = vmatprep.subr.bf16.mxu0 0
  %908 = vmatpush1.bf16.msra.mxu0 0
  %909 = vmatprep.subr.bf16.mxu0 0
  %910 = vmatpush1.bf16.msra.mxu0 0
  %911 = vmatprep.subr.bf16.mxu0 0
  %912 = vmatpush1.bf16.msra.mxu0 0
  %913 = vmatprep.subr.bf16.mxu0 0
  %914 = vmatpush1.bf16.msra.mxu0 0
  %915 = vmatprep.subr.bf16.mxu0 0
  %916 = vmatpush1.bf16.msra.mxu0 0
  %917 = vmatprep.subr.bf16.mxu0 0
  %918 = vmatpush1.bf16.msra.mxu0 %v895
  %919 = vmatprep.subr.bf16.mxu0 0
  %920 = vmatpush1.bf16.msra.mxu0 %v894
  %921 = vmatprep.subr.bf16.mxu0 0
  %922 = vmatpush2.bf16.msra.mxu0 0
  %923 = vmatprep.subr.bf16.mxu0 0
  %924 = vmatpush2.bf16.msra.mxu0 0
  %925 = vmatprep.subr.bf16.mxu0 0
  %926 = vmatpush2.bf16.msra.mxu0 0
  %927 = vmatprep.subr.bf16.mxu0 0
  %928 = vmatpush2.bf16.msra.mxu0 0
  %929 = vmatprep.subr.bf16.mxu0 0
  %930 = vmatpush2.bf16.msra.mxu0 0
  %931 = vmatprep.subr.bf16.mxu0 0
  %932 = vmatpush2.bf16.msra.mxu0 0
  %933 = vmatprep.subr.bf16.mxu0 0
  %934 = vmatpush2.bf16.msra.mxu0 0
  %935 = vmatprep.subr.bf16.mxu0 0
  %936 = vmatpush2.bf16.msra.mxu0 0
  %937 = vmatprep.mubr.bf16.mxu0 0
  %938 = vmatmul.mubr.bf16.gmra.mxu0 %v903
  %v939 = vpop.f32.mrf.mxu0
  %v940 = vadd.f32 0.0, %v939
  %v941 = vpop.f32.mrf.mxu0
  %v942 = vpop.f32.mrf.mxu0
  %v943 = vadd.f32 0.0, %v942
  %v944 = vpop.f32.mrf.mxu0
  %945 = vdwg.mxu0
  %948 = vrot.lane.b32.xlu0 %v940, 14
  %v949 = vpop.permute.xlu0 %948
  %950 = vrot.lane.b32.xlu0 %v943, 14
  %v951 = vpop.permute.xlu0 %950
  %v954 = vsel %vm199, %v65, %v949
  %v955 = vsel %vm199, %v66, %v951
  %v956 = vld [vmem:[%s13] sm:$0xff]
  %v957 = vld [vmem:[%s13 + $0x8] sm:$0xff]
  %v958 = vld [vmem:[%s13 + $0x10] sm:$0xff]
  %v959 = vld [vmem:[%s13 + $0x18] sm:$0xf]
  %v960 = vld [vmem:[%s14] sm:$0x1]
  %v962 = vlaneseq
  %v963 = vshrl.u32 %v962, 7
  %v964 = vsub.s32 0, %v963
  %v965 = vrot.slane %v960, %v964
  %vm967 = vcmask 228352
  %v969 = vsel %vm967, %v954, 0
  %v972 = vsel %vm967, %v955, 0
  %v975 = vsel %vm108, %v959, 0
  %977 = vmatprep.subr.mxu0 0.0
  %978 = vmatpush1.msra.mxu0 0.0
  %979 = vmatprep.subr.mxu0 0.0
  %980 = vmatpush1.msra.mxu0 0.0
  %981 = vmatprep.subr.mxu0 0.0
  %982 = vmatpush1.msra.mxu0 0.0
  %983 = vmatprep.subr.mxu0 0.0
  %984 = vmatpush1.msra.mxu0 0.0
  %985 = vmatprep.subr.mxu0 0.0
  %986 = vmatpush1.msra.mxu0 0.0
  %987 = vmatprep.subr.mxu0 0.0
  %988 = vmatpush1.msra.mxu0 0.0
  %989 = vmatprep.subr.mxu0 0.0
  %990 = vmatpush1.msra.mxu0 0.0
  %991 = vmatprep.subr.mxu0 0.0
  %992 = vmatpush1.msra.mxu0 0.0
  %993 = vmatprep.subr.mxu0 0.0
  %994 = vmatpush1.msra.mxu0 0.0
  %995 = vmatprep.subr.mxu0 0.0
  %996 = vmatpush1.msra.mxu0 0.0
  %997 = vmatprep.subr.mxu0 0.0
  %998 = vmatpush1.msra.mxu0 0.0
  %999 = vmatprep.subr.mxu0 0.0
  %1000 = vmatpush1.msra.mxu0 0.0
  %1001 = vmatprep.subr.mxu0 0.0
  %1002 = vmatpush1.msra.mxu0 %v975
  %1003 = vmatprep.subr.mxu0 0.0
  %1004 = vmatpush1.msra.mxu0 %v958
  %1005 = vmatprep.subr.mxu0 0.0
  %1006 = vmatpush1.msra.mxu0 %v957
  %1007 = vmatprep.subr.mxu0 0.0
  %1008 = vmatpush1.msra.mxu0 %v956
  %1009 = vmatprep.subr.mxu0 0.0
  %1010 = vmatpush2.msra.mxu0 0.0
  %1011 = vmatprep.subr.mxu0 0.0
  %1012 = vmatpush2.msra.mxu0 0.0
  %1013 = vmatprep.subr.mxu0 0.0
  %1014 = vmatpush2.msra.mxu0 0.0
  %1015 = vmatprep.subr.mxu0 0.0
  %1016 = vmatpush2.msra.mxu0 0.0
  %1017 = vmatprep.subr.mxu0 0.0
  %1018 = vmatpush2.msra.mxu0 0.0
  %1019 = vmatprep.subr.mxu0 0.0
  %1020 = vmatpush2.msra.mxu0 0.0
  %1021 = vmatprep.subr.mxu0 0.0
  %1022 = vmatpush2.msra.mxu0 0.0
  %1023 = vmatprep.subr.mxu0 0.0
  %1024 = vmatpush2.msra.mxu0 0.0
  %1025 = vmatprep.subr.mxu0 0.0
  %1026 = vmatpush2.msra.mxu0 0.0
  %1027 = vmatprep.subr.mxu0 0.0
  %1028 = vmatpush2.msra.mxu0 0.0
  %1029 = vmatprep.subr.mxu0 0.0
  %1030 = vmatpush2.msra.mxu0 0.0
  %1031 = vmatprep.subr.mxu0 0.0
  %1032 = vmatpush2.msra.mxu0 0.0
  %1033 = vmatprep.subr.mxu0 0.0
  %1034 = vmatpush2.msra.mxu0 0.0
  %1035 = vmatprep.subr.mxu0 0.0
  %1036 = vmatpush2.msra.mxu0 0.0
  %1037 = vmatprep.subr.mxu0 0.0
  %1038 = vmatpush2.msra.mxu0 0.0
  %1039 = vmatprep.subr.mxu0 0.0
  %1040 = vmatpush2.msra.mxu0 0.0
  %1041 = vmatprep.mubr.f32.mxu0 0.0
  %1042 = vmatmul.mubr.f32.gmra.mxu0 %v969
  %v1043 = vpop.f32.mrf.mxu0
  %v1044 = vadd.f32 %v965, %v1043
  %v1045 = vpop.f32.mrf.mxu0
  %1046 = vmatprep.mubr.f32.mxu0 0.0
  %1047 = vmatmul.mubr.f32.gmra.mxu0 %v972
  %v1048 = vpop.f32.mrf.mxu0
  %v1049 = vadd.f32 %v965, %v1048
  %v1050 = vpop.f32.mrf.mxu0
  %1051 = vdwg.mxu0
  %v1052 = vxor.u32 %v1044, 2147483648
  %v1053 = vxor.u32 %v1049, 2147483648
  %v1054 = vmul.f32 %v1052, 1.442695
  %v1055 = vpow.pop %v1054
  %v1056 = vmul.f32 %v1053, 1.442695
  %v1057 = vpow.pop %v1056
  %v1058 = vadd.f32 %v1055, 1.0
  %v1059 = vadd.f32 %v1057, 1.0
  %v1060 = vrcp.pop %v1058
  %v1061 = vmul.f32 1.0, %v1060
  %v1062 = vrcp.pop %v1059
  %v1063 = vmul.f32 1.0, %v1062
  %v1064 = vmul.f32 %v1044, %v1061
  %v1065 = vmul.f32 %v1049, %v1063
  %v1066 = vld [vmem:[%s15] sm:$0xff]
  %v1067 = vld [vmem:[%s15 + $0x8] sm:$0x7]
  %vm1068 = vcmask 89088
  %v1070 = vsel %vm1068, %v1064, 0
  %v1073 = vsel %vm1068, %v1065, 0
  %vm1075 = vcmask 1042432
  %v1077 = vsel %vm1075, %v1067, 0
  %1079 = vmatprep.subr.mxu0 0.0
  %1080 = vmatpush1.msra.mxu0 0.0
  %1081 = vmatprep.subr.mxu0 0.0
  %1082 = vmatpush1.msra.mxu0 0.0
  %1083 = vmatprep.subr.mxu0 0.0
  %1084 = vmatpush1.msra.mxu0 0.0
  %1085 = vmatprep.subr.mxu0 0.0
  %1086 = vmatpush1.msra.mxu0 0.0
  %1087 = vmatprep.subr.mxu0 0.0
  %1088 = vmatpush1.msra.mxu0 0.0
  %1089 = vmatprep.subr.mxu0 0.0
  %1090 = vmatpush1.msra.mxu0 0.0
  %1091 = vmatprep.subr.mxu0 0.0
  %1092 = vmatpush1.msra.mxu0 0.0
  %1093 = vmatprep.subr.mxu0 0.0
  %1094 = vmatpush1.msra.mxu0 0.0
  %1095 = vmatprep.subr.mxu0 0.0
  %1096 = vmatpush1.msra.mxu0 0.0
  %1097 = vmatprep.subr.mxu0 0.0
  %1098 = vmatpush1.msra.mxu0 0.0
  %1099 = vmatprep.subr.mxu0 0.0
  %1100 = vmatpush1.msra.mxu0 0.0
  %1101 = vmatprep.subr.mxu0 0.0
  %1102 = vmatpush1.msra.mxu0 0.0
  %1103 = vmatprep.subr.mxu0 0.0
  %1104 = vmatpush1.msra.mxu0 0.0
  %1105 = vmatprep.subr.mxu0 0.0
  %1106 = vmatpush1.msra.mxu0 0.0
  %1107 = vmatprep.subr.mxu0 0.0
  %1108 = vmatpush1.msra.mxu0 %v1077
  %1109 = vmatprep.subr.mxu0 0.0
  %1110 = vmatpush1.msra.mxu0 %v1066
  %1111 = vmatprep.subr.mxu0 0.0
  %1112 = vmatpush2.msra.mxu0 0.0
  %1113 = vmatprep.subr.mxu0 0.0
  %1114 = vmatpush2.msra.mxu0 0.0
  %1115 = vmatprep.subr.mxu0 0.0
  %1116 = vmatpush2.msra.mxu0 0.0
  %1117 = vmatprep.subr.mxu0 0.0
  %1118 = vmatpush2.msra.mxu0 0.0
  %1119 = vmatprep.subr.mxu0 0.0
  %1120 = vmatpush2.msra.mxu0 0.0
  %1121 = vmatprep.subr.mxu0 0.0
  %1122 = vmatpush2.msra.mxu0 0.0
  %1123 = vmatprep.subr.mxu0 0.0
  %1124 = vmatpush2.msra.mxu0 0.0
  %1125 = vmatprep.subr.mxu0 0.0
  %1126 = vmatpush2.msra.mxu0 0.0
  %1127 = vmatprep.subr.mxu0 0.0
  %1128 = vmatpush2.msra.mxu0 0.0
  %1129 = vmatprep.subr.mxu0 0.0
  %1130 = vmatpush2.msra.mxu0 0.0
  %1131 = vmatprep.subr.mxu0 0.0
  %1132 = vmatpush2.msra.mxu0 0.0
  %1133 = vmatprep.subr.mxu0 0.0
  %1134 = vmatpush2.msra.mxu0 0.0
  %1135 = vmatprep.subr.mxu0 0.0
  %1136 = vmatpush2.msra.mxu0 0.0
  %1137 = vmatprep.subr.mxu0 0.0
  %1138 = vmatpush2.msra.mxu0 0.0
  %1139 = vmatprep.subr.mxu0 0.0
  %1140 = vmatpush2.msra.mxu0 0.0
  %1141 = vmatprep.subr.mxu0 0.0
  %1142 = vmatpush2.msra.mxu0 0.0
  %1143 = vmatprep.mubr.f32.mxu0 0.0
  %1144 = vmatmul.mubr.f32.gmra.mxu0 %v1070
  %v1145 = vpop.f32.mrf.mxu0
  %v1146 = vadd.f32 0.0, %v1145
  %v1147 = vpop.f32.mrf.mxu0
  %1148 = vmatprep.mubr.f32.mxu0 0.0
  %1149 = vmatmul.mubr.f32.gmra.mxu0 %v1073
  %v1150 = vpop.f32.mrf.mxu0
  %v1151 = vadd.f32 0.0, %v1150
  %v1152 = vpop.f32.mrf.mxu0
  %1153 = vdwg.mxu0
  %v1154 = vadd.f32 %v65, %v1146
  %v1155 = vadd.f32 %v66, %v1151
  %v1156 = vld [vmem:[%s16] sm:$0x1]
  %v1158 = vlaneseq
  %v1159 = vshrl.u32 %v1158, 7
  %v1160 = vsub.s32 0, %v1159
  %v1161 = vrot.slane %v1156, %v1160
  %v1163 = vadd.f32 %v1154, %v1161
  %v1164 = vadd.f32 %v1155, %v1161
  %v1165 = vmul.f32 %v940, %v81
  %v1166 = vmul.f32 %v943, %v81
  %v1167 = vadd.f32 %v1163, %v1165
  %v1168 = vadd.f32 %v1164, %v1166
  %s1169 = scalar_lea.vmem %s5, 16
  %v1170 = vld [vmem:[%s1169] sm:$0xff]
  %v1171 = vld [vmem:[%s1169 + $0x8] sm:$0x3f]
  %v1173 = vsel %vm199, %v1167, 0
  %v1176 = vsel %vm199, %v1168, 0
  %v1179 = vsel %vm206, %v1171, 0
  %1181 = vmatprep.subr.mxu0 0.0
  %1182 = vmatpush1.msra.mxu0 0.0
  %1183 = vmatprep.subr.mxu0 0.0
  %1184 = vmatpush1.msra.mxu0 0.0
  %1185 = vmatprep.subr.mxu0 0.0
  %1186 = vmatpush1.msra.mxu0 0.0
  %1187 = vmatprep.subr.mxu0 0.0
  %1188 = vmatpush1.msra.mxu0 0.0
  %1189 = vmatprep.subr.mxu0 0.0
  %1190 = vmatpush1.msra.mxu0 0.0
  %1191 = vmatprep.subr.mxu0 0.0
  %1192 = vmatpush1.msra.mxu0 0.0
  %1193 = vmatprep.subr.mxu0 0.0
  %1194 = vmatpush1.msra.mxu0 0.0
  %1195 = vmatprep.subr.mxu0 0.0
  %1196 = vmatpush1.msra.mxu0 0.0
  %1197 = vmatprep.subr.mxu0 0.0
  %1198 = vmatpush1.msra.mxu0 0.0
  %1199 = vmatprep.subr.mxu0 0.0
  %1200 = vmatpush1.msra.mxu0 0.0
  %1201 = vmatprep.subr.mxu0 0.0
  %1202 = vmatpush1.msra.mxu0 0.0
  %1203 = vmatprep.subr.mxu0 0.0
  %1204 = vmatpush1.msra.mxu0 0.0
  %1205 = vmatprep.subr.mxu0 0.0
  %1206 = vmatpush1.msra.mxu0 0.0
  %1207 = vmatprep.subr.mxu0 0.0
  %1208 = vmatpush1.msra.mxu0 0.0
  %1209 = vmatprep.subr.mxu0 0.0
  %1210 = vmatpush1.msra.mxu0 %v1179
  %1211 = vmatprep.subr.mxu0 0.0
  %1212 = vmatpush1.msra.mxu0 %v1170
  %1213 = vmatprep.subr.mxu0 0.0
  %1214 = vmatpush2.msra.mxu0 0.0
  %1215 = vmatprep.subr.mxu0 0.0
  %1216 = vmatpush2.msra.mxu0 0.0
  %1217 = vmatprep.subr.mxu0 0.0
  %1218 = vmatpush2.msra.mxu0 0.0
  %1219 = vmatprep.subr.mxu0 0.0
  %1220 = vmatpush2.msra.mxu0 0.0
  %1221 = vmatprep.subr.mxu0 0.0
  %1222 = vmatpush2.msra.mxu0 0.0
  %1223 = vmatprep.subr.mxu0 0.0
  %1224 = vmatpush2.msra.mxu0 0.0
  %1225 = vmatprep.subr.mxu0 0.0
  %1226 = vmatpush2.msra.mxu0 0.0
  %1227 = vmatprep.subr.mxu0 0.0
  %1228 = vmatpush2.msra.mxu0 0.0
  %1229 = vmatprep.subr.mxu0 0.0
  %1230 = vmatpush2.msra.mxu0 0.0
  %1231 = vmatprep.subr.mxu0 0.0
  %1232 = vmatpush2.msra.mxu0 0.0
  %1233 = vmatprep.subr.mxu0 0.0
  %1234 = vmatpush2.msra.mxu0 0.0
  %1235 = vmatprep.subr.mxu0 0.0
  %1236 = vmatpush2.msra.mxu0 0.0
  %1237 = vmatprep.subr.mxu0 0.0
  %1238 = vmatpush2.msra.mxu0 0.0
  %1239 = vmatprep.subr.mxu0 0.0
  %1240 = vmatpush2.msra.mxu0 0.0
  %1241 = vmatprep.subr.mxu0 0.0
  %1242 = vmatpush2.msra.mxu0 0.0
  %1243 = vmatprep.subr.mxu0 0.0
  %1244 = vmatpush2.msra.mxu0 0.0
  %1245 = vmatprep.mubr.f32.mxu0 0.0
  %1246 = vmatmul.mubr.f32.gmra.mxu0 %v1173
  %v1247 = vpop.f32.mrf.mxu0
  %v1248 = vadd.f32 0.0, %v1247
  %v1249 = vpop.f32.mrf.mxu0
  %1250 = vmatprep.mubr.f32.mxu0 0.0
  %1251 = vmatmul.mubr.f32.gmra.mxu0 %v1176
  %v1252 = vpop.f32.mrf.mxu0
  %v1253 = vadd.f32 0.0, %v1252
  %v1254 = vpop.f32.mrf.mxu0
  %1255 = vdwg.mxu0
  %1258 = vrot.lane.b32.xlu0 %v1248, 14
  %v1259 = vpop.permute.xlu0 %1258
  %1260 = vrot.lane.b32.xlu0 %v1253, 14
  %v1261 = vpop.permute.xlu0 %1260
  %v1264 = vsel %vm199, %v1167, %v1259
  %v1265 = vsel %vm199, %v1168, %v1261
  %v1266 = vpack.c.bf16 %v1265, %v1264
  %1267 = vmatprep.subr.bf16.mxu0 0
  %1268 = vmatpush1.bf16.msra.mxu0 0
  %1269 = vmatprep.subr.bf16.mxu0 0
  %1270 = vmatpush1.bf16.msra.mxu0 0
  %1271 = vmatprep.subr.bf16.mxu0 0
  %1272 = vmatpush1.bf16.msra.mxu0 0
  %1273 = vmatprep.subr.bf16.mxu0 0
  %1274 = vmatpush1.bf16.msra.mxu0 0
  %1275 = vmatprep.subr.bf16.mxu0 0
  %1276 = vmatpush1.bf16.msra.mxu0 0
  %1277 = vmatprep.subr.bf16.mxu0 0
  %1278 = vmatpush1.bf16.msra.mxu0 0
  %1279 = vmatprep.subr.bf16.mxu0 0
  %1280 = vmatpush1.bf16.msra.mxu0 0
  %1281 = vmatprep.subr.bf16.mxu0 0
  %1282 = vmatpush1.bf16.msra.mxu0 %v1266
  %1283 = vmatprep.subr.bf16.mxu0 0
  %1284 = vmatpush2.bf16.msra.mxu0 0
  %1285 = vmatprep.subr.bf16.mxu0 0
  %1286 = vmatpush2.bf16.msra.mxu0 0
  %1287 = vmatprep.subr.bf16.mxu0 0
  %1288 = vmatpush2.bf16.msra.mxu0 0
  %1289 = vmatprep.subr.bf16.mxu0 0
  %1290 = vmatpush2.bf16.msra.mxu0 0
  %1291 = vmatprep.subr.bf16.mxu0 0
  %1292 = vmatpush2.bf16.msra.mxu0 0
  %1293 = vmatprep.subr.bf16.mxu0 0
  %1294 = vmatpush2.bf16.msra.mxu0 0
  %1295 = vmatprep.subr.bf16.mxu0 0
  %1296 = vmatpush2.bf16.msra.mxu0 0
  %1297 = vmatprep.subr.bf16.mxu0 0
  %1298 = vmatpush2.bf16.msra.mxu0 0
  %1299 = vmatprep.mubr.bf16.mxu0 0
  %1300 = vmatmul.mubr.bf16.gmra.mxu0 %v318
  %v1301 = vpop.f32.mrf.mxu0
  %v1302 = vadd.f32 0.0, %v1301
  %v1303 = vpop.f32.mrf.mxu0
  %v1304 = vpop.f32.mrf.mxu0
  %v1305 = vadd.f32 0.0, %v1304
  %v1306 = vpop.f32.mrf.mxu0
  %1307 = vmatprep.mubr.bf16.mxu0 0
  %1308 = vmatmul.mubr.bf16.gmra.mxu0 %v321
  %v1309 = vpop.f32.mrf.mxu0
  %v1310 = vadd.f32 0.0, %v1309
  %v1311 = vpop.f32.mrf.mxu0
  %v1312 = vpop.f32.mrf.mxu0
  %v1313 = vadd.f32 0.0, %v1312
  %v1314 = vpop.f32.mrf.mxu0
  %1315 = vmatprep.mubr.bf16.mxu0 0
  %1316 = vmatmul.mubr.bf16.gmra.mxu0 %v324
  %v1317 = vpop.f32.mrf.mxu0
  %v1318 = vadd.f32 0.0, %v1317
  %v1319 = vpop.f32.mrf.mxu0
  %v1320 = vpop.f32.mrf.mxu0
  %v1321 = vadd.f32 0.0, %v1320
  %v1322 = vpop.f32.mrf.mxu0
  %1323 = vmatprep.mubr.bf16.mxu0 0
  %1324 = vmatmul.mubr.bf16.gmra.mxu0 %v327
  %v1325 = vpop.f32.mrf.mxu0
  %v1326 = vadd.f32 0.0, %v1325
  %v1327 = vpop.f32.mrf.mxu0
  %v1328 = vpop.f32.mrf.mxu0
  %v1329 = vadd.f32 0.0, %v1328
  %v1330 = vpop.f32.mrf.mxu0
  %1331 = vdwg.mxu0
  %v1332 = vsub.f32 %v1318, %v1302
  %v1333 = vsub.f32 %v1321, %v1305
  %v1334 = vsub.f32 %v1326, %v1310
  %v1335 = vsub.f32 %v1329, %v1313
  %v1336 = vmul.f32 %v1332, %v81
  %v1337 = vmul.f32 %v1333, %v81
  %v1338 = vmul.f32 %v1334, %v81
  %v1339 = vmul.f32 %v1335, %v81
  %v1340 = vmul.f32 %v1336, %v1336
  %v1341 = vmul.f32 %v1337, %v1337
  %v1342 = vmul.f32 %v1338, %v1338
  %v1343 = vmul.f32 %v1339, %v1339
  %v1344 = vsel %vm199, %v1340, 0.0
  %1345 = vadd.xlane.f32.xlu0 %v1344
  %v1346 = vpop.xlane.xlu0 %1345
  %v1347 = vsel %vm199, %v1341, 0.0
  %1348 = vadd.xlane.f32.xlu0 %v1347
  %v1349 = vpop.xlane.xlu0 %1348
  %v1350 = vsel %vm199, %v1342, 0.0
  %1351 = vadd.xlane.f32.xlu0 %v1350
  %v1352 = vpop.xlane.xlu0 %1351
  %v1353 = vsel %vm199, %v1343, 0.0
  %1354 = vadd.xlane.f32.xlu0 %v1353
  %v1355 = vpop.xlane.xlu0 %1354
  %v1356 = vrsqrt.pop %v1346
  %v1357 = vmul.f32 %v1346, %v1356
  %vm1358 = vcmp.eq.f32.partialorder %v1346, inf
  %v1359 = vsel %vm1358, %v1346, %v1357
  %vm1360 = vcmp.eq.f32.partialorder %v1346, 0.0
  %v1361 = vand.u32 %v1346, 2147483648
  %v1362 = vsel %vm1360, %v1361, %v1359
  %v1363 = vrsqrt.pop %v1349
  %v1364 = vmul.f32 %v1349, %v1363
  %vm1365 = vcmp.eq.f32.partialorder %v1349, inf
  %v1366 = vsel %vm1365, %v1349, %v1364
  %vm1367 = vcmp.eq.f32.partialorder %v1349, 0.0
  %v1368 = vand.u32 %v1349, 2147483648
  %v1369 = vsel %vm1367, %v1368, %v1366
  %v1370 = vrsqrt.pop %v1352
  %v1371 = vmul.f32 %v1352, %v1370
  %vm1372 = vcmp.eq.f32.partialorder %v1352, inf
  %v1373 = vsel %vm1372, %v1352, %v1371
  %vm1374 = vcmp.eq.f32.partialorder %v1352, 0.0
  %v1375 = vand.u32 %v1352, 2147483648
  %v1376 = vsel %vm1374, %v1375, %v1373
  %v1377 = vrsqrt.pop %v1355
  %v1378 = vmul.f32 %v1355, %v1377
  %vm1379 = vcmp.eq.f32.partialorder %v1355, inf
  %v1380 = vsel %vm1379, %v1355, %v1378
  %vm1381 = vcmp.eq.f32.partialorder %v1355, 0.0
  %v1382 = vand.u32 %v1355, 2147483648
  %v1383 = vsel %vm1381, %v1382, %v1380
  %1388 = vrot.lane.b32.xlu0 %v1302, 106
  %v1389 = vpop.permute.xlu0 %1388
  %1390 = vrot.lane.b32.xlu0 %v1305, 106
  %v1391 = vpop.permute.xlu0 %1390
  %1392 = vrot.lane.b32.xlu0 %v1310, 106
  %v1393 = vpop.permute.xlu0 %1392
  %1394 = vrot.lane.b32.xlu0 %v1313, 106
  %v1395 = vpop.permute.xlu0 %1394
  %v1400 = vadd.f32 %v1318, %v1389
  %v1401 = vadd.f32 %v1321, %v1391
  %v1402 = vadd.f32 %v1326, %v1393
  %v1403 = vadd.f32 %v1329, %v1395
  %s1404 = scalar_lea.vmem %s6, 1
  %v1405 = vld [vmem:[%s1404] sm:$0x1]
  %v1407 = vlaneseq
  %v1408 = vshrl.u32 %v1407, 7
  %v1409 = vsub.s32 0, %v1408
  %v1410 = vrot.slane %v1405, %v1409
  %v1412 = vmul.f32 %v1346, %v1410
  %v1413 = vmul.f32 %v1349, %v1410
  %v1414 = vmul.f32 %v1352, %v1410
  %v1415 = vmul.f32 %v1355, %v1410
  %1420 = vrot.lane.b32.xlu0 %v1412, 14
  %v1421 = vpop.permute.xlu0 %1420
  %1422 = vrot.lane.b32.xlu0 %v1413, 14
  %v1423 = vpop.permute.xlu0 %1422
  %1424 = vrot.lane.b32.xlu0 %v1414, 14
  %v1425 = vpop.permute.xlu0 %1424
  %1426 = vrot.lane.b32.xlu0 %v1415, 14
  %v1427 = vpop.permute.xlu0 %1426
  %v1432 = vadd.f32 %v1400, %v1421
  %v1433 = vadd.f32 %v1401, %v1423
  %v1434 = vadd.f32 %v1402, %v1425
  %v1435 = vadd.f32 %v1403, %v1427
  %1436 = vrot.lane.b32.xlu0 %v179, 120
  %v1437 = vpop.permute.xlu0 %1436
  %1438 = vrot.lane.b32.xlu0 %v184, 120
  %v1439 = vpop.permute.xlu0 %1438
  %1440 = vrot.lane.b32.xlu0 %v189, 120
  %v1441 = vpop.permute.xlu0 %1440
  %1442 = vrot.lane.b32.xlu0 %v194, 120
  %v1443 = vpop.permute.xlu0 %1442
  %v1448 = vadd.f32 %v1432, %v1437
  %v1449 = vadd.f32 %v1433, %v1439
  %v1450 = vadd.f32 %v1434, %v1441
  %v1451 = vadd.f32 %v1435, %v1443
  %v1452 = vxor.u32 %v1448, 2147483648
  %v1453 = vxor.u32 %v1449, 2147483648
  %v1454 = vxor.u32 %v1450, 2147483648
  %v1455 = vxor.u32 %v1451, 2147483648
  %v1456 = vmul.f32 %v1452, 1.442695
  %v1457 = vpow.pop %v1456
  %v1458 = vmul.f32 %v1453, 1.442695
  %v1459 = vpow.pop %v1458
  %v1460 = vmul.f32 %v1454, 1.442695
  %v1461 = vpow.pop %v1460
  %v1462 = vmul.f32 %v1455, 1.442695
  %v1463 = vpow.pop %v1462
  %v1464 = vadd.f32 %v1457, 1.0
  %v1465 = vadd.f32 %v1459, 1.0
  %v1466 = vadd.f32 %v1461, 1.0
  %v1467 = vadd.f32 %v1463, 1.0
  %v1468 = vrcp.pop %v1464
  %v1469 = vmul.f32 1.0, %v1468
  %v1470 = vrcp.pop %v1465
  %v1471 = vmul.f32 1.0, %v1470
  %v1472 = vrcp.pop %v1466
  %v1473 = vmul.f32 1.0, %v1472
  %v1474 = vrcp.pop %v1467
  %v1475 = vmul.f32 1.0, %v1474
  %v1476 = vmul.f32 %v1448, %v1469
  %v1477 = vmul.f32 %v1449, %v1471
  %v1478 = vmul.f32 %v1450, %v1473
  %v1479 = vmul.f32 %v1451, %v1475
  %s1480 = scalar_lea.vmem %s9, 24
  %v1481 = vld [vmem:[%s1480] sm:$0xff]
  %v1482 = vld [vmem:[%s1480 + $0x8] sm:$0xff]
  %v1483 = vld [vmem:[%s1480 + $0x10] sm:$0x3f]
  %s1484 = scalar_lea.vmem %s10, 1
  %v1485 = vld [vmem:[%s1484] sm:$0x1]
  %v1487 = vlaneseq
  %v1488 = vshrl.u32 %v1487, 7
  %v1489 = vsub.s32 0, %v1488
  %v1490 = vrot.slane %v1485, %v1489
  %1496 = vrot.lane.b32.xlu0 %v1476, 114
  %v1497 = vpop.permute.xlu0 %1496
  %1498 = vrot.lane.b32.xlu0 %v1477, 114
  %v1499 = vpop.permute.xlu0 %1498
  %1500 = vrot.lane.b32.xlu0 %v1478, 114
  %v1501 = vpop.permute.xlu0 %1500
  %1502 = vrot.lane.b32.xlu0 %v1479, 114
  %v1503 = vpop.permute.xlu0 %1502
  %v1504 = vsel %vm567, %v1497, 0
  %v1506 = vsel %vm567, %v1499, 0
  %v1508 = vsel %vm567, %v1501, 0
  %v1510 = vsel %vm567, %v1503, 0
  %v1513 = vsel %vm206, %v1483, 0
  %1515 = vmatprep.subr.mxu0 0.0
  %1516 = vmatpush1.msra.mxu0 0.0
  %1517 = vmatprep.subr.mxu0 0.0
  %1518 = vmatpush1.msra.mxu0 0.0
  %1519 = vmatprep.subr.mxu0 0.0
  %1520 = vmatpush1.msra.mxu0 0.0
  %1521 = vmatprep.subr.mxu0 0.0
  %1522 = vmatpush1.msra.mxu0 0.0
  %1523 = vmatprep.subr.mxu0 0.0
  %1524 = vmatpush1.msra.mxu0 0.0
  %1525 = vmatprep.subr.mxu0 0.0
  %1526 = vmatpush1.msra.mxu0 0.0
  %1527 = vmatprep.subr.mxu0 0.0
  %1528 = vmatpush1.msra.mxu0 0.0
  %1529 = vmatprep.subr.mxu0 0.0
  %1530 = vmatpush1.msra.mxu0 0.0
  %1531 = vmatprep.subr.mxu0 0.0
  %1532 = vmatpush1.msra.mxu0 0.0
  %1533 = vmatprep.subr.mxu0 0.0
  %1534 = vmatpush1.msra.mxu0 0.0
  %1535 = vmatprep.subr.mxu0 0.0
  %1536 = vmatpush1.msra.mxu0 0.0
  %1537 = vmatprep.subr.mxu0 0.0
  %1538 = vmatpush1.msra.mxu0 0.0
  %1539 = vmatprep.subr.mxu0 0.0
  %1540 = vmatpush1.msra.mxu0 0.0
  %1541 = vmatprep.subr.mxu0 0.0
  %1542 = vmatpush1.msra.mxu0 %v1513
  %1543 = vmatprep.subr.mxu0 0.0
  %1544 = vmatpush1.msra.mxu0 %v1482
  %1545 = vmatprep.subr.mxu0 0.0
  %1546 = vmatpush1.msra.mxu0 %v1481
  %1547 = vmatprep.subr.mxu0 0.0
  %1548 = vmatpush2.msra.mxu0 0.0
  %1549 = vmatprep.subr.mxu0 0.0
  %1550 = vmatpush2.msra.mxu0 0.0
  %1551 = vmatprep.subr.mxu0 0.0
  %1552 = vmatpush2.msra.mxu0 0.0
  %1553 = vmatprep.subr.mxu0 0.0
  %1554 = vmatpush2.msra.mxu0 0.0
  %1555 = vmatprep.subr.mxu0 0.0
  %1556 = vmatpush2.msra.mxu0 0.0
  %1557 = vmatprep.subr.mxu0 0.0
  %1558 = vmatpush2.msra.mxu0 0.0
  %1559 = vmatprep.subr.mxu0 0.0
  %1560 = vmatpush2.msra.mxu0 0.0
  %1561 = vmatprep.subr.mxu0 0.0
  %1562 = vmatpush2.msra.mxu0 0.0
  %1563 = vmatprep.subr.mxu0 0.0
  %1564 = vmatpush2.msra.mxu0 0.0
  %1565 = vmatprep.subr.mxu0 0.0
  %1566 = vmatpush2.msra.mxu0 0.0
  %1567 = vmatprep.subr.mxu0 0.0
  %1568 = vmatpush2.msra.mxu0 0.0
  %1569 = vmatprep.subr.mxu0 0.0
  %1570 = vmatpush2.msra.mxu0 0.0
  %1571 = vmatprep.subr.mxu0 0.0
  %1572 = vmatpush2.msra.mxu0 0.0
  %1573 = vmatprep.subr.mxu0 0.0
  %1574 = vmatpush2.msra.mxu0 0.0
  %1575 = vmatprep.subr.mxu0 0.0
  %1576 = vmatpush2.msra.mxu0 0.0
  %1577 = vmatprep.subr.mxu0 0.0
  %1578 = vmatpush2.msra.mxu0 0.0
  %1579 = vmatprep.mubr.f32.mxu0 0.0
  %1580 = vmatmul.mubr.f32.gmra.mxu0 %v1504
  %v1581 = vpop.f32.mrf.mxu0
  %v1582 = vadd.f32 %v1490, %v1581
  %v1583 = vpop.f32.mrf.mxu0
  %1584 = vmatprep.mubr.f32.mxu0 0.0
  %1585 = vmatmul.mubr.f32.gmra.mxu0 %v1506
  %v1586 = vpop.f32.mrf.mxu0
  %v1587 = vadd.f32 %v1490, %v1586
  %v1588 = vpop.f32.mrf.mxu0
  %1589 = vmatprep.mubr.f32.mxu0 0.0
  %1590 = vmatmul.mubr.f32.gmra.mxu0 %v1508
  %v1591 = vpop.f32.mrf.mxu0
  %v1592 = vadd.f32 %v1490, %v1591
  %v1593 = vpop.f32.mrf.mxu0
  %1594 = vmatprep.mubr.f32.mxu0 0.0
  %1595 = vmatmul.mubr.f32.gmra.mxu0 %v1510
  %v1596 = vpop.f32.mrf.mxu0
  %v1597 = vadd.f32 %v1490, %v1596
  %v1598 = vpop.f32.mrf.mxu0
  %1599 = vdwg.mxu0
  %v1600 = vxor.u32 %v1582, 2147483648
  %v1601 = vxor.u32 %v1587, 2147483648
  %v1602 = vxor.u32 %v1592, 2147483648
  %v1603 = vxor.u32 %v1597, 2147483648
  %v1604 = vmul.f32 %v1600, 1.442695
  %v1605 = vpow.pop %v1604
  %v1606 = vmul.f32 %v1601, 1.442695
  %v1607 = vpow.pop %v1606
  %v1608 = vmul.f32 %v1602, 1.442695
  %v1609 = vpow.pop %v1608
  %v1610 = vmul.f32 %v1603, 1.442695
  %v1611 = vpow.pop %v1610
  %v1612 = vadd.f32 %v1605, 1.0
  %v1613 = vadd.f32 %v1607, 1.0
  %v1614 = vadd.f32 %v1609, 1.0
  %v1615 = vadd.f32 %v1611, 1.0
  %v1616 = vrcp.pop %v1612
  %v1617 = vmul.f32 1.0, %v1616
  %v1618 = vrcp.pop %v1613
  %v1619 = vmul.f32 1.0, %v1618
  %v1620 = vrcp.pop %v1614
  %v1621 = vmul.f32 1.0, %v1620
  %v1622 = vrcp.pop %v1615
  %v1623 = vmul.f32 1.0, %v1622
  %v1624 = vmul.f32 %v1582, %v1617
  %v1625 = vmul.f32 %v1587, %v1619
  %v1626 = vmul.f32 %v1592, %v1621
  %v1627 = vmul.f32 %v1597, %v1623
  %s1628 = scalar_lea.vmem %s11, 24
  %v1629 = vld [vmem:[%s1628] sm:$0xff]
  %v1630 = vld [vmem:[%s1628 + $0x8] sm:$0xff]
  %v1631 = vld [vmem:[%s1628 + $0x10] sm:$0x3f]
  %s1632 = scalar_lea.vmem %s12, 1
  %v1633 = vld [vmem:[%s1632] sm:$0x1]
  %v1635 = vlaneseq
  %v1636 = vshrl.u32 %v1635, 7
  %v1637 = vsub.s32 0, %v1636
  %v1638 = vrot.slane %v1633, %v1637
  %v1641 = vsel %vm567, %v1624, 0
  %v1644 = vsel %vm567, %v1625, 0
  %v1647 = vsel %vm567, %v1626, 0
  %v1650 = vsel %vm567, %v1627, 0
  %v1653 = vsel %vm206, %v1631, 0
  %1655 = vmatprep.subr.mxu0 0.0
  %1656 = vmatpush1.msra.mxu0 0.0
  %1657 = vmatprep.subr.mxu0 0.0
  %1658 = vmatpush1.msra.mxu0 0.0
  %1659 = vmatprep.subr.mxu0 0.0
  %1660 = vmatpush1.msra.mxu0 0.0
  %1661 = vmatprep.subr.mxu0 0.0
  %1662 = vmatpush1.msra.mxu0 0.0
  %1663 = vmatprep.subr.mxu0 0.0
  %1664 = vmatpush1.msra.mxu0 0.0
  %1665 = vmatprep.subr.mxu0 0.0
  %1666 = vmatpush1.msra.mxu0 0.0
  %1667 = vmatprep.subr.mxu0 0.0
  %1668 = vmatpush1.msra.mxu0 0.0
  %1669 = vmatprep.subr.mxu0 0.0
  %1670 = vmatpush1.msra.mxu0 0.0
  %1671 = vmatprep.subr.mxu0 0.0
  %1672 = vmatpush1.msra.mxu0 0.0
  %1673 = vmatprep.subr.mxu0 0.0
  %1674 = vmatpush1.msra.mxu0 0.0
  %1675 = vmatprep.subr.mxu0 0.0
  %1676 = vmatpush1.msra.mxu0 0.0
  %1677 = vmatprep.subr.mxu0 0.0
  %1678 = vmatpush1.msra.mxu0 0.0
  %1679 = vmatprep.subr.mxu0 0.0
  %1680 = vmatpush1.msra.mxu0 0.0
  %1681 = vmatprep.subr.mxu0 0.0
  %1682 = vmatpush1.msra.mxu0 %v1653
  %1683 = vmatprep.subr.mxu0 0.0
  %1684 = vmatpush1.msra.mxu0 %v1630
  %1685 = vmatprep.subr.mxu0 0.0
  %1686 = vmatpush1.msra.mxu0 %v1629
  %1687 = vmatprep.subr.mxu0 0.0
  %1688 = vmatpush2.msra.mxu0 0.0
  %1689 = vmatprep.subr.mxu0 0.0
  %1690 = vmatpush2.msra.mxu0 0.0
  %1691 = vmatprep.subr.mxu0 0.0
  %1692 = vmatpush2.msra.mxu0 0.0
  %1693 = vmatprep.subr.mxu0 0.0
  %1694 = vmatpush2.msra.mxu0 0.0
  %1695 = vmatprep.subr.mxu0 0.0
  %1696 = vmatpush2.msra.mxu0 0.0
  %1697 = vmatprep.subr.mxu0 0.0
  %1698 = vmatpush2.msra.mxu0 0.0
  %1699 = vmatprep.subr.mxu0 0.0
  %1700 = vmatpush2.msra.mxu0 0.0
  %1701 = vmatprep.subr.mxu0 0.0
  %1702 = vmatpush2.msra.mxu0 0.0
  %1703 = vmatprep.subr.mxu0 0.0
  %1704 = vmatpush2.msra.mxu0 0.0
  %1705 = vmatprep.subr.mxu0 0.0
  %1706 = vmatpush2.msra.mxu0 0.0
  %1707 = vmatprep.subr.mxu0 0.0
  %1708 = vmatpush2.msra.mxu0 0.0
  %1709 = vmatprep.subr.mxu0 0.0
  %1710 = vmatpush2.msra.mxu0 0.0
  %1711 = vmatprep.subr.mxu0 0.0
  %1712 = vmatpush2.msra.mxu0 0.0
  %1713 = vmatprep.subr.mxu0 0.0
  %1714 = vmatpush2.msra.mxu0 0.0
  %1715 = vmatprep.subr.mxu0 0.0
  %1716 = vmatpush2.msra.mxu0 0.0
  %1717 = vmatprep.subr.mxu0 0.0
  %1718 = vmatpush2.msra.mxu0 0.0
  %1719 = vmatprep.mubr.f32.mxu0 0.0
  %1720 = vmatmul.mubr.f32.gmra.mxu0 %v1641
  %v1721 = vpop.f32.mrf.mxu0
  %v1722 = vadd.f32 %v1638, %v1721
  %v1723 = vpop.f32.mrf.mxu0
  %1724 = vmatprep.mubr.f32.mxu0 0.0
  %1725 = vmatmul.mubr.f32.gmra.mxu0 %v1644
  %v1726 = vpop.f32.mrf.mxu0
  %v1727 = vadd.f32 %v1638, %v1726
  %v1728 = vpop.f32.mrf.mxu0
  %1729 = vmatprep.mubr.f32.mxu0 0.0
  %1730 = vmatmul.mubr.f32.gmra.mxu0 %v1647
  %v1731 = vpop.f32.mrf.mxu0
  %v1732 = vadd.f32 %v1638, %v1731
  %v1733 = vpop.f32.mrf.mxu0
  %1734 = vmatprep.mubr.f32.mxu0 0.0
  %1735 = vmatmul.mubr.f32.gmra.mxu0 %v1650
  %v1736 = vpop.f32.mrf.mxu0
  %v1737 = vadd.f32 %v1638, %v1736
  %v1738 = vpop.f32.mrf.mxu0
  %1739 = vdwg.mxu0
  %v1740 = vxor.u32 %v1722, 2147483648
  %v1741 = vxor.u32 %v1727, 2147483648
  %v1742 = vxor.u32 %v1732, 2147483648
  %v1743 = vxor.u32 %v1737, 2147483648
  %v1744 = vmul.f32 %v1740, 1.442695
  %v1745 = vpow.pop %v1744
  %v1746 = vmul.f32 %v1741, 1.442695
  %v1747 = vpow.pop %v1746
  %v1748 = vmul.f32 %v1742, 1.442695
  %v1749 = vpow.pop %v1748
  %v1750 = vmul.f32 %v1743, 1.442695
  %v1751 = vpow.pop %v1750
  %v1752 = vadd.f32 %v1745, 1.0
  %v1753 = vadd.f32 %v1747, 1.0
  %v1754 = vadd.f32 %v1749, 1.0
  %v1755 = vadd.f32 %v1751, 1.0
  %v1756 = vrcp.pop %v1752
  %v1757 = vmul.f32 1.0, %v1756
  %v1758 = vrcp.pop %v1753
  %v1759 = vmul.f32 1.0, %v1758
  %v1760 = vrcp.pop %v1754
  %v1761 = vmul.f32 1.0, %v1760
  %v1762 = vrcp.pop %v1755
  %v1763 = vmul.f32 1.0, %v1762
  %v1764 = vadd.f32 %v1362, 1.0
  %v1765 = vadd.f32 %v1369, 1.0
  %v1766 = vadd.f32 %v1376, 1.0
  %v1767 = vadd.f32 %v1383, 1.0
  %v1768 = vrcp.pop %v1764
  %v1769 = vrcp.pop %v1765
  %v1770 = vrcp.pop %v1766
  %v1771 = vrcp.pop %v1767
  %v1772 = vmul.f32 %v1624, %v82
  %v1773 = vmul.f32 %v1625, %v82
  %v1774 = vmul.f32 %v1626, %v82
  %v1775 = vmul.f32 %v1627, %v82
  %1777 = vset.pattern.permute.xlu0 0
  %1778 = vperm.xlu0 %1777, %v1757
  %v1779 = vpop.permute.xlu0 %1778
  %1782 = vset.pattern.permute.xlu0 0
  %1783 = vperm.xlu0 %1782, %v1759
  %v1784 = vpop.permute.xlu0 %1783
  %1787 = vset.pattern.permute.xlu0 0
  %1788 = vperm.xlu0 %1787, %v1761
  %v1789 = vpop.permute.xlu0 %1788
  %1792 = vset.pattern.permute.xlu0 0
  %1793 = vperm.xlu0 %1792, %v1763
  %v1794 = vpop.permute.xlu0 %1793
  %v1796 = vmul.f32 %v1779, %v1772
  %v1797 = vmul.f32 %v1784, %v1773
  %v1798 = vmul.f32 %v1789, %v1774
  %v1799 = vmul.f32 %v1794, %v1775
  %v1800 = vmul.f32 %v1768, %v1722
  %v1801 = vmul.f32 %v1769, %v1727
  %v1802 = vmul.f32 %v1770, %v1732
  %v1803 = vmul.f32 %v1771, %v1737
  %1805 = vset.pattern.permute.xlu0 1
  %1806 = vperm.xlu0 %1805, %v1800
  %v1807 = vpop.permute.xlu0 %1806
  %1810 = vset.pattern.permute.xlu0 1
  %1811 = vperm.xlu0 %1810, %v1801
  %v1812 = vpop.permute.xlu0 %1811
  %1815 = vset.pattern.permute.xlu0 1
  %1816 = vperm.xlu0 %1815, %v1802
  %v1817 = vpop.permute.xlu0 %1816
  %1820 = vset.pattern.permute.xlu0 1
  %1821 = vperm.xlu0 %1820, %v1803
  %v1822 = vpop.permute.xlu0 %1821
  %v1824 = vmul.f32 %v1336, %v1807
  %v1825 = vmul.f32 %v1337, %v1812
  %v1826 = vmul.f32 %v1338, %v1817
  %v1827 = vmul.f32 %v1339, %v1822
  %v1828 = vadd.f32 %v1796, %v1824
  %v1829 = vadd.f32 %v1797, %v1825
  %v1830 = vadd.f32 %v1798, %v1826
  %v1831 = vadd.f32 %v1799, %v1827
  %v1832 = vpack.c.bf16 %v1829, %v1828
  %v1833 = vpack.c.bf16 %v1831, %v1830
  %1834 = vmatprep.subr.bf16.mxu0 0
  %1835 = vmatpush1.bf16.msra.mxu0 0
  %1836 = vmatprep.subr.bf16.mxu0 0
  %1837 = vmatpush1.bf16.msra.mxu0 0
  %1838 = vmatprep.subr.bf16.mxu0 0
  %1839 = vmatpush1.bf16.msra.mxu0 0
  %1840 = vmatprep.subr.bf16.mxu0 0
  %1841 = vmatpush1.bf16.msra.mxu0 0
  %1842 = vmatprep.subr.bf16.mxu0 0
  %1843 = vmatpush1.bf16.msra.mxu0 0
  %1844 = vmatprep.subr.bf16.mxu0 0
  %1845 = vmatpush1.bf16.msra.mxu0 0
  %1846 = vmatprep.subr.bf16.mxu0 0
  %1847 = vmatpush1.bf16.msra.mxu0 %v1833
  %1848 = vmatprep.subr.bf16.mxu0 0
  %1849 = vmatpush1.bf16.msra.mxu0 %v1832
  %1850 = vmatprep.subr.bf16.mxu0 0
  %1851 = vmatpush2.bf16.msra.mxu0 0
  %1852 = vmatprep.subr.bf16.mxu0 0
  %1853 = vmatpush2.bf16.msra.mxu0 0
  %1854 = vmatprep.subr.bf16.mxu0 0
  %1855 = vmatpush2.bf16.msra.mxu0 0
  %1856 = vmatprep.subr.bf16.mxu0 0
  %1857 = vmatpush2.bf16.msra.mxu0 0
  %1858 = vmatprep.subr.bf16.mxu0 0
  %1859 = vmatpush2.bf16.msra.mxu0 0
  %1860 = vmatprep.subr.bf16.mxu0 0
  %1861 = vmatpush2.bf16.msra.mxu0 0
  %1862 = vmatprep.subr.bf16.mxu0 0
  %1863 = vmatpush2.bf16.msra.mxu0 0
  %1864 = vmatprep.subr.bf16.mxu0 0
  %1865 = vmatpush2.bf16.msra.mxu0 0
  %1866 = vmatprep.mubr.bf16.mxu0 0
  %1867 = vmatmul.mubr.bf16.gmra.mxu0 %v903
  %v1868 = vpop.f32.mrf.mxu0
  %v1869 = vadd.f32 0.0, %v1868
  %v1870 = vpop.f32.mrf.mxu0
  %v1871 = vpop.f32.mrf.mxu0
  %v1872 = vadd.f32 0.0, %v1871
  %v1873 = vpop.f32.mrf.mxu0
  %1874 = vdwg.mxu0
  %1877 = vrot.lane.b32.xlu0 %v1869, 14
  %v1878 = vpop.permute.xlu0 %1877
  %1879 = vrot.lane.b32.xlu0 %v1872, 14
  %v1880 = vpop.permute.xlu0 %1879
  %v1883 = vsel %vm199, %v1167, %v1878
  %v1884 = vsel %vm199, %v1168, %v1880
  %s1885 = scalar_lea.vmem %s13, 32
  %v1886 = vld [vmem:[%s1885] sm:$0xff]
  %v1887 = vld [vmem:[%s1885 + $0x8] sm:$0xff]
  %v1888 = vld [vmem:[%s1885 + $0x10] sm:$0xff]
  %v1889 = vld [vmem:[%s1885 + $0x18] sm:$0xf]
  %s1890 = scalar_lea.vmem %s14, 1
  %v1891 = vld [vmem:[%s1890] sm:$0x1]
  %v1893 = vlaneseq
  %v1894 = vshrl.u32 %v1893, 7
  %v1895 = vsub.s32 0, %v1894
  %v1896 = vrot.slane %v1891, %v1895
  %v1899 = vsel %vm967, %v1883, 0
  %v1902 = vsel %vm967, %v1884, 0
  %v1905 = vsel %vm108, %v1889, 0
  %1907 = vmatprep.subr.mxu0 0.0
  %1908 = vmatpush1.msra.mxu0 0.0
  %1909 = vmatprep.subr.mxu0 0.0
  %1910 = vmatpush1.msra.mxu0 0.0
  %1911 = vmatprep.subr.mxu0 0.0
  %1912 = vmatpush1.msra.mxu0 0.0
  %1913 = vmatprep.subr.mxu0 0.0
  %1914 = vmatpush1.msra.mxu0 0.0
  %1915 = vmatprep.subr.mxu0 0.0
  %1916 = vmatpush1.msra.mxu0 0.0
  %1917 = vmatprep.subr.mxu0 0.0
  %1918 = vmatpush1.msra.mxu0 0.0
  %1919 = vmatprep.subr.mxu0 0.0
  %1920 = vmatpush1.msra.mxu0 0.0
  %1921 = vmatprep.subr.mxu0 0.0
  %1922 = vmatpush1.msra.mxu0 0.0
  %1923 = vmatprep.subr.mxu0 0.0
  %1924 = vmatpush1.msra.mxu0 0.0
  %1925 = vmatprep.subr.mxu0 0.0
  %1926 = vmatpush1.msra.mxu0 0.0
  %1927 = vmatprep.subr.mxu0 0.0
  %1928 = vmatpush1.msra.mxu0 0.0
  %1929 = vmatprep.subr.mxu0 0.0
  %1930 = vmatpush1.msra.mxu0 0.0
  %1931 = vmatprep.subr.mxu0 0.0
  %1932 = vmatpush1.msra.mxu0 %v1905
  %1933 = vmatprep.subr.mxu0 0.0
  %1934 = vmatpush1.msra.mxu0 %v1888
  %1935 = vmatprep.subr.mxu0 0.0
  %1936 = vmatpush1.msra.mxu0 %v1887
  %1937 = vmatprep.subr.mxu0 0.0
  %1938 = vmatpush1.msra.mxu0 %v1886
  %1939 = vmatprep.subr.mxu0 0.0
  %1940 = vmatpush2.msra.mxu0 0.0
  %1941 = vmatprep.subr.mxu0 0.0
  %1942 = vmatpush2.msra.mxu0 0.0
  %1943 = vmatprep.subr.mxu0 0.0
  %1944 = vmatpush2.msra.mxu0 0.0
  %1945 = vmatprep.subr.mxu0 0.0
  %1946 = vmatpush2.msra.mxu0 0.0
  %1947 = vmatprep.subr.mxu0 0.0
  %1948 = vmatpush2.msra.mxu0 0.0
  %1949 = vmatprep.subr.mxu0 0.0
  %1950 = vmatpush2.msra.mxu0 0.0
  %1951 = vmatprep.subr.mxu0 0.0
  %1952 = vmatpush2.msra.mxu0 0.0
  %1953 = vmatprep.subr.mxu0 0.0
  %1954 = vmatpush2.msra.mxu0 0.0
  %1955 = vmatprep.subr.mxu0 0.0
  %1956 = vmatpush2.msra.mxu0 0.0
  %1957 = vmatprep.subr.mxu0 0.0
  %1958 = vmatpush2.msra.mxu0 0.0
  %1959 = vmatprep.subr.mxu0 0.0
  %1960 = vmatpush2.msra.mxu0 0.0
  %1961 = vmatprep.subr.mxu0 0.0
  %1962 = vmatpush2.msra.mxu0 0.0
  %1963 = vmatprep.subr.mxu0 0.0
  %1964 = vmatpush2.msra.mxu0 0.0
  %1965 = vmatprep.subr.mxu0 0.0
  %1966 = vmatpush2.msra.mxu0 0.0
  %1967 = vmatprep.subr.mxu0 0.0
  %1968 = vmatpush2.msra.mxu0 0.0
  %1969 = vmatprep.subr.mxu0 0.0
  %1970 = vmatpush2.msra.mxu0 0.0
  %1971 = vmatprep.mubr.f32.mxu0 0.0
  %1972 = vmatmul.mubr.f32.gmra.mxu0 %v1899
  %v1973 = vpop.f32.mrf.mxu0
  %v1974 = vadd.f32 %v1896, %v1973
  %v1975 = vpop.f32.mrf.mxu0
  %1976 = vmatprep.mubr.f32.mxu0 0.0
  %1977 = vmatmul.mubr.f32.gmra.mxu0 %v1902
  %v1978 = vpop.f32.mrf.mxu0
  %v1979 = vadd.f32 %v1896, %v1978
  %v1980 = vpop.f32.mrf.mxu0
  %1981 = vdwg.mxu0
  %v1982 = vxor.u32 %v1974, 2147483648
  %v1983 = vxor.u32 %v1979, 2147483648
  %v1984 = vmul.f32 %v1982, 1.442695
  %v1985 = vpow.pop %v1984
  %v1986 = vmul.f32 %v1983, 1.442695
  %v1987 = vpow.pop %v1986
  %v1988 = vadd.f32 %v1985, 1.0
  %v1989 = vadd.f32 %v1987, 1.0
  %v1990 = vrcp.pop %v1988
  %v1991 = vmul.f32 1.0, %v1990
  %v1992 = vrcp.pop %v1989
  %v1993 = vmul.f32 1.0, %v1992
  %v1994 = vmul.f32 %v1974, %v1991
  %v1995 = vmul.f32 %v1979, %v1993
  %s1996 = scalar_lea.vmem %s15, 16
  %v1997 = vld [vmem:[%s1996] sm:$0xff]
  %v1998 = vld [vmem:[%s1996 + $0x8] sm:$0x7]
  %v2000 = vsel %vm1068, %v1994, 0
  %v2003 = vsel %vm1068, %v1995, 0
  %v2006 = vsel %vm1075, %v1998, 0
  %2008 = vmatprep.subr.mxu0 0.0
  %2009 = vmatpush1.msra.mxu0 0.0
  %2010 = vmatprep.subr.mxu0 0.0
  %2011 = vmatpush1.msra.mxu0 0.0
  %2012 = vmatprep.subr.mxu0 0.0
  %2013 = vmatpush1.msra.mxu0 0.0
  %2014 = vmatprep.subr.mxu0 0.0
  %2015 = vmatpush1.msra.mxu0 0.0
  %2016 = vmatprep.subr.mxu0 0.0
  %2017 = vmatpush1.msra.mxu0 0.0
  %2018 = vmatprep.subr.mxu0 0.0
  %2019 = vmatpush1.msra.mxu0 0.0
  %2020 = vmatprep.subr.mxu0 0.0
  %2021 = vmatpush1.msra.mxu0 0.0
  %2022 = vmatprep.subr.mxu0 0.0
  %2023 = vmatpush1.msra.mxu0 0.0
  %2024 = vmatprep.subr.mxu0 0.0
  %2025 = vmatpush1.msra.mxu0 0.0
  %2026 = vmatprep.subr.mxu0 0.0
  %2027 = vmatpush1.msra.mxu0 0.0
  %2028 = vmatprep.subr.mxu0 0.0
  %2029 = vmatpush1.msra.mxu0 0.0
  %2030 = vmatprep.subr.mxu0 0.0
  %2031 = vmatpush1.msra.mxu0 0.0
  %2032 = vmatprep.subr.mxu0 0.0
  %2033 = vmatpush1.msra.mxu0 0.0
  %2034 = vmatprep.subr.mxu0 0.0
  %2035 = vmatpush1.msra.mxu0 0.0
  %2036 = vmatprep.subr.mxu0 0.0
  %2037 = vmatpush1.msra.mxu0 %v2006
  %2038 = vmatprep.subr.mxu0 0.0
  %2039 = vmatpush1.msra.mxu0 %v1997
  %2040 = vmatprep.subr.mxu0 0.0
  %2041 = vmatpush2.msra.mxu0 0.0
  %2042 = vmatprep.subr.mxu0 0.0
  %2043 = vmatpush2.msra.mxu0 0.0
  %2044 = vmatprep.subr.mxu0 0.0
  %2045 = vmatpush2.msra.mxu0 0.0
  %2046 = vmatprep.subr.mxu0 0.0
  %2047 = vmatpush2.msra.mxu0 0.0
  %2048 = vmatprep.subr.mxu0 0.0
  %2049 = vmatpush2.msra.mxu0 0.0
  %2050 = vmatprep.subr.mxu0 0.0
  %2051 = vmatpush2.msra.mxu0 0.0
  %2052 = vmatprep.subr.mxu0 0.0
  %2053 = vmatpush2.msra.mxu0 0.0
  %2054 = vmatprep.subr.mxu0 0.0
  %2055 = vmatpush2.msra.mxu0 0.0
  %2056 = vmatprep.subr.mxu0 0.0
  %2057 = vmatpush2.msra.mxu0 0.0
  %2058 = vmatprep.subr.mxu0 0.0
  %2059 = vmatpush2.msra.mxu0 0.0
  %2060 = vmatprep.subr.mxu0 0.0
  %2061 = vmatpush2.msra.mxu0 0.0
  %2062 = vmatprep.subr.mxu0 0.0
  %2063 = vmatpush2.msra.mxu0 0.0
  %2064 = vmatprep.subr.mxu0 0.0
  %2065 = vmatpush2.msra.mxu0 0.0
  %2066 = vmatprep.subr.mxu0 0.0
  %2067 = vmatpush2.msra.mxu0 0.0
  %2068 = vmatprep.subr.mxu0 0.0
  %2069 = vmatpush2.msra.mxu0 0.0
  %2070 = vmatprep.subr.mxu0 0.0
  %2071 = vmatpush2.msra.mxu0 0.0
  %2072 = vmatprep.mubr.f32.mxu0 0.0
  %2073 = vmatmul.mubr.f32.gmra.mxu0 %v2000
  %v2074 = vpop.f32.mrf.mxu0
  %v2075 = vadd.f32 0.0, %v2074
  %v2076 = vpop.f32.mrf.mxu0
  %2077 = vmatprep.mubr.f32.mxu0 0.0
  %2078 = vmatmul.mubr.f32.gmra.mxu0 %v2003
  %v2079 = vpop.f32.mrf.mxu0
  %v2080 = vadd.f32 0.0, %v2079
  %v2081 = vpop.f32.mrf.mxu0
  %2082 = vdwg.mxu0
  %v2083 = vadd.f32 %v1167, %v2075
  %v2084 = vadd.f32 %v1168, %v2080
  %s2085 = scalar_lea.vmem %s16, 1
  %v2086 = vld [vmem:[%s2085] sm:$0x1]
  %v2088 = vlaneseq
  %v2089 = vshrl.u32 %v2088, 7
  %v2090 = vsub.s32 0, %v2089
  %v2091 = vrot.slane %v2086, %v2090
  %v2093 = vadd.f32 %v2083, %v2091
  %v2094 = vadd.f32 %v2084, %v2091
  %v2095 = vmul.f32 %v1869, %v81
  %v2096 = vmul.f32 %v1872, %v81
  %v2097 = vadd.f32 %v2093, %v2095
  %v2098 = vadd.f32 %v2094, %v2096
  %s2099 = scalar_lea.vmem %s5, 32
  %v2100 = vld [vmem:[%s2099] sm:$0xff]
  %v2101 = vld [vmem:[%s2099 + $0x8] sm:$0x3f]
  %v2103 = vsel %vm199, %v2097, 0
  %v2106 = vsel %vm199, %v2098, 0
  %v2109 = vsel %vm206, %v2101, 0
  %2111 = vmatprep.subr.mxu0 0.0
  %2112 = vmatpush1.msra.mxu0 0.0
  %2113 = vmatprep.subr.mxu0 0.0
  %2114 = vmatpush1.msra.mxu0 0.0
  %2115 = vmatprep.subr.mxu0 0.0
  %2116 = vmatpush1.msra.mxu0 0.0
  %2117 = vmatprep.subr.mxu0 0.0
  %2118 = vmatpush1.msra.mxu0 0.0
  %2119 = vmatprep.subr.mxu0 0.0
  %2120 = vmatpush1.msra.mxu0 0.0
  %2121 = vmatprep.subr.mxu0 0.0
  %2122 = vmatpush1.msra.mxu0 0.0
  %2123 = vmatprep.subr.mxu0 0.0
  %2124 = vmatpush1.msra.mxu0 0.0
  %2125 = vmatprep.subr.mxu0 0.0
  %2126 = vmatpush1.msra.mxu0 0.0
  %2127 = vmatprep.subr.mxu0 0.0
  %2128 = vmatpush1.msra.mxu0 0.0
  %2129 = vmatprep.subr.mxu0 0.0
  %2130 = vmatpush1.msra.mxu0 0.0
  %2131 = vmatprep.subr.mxu0 0.0
  %2132 = vmatpush1.msra.mxu0 0.0
  %2133 = vmatprep.subr.mxu0 0.0
  %2134 = vmatpush1.msra.mxu0 0.0
  %2135 = vmatprep.subr.mxu0 0.0
  %2136 = vmatpush1.msra.mxu0 0.0
  %2137 = vmatprep.subr.mxu0 0.0
  %2138 = vmatpush1.msra.mxu0 0.0
  %2139 = vmatprep.subr.mxu0 0.0
  %2140 = vmatpush1.msra.mxu0 %v2109
  %2141 = vmatprep.subr.mxu0 0.0
  %2142 = vmatpush1.msra.mxu0 %v2100
  %2143 = vmatprep.subr.mxu0 0.0
  %2144 = vmatpush2.msra.mxu0 0.0
  %2145 = vmatprep.subr.mxu0 0.0
  %2146 = vmatpush2.msra.mxu0 0.0
  %2147 = vmatprep.subr.mxu0 0.0
  %2148 = vmatpush2.msra.mxu0 0.0
  %2149 = vmatprep.subr.mxu0 0.0
  %2150 = vmatpush2.msra.mxu0 0.0
  %2151 = vmatprep.subr.mxu0 0.0
  %2152 = vmatpush2.msra.mxu0 0.0
  %2153 = vmatprep.subr.mxu0 0.0
  %2154 = vmatpush2.msra.mxu0 0.0
  %2155 = vmatprep.subr.mxu0 0.0
  %2156 = vmatpush2.msra.mxu0 0.0
  %2157 = vmatprep.subr.mxu0 0.0
  %2158 = vmatpush2.msra.mxu0 0.0
  %2159 = vmatprep.subr.mxu0 0.0
  %2160 = vmatpush2.msra.mxu0 0.0
  %2161 = vmatprep.subr.mxu0 0.0
  %2162 = vmatpush2.msra.mxu0 0.0
  %2163 = vmatprep.subr.mxu0 0.0
  %2164 = vmatpush2.msra.mxu0 0.0
  %2165 = vmatprep.subr.mxu0 0.0
  %2166 = vmatpush2.msra.mxu0 0.0
  %2167 = vmatprep.subr.mxu0 0.0
  %2168 = vmatpush2.msra.mxu0 0.0
  %2169 = vmatprep.subr.mxu0 0.0
  %2170 = vmatpush2.msra.mxu0 0.0
  %2171 = vmatprep.subr.mxu0 0.0
  %2172 = vmatpush2.msra.mxu0 0.0
  %2173 = vmatprep.subr.mxu0 0.0
  %2174 = vmatpush2.msra.mxu0 0.0
  %2175 = vmatprep.mubr.f32.mxu0 0.0
  %2176 = vmatmul.mubr.f32.gmra.mxu0 %v2103
  %v2177 = vpop.f32.mrf.mxu0
  %v2178 = vadd.f32 0.0, %v2177
  %v2179 = vpop.f32.mrf.mxu0
  %2180 = vmatprep.mubr.f32.mxu0 0.0
  %2181 = vmatmul.mubr.f32.gmra.mxu0 %v2106
  %v2182 = vpop.f32.mrf.mxu0
  %v2183 = vadd.f32 0.0, %v2182
  %v2184 = vpop.f32.mrf.mxu0
  %2185 = vdwg.mxu0
  %2188 = vrot.lane.b32.xlu0 %v2178, 14
  %v2189 = vpop.permute.xlu0 %2188
  %2190 = vrot.lane.b32.xlu0 %v2183, 14
  %v2191 = vpop.permute.xlu0 %2190
  %v2194 = vsel %vm199, %v2097, %v2189
  %v2195 = vsel %vm199, %v2098, %v2191
  %v2196 = vpack.c.bf16 %v2195, %v2194
  %2197 = vmatprep.subr.bf16.mxu0 0
  %2198 = vmatpush1.bf16.msra.mxu0 0
  %2199 = vmatprep.subr.bf16.mxu0 0
  %2200 = vmatpush1.bf16.msra.mxu0 0
  %2201 = vmatprep.subr.bf16.mxu0 0
  %2202 = vmatpush1.bf16.msra.mxu0 0
  %2203 = vmatprep.subr.bf16.mxu0 0
  %2204 = vmatpush1.bf16.msra.mxu0 0
  %2205 = vmatprep.subr.bf16.mxu0 0
  %2206 = vmatpush1.bf16.msra.mxu0 0
  %2207 = vmatprep.subr.bf16.mxu0 0
  %2208 = vmatpush1.bf16.msra.mxu0 0
  %2209 = vmatprep.subr.bf16.mxu0 0
  %2210 = vmatpush1.bf16.msra.mxu0 0
  %2211 = vmatprep.subr.bf16.mxu0 0
  %2212 = vmatpush1.bf16.msra.mxu0 %v2196
  %2213 = vmatprep.subr.bf16.mxu0 0
  %2214 = vmatpush2.bf16.msra.mxu0 0
  %2215 = vmatprep.subr.bf16.mxu0 0
  %2216 = vmatpush2.bf16.msra.mxu0 0
  %2217 = vmatprep.subr.bf16.mxu0 0
  %2218 = vmatpush2.bf16.msra.mxu0 0
  %2219 = vmatprep.subr.bf16.mxu0 0
  %2220 = vmatpush2.bf16.msra.mxu0 0
  %2221 = vmatprep.subr.bf16.mxu0 0
  %2222 = vmatpush2.bf16.msra.mxu0 0
  %2223 = vmatprep.subr.bf16.mxu0 0
  %2224 = vmatpush2.bf16.msra.mxu0 0
  %2225 = vmatprep.subr.bf16.mxu0 0
  %2226 = vmatpush2.bf16.msra.mxu0 0
  %2227 = vmatprep.subr.bf16.mxu0 0
  %2228 = vmatpush2.bf16.msra.mxu0 0
  %2229 = vmatprep.mubr.bf16.mxu0 0
  %2230 = vmatmul.mubr.bf16.gmra.mxu0 %v318
  %v2231 = vpop.f32.mrf.mxu0
  %v2232 = vadd.f32 0.0, %v2231
  %v2233 = vpop.f32.mrf.mxu0
  %v2234 = vpop.f32.mrf.mxu0
  %v2235 = vadd.f32 0.0, %v2234
  %v2236 = vpop.f32.mrf.mxu0
  %2237 = vmatprep.mubr.bf16.mxu0 0
  %2238 = vmatmul.mubr.bf16.gmra.mxu0 %v321
  %v2239 = vpop.f32.mrf.mxu0
  %v2240 = vadd.f32 0.0, %v2239
  %v2241 = vpop.f32.mrf.mxu0
  %v2242 = vpop.f32.mrf.mxu0
  %v2243 = vadd.f32 0.0, %v2242
  %v2244 = vpop.f32.mrf.mxu0
  %2245 = vmatprep.mubr.bf16.mxu0 0
  %2246 = vmatmul.mubr.bf16.gmra.mxu0 %v324
  %v2247 = vpop.f32.mrf.mxu0
  %v2248 = vadd.f32 0.0, %v2247
  %v2249 = vpop.f32.mrf.mxu0
  %v2250 = vpop.f32.mrf.mxu0
  %v2251 = vadd.f32 0.0, %v2250
  %v2252 = vpop.f32.mrf.mxu0
  %2253 = vmatprep.mubr.bf16.mxu0 0
  %2254 = vmatmul.mubr.bf16.gmra.mxu0 %v327
  %v2255 = vpop.f32.mrf.mxu0
  %v2256 = vadd.f32 0.0, %v2255
  %v2257 = vpop.f32.mrf.mxu0
  %v2258 = vpop.f32.mrf.mxu0
  %v2259 = vadd.f32 0.0, %v2258
  %v2260 = vpop.f32.mrf.mxu0
  %2261 = vdwg.mxu0
  %v2262 = vsub.f32 %v2248, %v2232
  %v2263 = vsub.f32 %v2251, %v2235
  %v2264 = vsub.f32 %v2256, %v2240
  %v2265 = vsub.f32 %v2259, %v2243
  %v2266 = vmul.f32 %v2262, %v81
  %v2267 = vmul.f32 %v2263, %v81
  %v2268 = vmul.f32 %v2264, %v81
  %v2269 = vmul.f32 %v2265, %v81
  %v2270 = vmul.f32 %v2266, %v2266
  %v2271 = vmul.f32 %v2267, %v2267
  %v2272 = vmul.f32 %v2268, %v2268
  %v2273 = vmul.f32 %v2269, %v2269
  %v2274 = vsel %vm199, %v2270, 0.0
  %2275 = vadd.xlane.f32.xlu0 %v2274
  %v2276 = vpop.xlane.xlu0 %2275
  %v2277 = vsel %vm199, %v2271, 0.0
  %2278 = vadd.xlane.f32.xlu0 %v2277
  %v2279 = vpop.xlane.xlu0 %2278
  %v2280 = vsel %vm199, %v2272, 0.0
  %2281 = vadd.xlane.f32.xlu0 %v2280
  %v2282 = vpop.xlane.xlu0 %2281
  %v2283 = vsel %vm199, %v2273, 0.0
  %2284 = vadd.xlane.f32.xlu0 %v2283
  %v2285 = vpop.xlane.xlu0 %2284
  %v2286 = vrsqrt.pop %v2276
  %v2287 = vmul.f32 %v2276, %v2286
  %vm2288 = vcmp.eq.f32.partialorder %v2276, inf
  %v2289 = vsel %vm2288, %v2276, %v2287
  %vm2290 = vcmp.eq.f32.partialorder %v2276, 0.0
  %v2291 = vand.u32 %v2276, 2147483648
  %v2292 = vsel %vm2290, %v2291, %v2289
  %v2293 = vrsqrt.pop %v2279
  %v2294 = vmul.f32 %v2279, %v2293
  %vm2295 = vcmp.eq.f32.partialorder %v2279, inf
  %v2296 = vsel %vm2295, %v2279, %v2294
  %vm2297 = vcmp.eq.f32.partialorder %v2279, 0.0
  %v2298 = vand.u32 %v2279, 2147483648
  %v2299 = vsel %vm2297, %v2298, %v2296
  %v2300 = vrsqrt.pop %v2282
  %v2301 = vmul.f32 %v2282, %v2300
  %vm2302 = vcmp.eq.f32.partialorder %v2282, inf
  %v2303 = vsel %vm2302, %v2282, %v2301
  %vm2304 = vcmp.eq.f32.partialorder %v2282, 0.0
  %v2305 = vand.u32 %v2282, 2147483648
  %v2306 = vsel %vm2304, %v2305, %v2303
  %v2307 = vrsqrt.pop %v2285
  %v2308 = vmul.f32 %v2285, %v2307
  %vm2309 = vcmp.eq.f32.partialorder %v2285, inf
  %v2310 = vsel %vm2309, %v2285, %v2308
  %vm2311 = vcmp.eq.f32.partialorder %v2285, 0.0
  %v2312 = vand.u32 %v2285, 2147483648
  %v2313 = vsel %vm2311, %v2312, %v2310
  %2318 = vrot.lane.b32.xlu0 %v2232, 106
  %v2319 = vpop.permute.xlu0 %2318
  %2320 = vrot.lane.b32.xlu0 %v2235, 106
  %v2321 = vpop.permute.xlu0 %2320
  %2322 = vrot.lane.b32.xlu0 %v2240, 106
  %v2323 = vpop.permute.xlu0 %2322
  %2324 = vrot.lane.b32.xlu0 %v2243, 106
  %v2325 = vpop.permute.xlu0 %2324
  %v2330 = vadd.f32 %v2248, %v2319
  %v2331 = vadd.f32 %v2251, %v2321
  %v2332 = vadd.f32 %v2256, %v2323
  %v2333 = vadd.f32 %v2259, %v2325
  %s2334 = scalar_lea.vmem %s6, 2
  %v2335 = vld [vmem:[%s2334] sm:$0x1]
  %v2337 = vlaneseq
  %v2338 = vshrl.u32 %v2337, 7
  %v2339 = vsub.s32 0, %v2338
  %v2340 = vrot.slane %v2335, %v2339
  %v2342 = vmul.f32 %v2276, %v2340
  %v2343 = vmul.f32 %v2279, %v2340
  %v2344 = vmul.f32 %v2282, %v2340
  %v2345 = vmul.f32 %v2285, %v2340
  %2350 = vrot.lane.b32.xlu0 %v2342, 14
  %v2351 = vpop.permute.xlu0 %2350
  %2352 = vrot.lane.b32.xlu0 %v2343, 14
  %v2353 = vpop.permute.xlu0 %2352
  %2354 = vrot.lane.b32.xlu0 %v2344, 14
  %v2355 = vpop.permute.xlu0 %2354
  %2356 = vrot.lane.b32.xlu0 %v2345, 14
  %v2357 = vpop.permute.xlu0 %2356
  %v2362 = vadd.f32 %v2330, %v2351
  %v2363 = vadd.f32 %v2331, %v2353
  %v2364 = vadd.f32 %v2332, %v2355
  %v2365 = vadd.f32 %v2333, %v2357
  %2366 = vrot.lane.b32.xlu0 %v179, 98
  %v2367 = vpop.permute.xlu0 %2366
  %2368 = vrot.lane.b32.xlu0 %v184, 98
  %v2369 = vpop.permute.xlu0 %2368
  %2370 = vrot.lane.b32.xlu0 %v189, 98
  %v2371 = vpop.permute.xlu0 %2370
  %2372 = vrot.lane.b32.xlu0 %v194, 98
  %v2373 = vpop.permute.xlu0 %2372
  %v2378 = vadd.f32 %v2362, %v2367
  %v2379 = vadd.f32 %v2363, %v2369
  %v2380 = vadd.f32 %v2364, %v2371
  %v2381 = vadd.f32 %v2365, %v2373
  %v2382 = vxor.u32 %v2378, 2147483648
  %v2383 = vxor.u32 %v2379, 2147483648
  %v2384 = vxor.u32 %v2380, 2147483648
  %v2385 = vxor.u32 %v2381, 2147483648
  %v2386 = vmul.f32 %v2382, 1.442695
  %v2387 = vpow.pop %v2386
  %v2388 = vmul.f32 %v2383, 1.442695
  %v2389 = vpow.pop %v2388
  %v2390 = vmul.f32 %v2384, 1.442695
  %v2391 = vpow.pop %v2390
  %v2392 = vmul.f32 %v2385, 1.442695
  %v2393 = vpow.pop %v2392
  %v2394 = vadd.f32 %v2387, 1.0
  %v2395 = vadd.f32 %v2389, 1.0
  %v2396 = vadd.f32 %v2391, 1.0
  %v2397 = vadd.f32 %v2393, 1.0
  %v2398 = vrcp.pop %v2394
  %v2399 = vmul.f32 1.0, %v2398
  %v2400 = vrcp.pop %v2395
  %v2401 = vmul.f32 1.0, %v2400
  %v2402 = vrcp.pop %v2396
  %v2403 = vmul.f32 1.0, %v2402
  %v2404 = vrcp.pop %v2397
  %v2405 = vmul.f32 1.0, %v2404
  %v2406 = vmul.f32 %v2378, %v2399
  %v2407 = vmul.f32 %v2379, %v2401
  %v2408 = vmul.f32 %v2380, %v2403
  %v2409 = vmul.f32 %v2381, %v2405
  %s2410 = scalar_lea.vmem %s9, 48
  %v2411 = vld [vmem:[%s2410] sm:$0xff]
  %v2412 = vld [vmem:[%s2410 + $0x8] sm:$0xff]
  %v2413 = vld [vmem:[%s2410 + $0x10] sm:$0x3f]
  %s2414 = scalar_lea.vmem %s10, 2
  %v2415 = vld [vmem:[%s2414] sm:$0x1]
  %v2417 = vlaneseq
  %v2418 = vshrl.u32 %v2417, 7
  %v2419 = vsub.s32 0, %v2418
  %v2420 = vrot.slane %v2415, %v2419
  %2426 = vrot.lane.b32.xlu0 %v2406, 114
  %v2427 = vpop.permute.xlu0 %2426
  %2428 = vrot.lane.b32.xlu0 %v2407, 114
  %v2429 = vpop.permute.xlu0 %2428
  %2430 = vrot.lane.b32.xlu0 %v2408, 114
  %v2431 = vpop.permute.xlu0 %2430
  %2432 = vrot.lane.b32.xlu0 %v2409, 114
  %v2433 = vpop.permute.xlu0 %2432
  %v2434 = vsel %vm567, %v2427, 0
  %v2436 = vsel %vm567, %v2429, 0
  %v2438 = vsel %vm567, %v2431, 0
  %v2440 = vsel %vm567, %v2433, 0
  %v2443 = vsel %vm206, %v2413, 0
  %2445 = vmatprep.subr.mxu0 0.0
  %2446 = vmatpush1.msra.mxu0 0.0
  %2447 = vmatprep.subr.mxu0 0.0
  %2448 = vmatpush1.msra.mxu0 0.0
  %2449 = vmatprep.subr.mxu0 0.0
  %2450 = vmatpush1.msra.mxu0 0.0
  %2451 = vmatprep.subr.mxu0 0.0
  %2452 = vmatpush1.msra.mxu0 0.0
  %2453 = vmatprep.subr.mxu0 0.0
  %2454 = vmatpush1.msra.mxu0 0.0
  %2455 = vmatprep.subr.mxu0 0.0
  %2456 = vmatpush1.msra.mxu0 0.0
  %2457 = vmatprep.subr.mxu0 0.0
  %2458 = vmatpush1.msra.mxu0 0.0
  %2459 = vmatprep.subr.mxu0 0.0
  %2460 = vmatpush1.msra.mxu0 0.0
  %2461 = vmatprep.subr.mxu0 0.0
  %2462 = vmatpush1.msra.mxu0 0.0
  %2463 = vmatprep.subr.mxu0 0.0
  %2464 = vmatpush1.msra.mxu0 0.0
  %2465 = vmatprep.subr.mxu0 0.0
  %2466 = vmatpush1.msra.mxu0 0.0
  %2467 = vmatprep.subr.mxu0 0.0
  %2468 = vmatpush1.msra.mxu0 0.0
  %2469 = vmatprep.subr.mxu0 0.0
  %2470 = vmatpush1.msra.mxu0 0.0
  %2471 = vmatprep.subr.mxu0 0.0
  %2472 = vmatpush1.msra.mxu0 %v2443
  %2473 = vmatprep.subr.mxu0 0.0
  %2474 = vmatpush1.msra.mxu0 %v2412
  %2475 = vmatprep.subr.mxu0 0.0
  %2476 = vmatpush1.msra.mxu0 %v2411
  %2477 = vmatprep.subr.mxu0 0.0
  %2478 = vmatpush2.msra.mxu0 0.0
  %2479 = vmatprep.subr.mxu0 0.0
  %2480 = vmatpush2.msra.mxu0 0.0
  %2481 = vmatprep.subr.mxu0 0.0
  %2482 = vmatpush2.msra.mxu0 0.0
  %2483 = vmatprep.subr.mxu0 0.0
  %2484 = vmatpush2.msra.mxu0 0.0
  %2485 = vmatprep.subr.mxu0 0.0
  %2486 = vmatpush2.msra.mxu0 0.0
  %2487 = vmatprep.subr.mxu0 0.0
  %2488 = vmatpush2.msra.mxu0 0.0
  %2489 = vmatprep.subr.mxu0 0.0
  %2490 = vmatpush2.msra.mxu0 0.0
  %2491 = vmatprep.subr.mxu0 0.0
  %2492 = vmatpush2.msra.mxu0 0.0
  %2493 = vmatprep.subr.mxu0 0.0
  %2494 = vmatpush2.msra.mxu0 0.0
  %2495 = vmatprep.subr.mxu0 0.0
  %2496 = vmatpush2.msra.mxu0 0.0
  %2497 = vmatprep.subr.mxu0 0.0
  %2498 = vmatpush2.msra.mxu0 0.0
  %2499 = vmatprep.subr.mxu0 0.0
  %2500 = vmatpush2.msra.mxu0 0.0
  %2501 = vmatprep.subr.mxu0 0.0
  %2502 = vmatpush2.msra.mxu0 0.0
  %2503 = vmatprep.subr.mxu0 0.0
  %2504 = vmatpush2.msra.mxu0 0.0
  %2505 = vmatprep.subr.mxu0 0.0
  %2506 = vmatpush2.msra.mxu0 0.0
  %2507 = vmatprep.subr.mxu0 0.0
  %2508 = vmatpush2.msra.mxu0 0.0
  %2509 = vmatprep.mubr.f32.mxu0 0.0
  %2510 = vmatmul.mubr.f32.gmra.mxu0 %v2434
  %v2511 = vpop.f32.mrf.mxu0
  %v2512 = vadd.f32 %v2420, %v2511
  %v2513 = vpop.f32.mrf.mxu0
  %2514 = vmatprep.mubr.f32.mxu0 0.0
  %2515 = vmatmul.mubr.f32.gmra.mxu0 %v2436
  %v2516 = vpop.f32.mrf.mxu0
  %v2517 = vadd.f32 %v2420, %v2516
  %v2518 = vpop.f32.mrf.mxu0
  %2519 = vmatprep.mubr.f32.mxu0 0.0
  %2520 = vmatmul.mubr.f32.gmra.mxu0 %v2438
  %v2521 = vpop.f32.mrf.mxu0
  %v2522 = vadd.f32 %v2420, %v2521
  %v2523 = vpop.f32.mrf.mxu0
  %2524 = vmatprep.mubr.f32.mxu0 0.0
  %2525 = vmatmul.mubr.f32.gmra.mxu0 %v2440
  %v2526 = vpop.f32.mrf.mxu0
  %v2527 = vadd.f32 %v2420, %v2526
  %v2528 = vpop.f32.mrf.mxu0
  %2529 = vdwg.mxu0
  %v2530 = vxor.u32 %v2512, 2147483648
  %v2531 = vxor.u32 %v2517, 2147483648
  %v2532 = vxor.u32 %v2522, 2147483648
  %v2533 = vxor.u32 %v2527, 2147483648
  %v2534 = vmul.f32 %v2530, 1.442695
  %v2535 = vpow.pop %v2534
  %v2536 = vmul.f32 %v2531, 1.442695
  %v2537 = vpow.pop %v2536
  %v2538 = vmul.f32 %v2532, 1.442695
  %v2539 = vpow.pop %v2538
  %v2540 = vmul.f32 %v2533, 1.442695
  %v2541 = vpow.pop %v2540
  %v2542 = vadd.f32 %v2535, 1.0
  %v2543 = vadd.f32 %v2537, 1.0
  %v2544 = vadd.f32 %v2539, 1.0
  %v2545 = vadd.f32 %v2541, 1.0
  %v2546 = vrcp.pop %v2542
  %v2547 = vmul.f32 1.0, %v2546
  %v2548 = vrcp.pop %v2543
  %v2549 = vmul.f32 1.0, %v2548
  %v2550 = vrcp.pop %v2544
  %v2551 = vmul.f32 1.0, %v2550
  %v2552 = vrcp.pop %v2545
  %v2553 = vmul.f32 1.0, %v2552
  %v2554 = vmul.f32 %v2512, %v2547
  %v2555 = vmul.f32 %v2517, %v2549
  %v2556 = vmul.f32 %v2522, %v2551
  %v2557 = vmul.f32 %v2527, %v2553
  %s2558 = scalar_lea.vmem %s11, 48
  %v2559 = vld [vmem:[%s2558] sm:$0xff]
  %v2560 = vld [vmem:[%s2558 + $0x8] sm:$0xff]
  %v2561 = vld [vmem:[%s2558 + $0x10] sm:$0x3f]
  %s2562 = scalar_lea.vmem %s12, 2
  %v2563 = vld [vmem:[%s2562] sm:$0x1]
  %v2565 = vlaneseq
  %v2566 = vshrl.u32 %v2565, 7
  %v2567 = vsub.s32 0, %v2566
  %v2568 = vrot.slane %v2563, %v2567
  %v2571 = vsel %vm567, %v2554, 0
  %v2574 = vsel %vm567, %v2555, 0
  %v2577 = vsel %vm567, %v2556, 0
  %v2580 = vsel %vm567, %v2557, 0
  %v2583 = vsel %vm206, %v2561, 0
  %2585 = vmatprep.subr.mxu0 0.0
  %2586 = vmatpush1.msra.mxu0 0.0
  %2587 = vmatprep.subr.mxu0 0.0
  %2588 = vmatpush1.msra.mxu0 0.0
  %2589 = vmatprep.subr.mxu0 0.0
  %2590 = vmatpush1.msra.mxu0 0.0
  %2591 = vmatprep.subr.mxu0 0.0
  %2592 = vmatpush1.msra.mxu0 0.0
  %2593 = vmatprep.subr.mxu0 0.0
  %2594 = vmatpush1.msra.mxu0 0.0
  %2595 = vmatprep.subr.mxu0 0.0
  %2596 = vmatpush1.msra.mxu0 0.0
  %2597 = vmatprep.subr.mxu0 0.0
  %2598 = vmatpush1.msra.mxu0 0.0
  %2599 = vmatprep.subr.mxu0 0.0
  %2600 = vmatpush1.msra.mxu0 0.0
  %2601 = vmatprep.subr.mxu0 0.0
  %2602 = vmatpush1.msra.mxu0 0.0
  %2603 = vmatprep.subr.mxu0 0.0
  %2604 = vmatpush1.msra.mxu0 0.0
  %2605 = vmatprep.subr.mxu0 0.0
  %2606 = vmatpush1.msra.mxu0 0.0
  %2607 = vmatprep.subr.mxu0 0.0
  %2608 = vmatpush1.msra.mxu0 0.0
  %2609 = vmatprep.subr.mxu0 0.0
  %2610 = vmatpush1.msra.mxu0 0.0
  %2611 = vmatprep.subr.mxu0 0.0
  %2612 = vmatpush1.msra.mxu0 %v2583
  %2613 = vmatprep.subr.mxu0 0.0
  %2614 = vmatpush1.msra.mxu0 %v2560
  %2615 = vmatprep.subr.mxu0 0.0
  %2616 = vmatpush1.msra.mxu0 %v2559
  %2617 = vmatprep.subr.mxu0 0.0
  %2618 = vmatpush2.msra.mxu0 0.0
  %2619 = vmatprep.subr.mxu0 0.0
  %2620 = vmatpush2.msra.mxu0 0.0
  %2621 = vmatprep.subr.mxu0 0.0
  %2622 = vmatpush2.msra.mxu0 0.0
  %2623 = vmatprep.subr.mxu0 0.0
  %2624 = vmatpush2.msra.mxu0 0.0
  %2625 = vmatprep.subr.mxu0 0.0
  %2626 = vmatpush2.msra.mxu0 0.0
  %2627 = vmatprep.subr.mxu0 0.0
  %2628 = vmatpush2.msra.mxu0 0.0
  %2629 = vmatprep.subr.mxu0 0.0
  %2630 = vmatpush2.msra.mxu0 0.0
  %2631 = vmatprep.subr.mxu0 0.0
  %2632 = vmatpush2.msra.mxu0 0.0
  %2633 = vmatprep.subr.mxu0 0.0
  %2634 = vmatpush2.msra.mxu0 0.0
  %2635 = vmatprep.subr.mxu0 0.0
  %2636 = vmatpush2.msra.mxu0 0.0
  %2637 = vmatprep.subr.mxu0 0.0
  %2638 = vmatpush2.msra.mxu0 0.0
  %2639 = vmatprep.subr.mxu0 0.0
  %2640 = vmatpush2.msra.mxu0 0.0
  %2641 = vmatprep.subr.mxu0 0.0
  %2642 = vmatpush2.msra.mxu0 0.0
  %2643 = vmatprep.subr.mxu0 0.0
  %2644 = vmatpush2.msra.mxu0 0.0
  %2645 = vmatprep.subr.mxu0 0.0
  %2646 = vmatpush2.msra.mxu0 0.0
  %2647 = vmatprep.subr.mxu0 0.0
  %2648 = vmatpush2.msra.mxu0 0.0
  %2649 = vmatprep.mubr.f32.mxu0 0.0
  %2650 = vmatmul.mubr.f32.gmra.mxu0 %v2571
  %v2651 = vpop.f32.mrf.mxu0
  %v2652 = vadd.f32 %v2568, %v2651
  %v2653 = vpop.f32.mrf.mxu0
  %2654 = vmatprep.mubr.f32.mxu0 0.0
  %2655 = vmatmul.mubr.f32.gmra.mxu0 %v2574
  %v2656 = vpop.f32.mrf.mxu0
  %v2657 = vadd.f32 %v2568, %v2656
  %v2658 = vpop.f32.mrf.mxu0
  %2659 = vmatprep.mubr.f32.mxu0 0.0
  %2660 = vmatmul.mubr.f32.gmra.mxu0 %v2577
  %v2661 = vpop.f32.mrf.mxu0
  %v2662 = vadd.f32 %v2568, %v2661
  %v2663 = vpop.f32.mrf.mxu0
  %2664 = vmatprep.mubr.f32.mxu0 0.0
  %2665 = vmatmul.mubr.f32.gmra.mxu0 %v2580
  %v2666 = vpop.f32.mrf.mxu0
  %v2667 = vadd.f32 %v2568, %v2666
  %v2668 = vpop.f32.mrf.mxu0
  %2669 = vdwg.mxu0
  %v2670 = vxor.u32 %v2652, 2147483648
  %v2671 = vxor.u32 %v2657, 2147483648
  %v2672 = vxor.u32 %v2662, 2147483648
  %v2673 = vxor.u32 %v2667, 2147483648
  %v2674 = vmul.f32 %v2670, 1.442695
  %v2675 = vpow.pop %v2674
  %v2676 = vmul.f32 %v2671, 1.442695
  %v2677 = vpow.pop %v2676
  %v2678 = vmul.f32 %v2672, 1.442695
  %v2679 = vpow.pop %v2678
  %v2680 = vmul.f32 %v2673, 1.442695
  %v2681 = vpow.pop %v2680
  %v2682 = vadd.f32 %v2675, 1.0
  %v2683 = vadd.f32 %v2677, 1.0
  %v2684 = vadd.f32 %v2679, 1.0
  %v2685 = vadd.f32 %v2681, 1.0
  %v2686 = vrcp.pop %v2682
  %v2687 = vmul.f32 1.0, %v2686
  %v2688 = vrcp.pop %v2683
  %v2689 = vmul.f32 1.0, %v2688
  %v2690 = vrcp.pop %v2684
  %v2691 = vmul.f32 1.0, %v2690
  %v2692 = vrcp.pop %v2685
  %v2693 = vmul.f32 1.0, %v2692
  %v2694 = vadd.f32 %v2292, 1.0
  %v2695 = vadd.f32 %v2299, 1.0
  %v2696 = vadd.f32 %v2306, 1.0
  %v2697 = vadd.f32 %v2313, 1.0
  %v2698 = vrcp.pop %v2694
  %v2699 = vrcp.pop %v2695
  %v2700 = vrcp.pop %v2696
  %v2701 = vrcp.pop %v2697
  %v2702 = vmul.f32 %v2554, %v82
  %v2703 = vmul.f32 %v2555, %v82
  %v2704 = vmul.f32 %v2556, %v82
  %v2705 = vmul.f32 %v2557, %v82
  %2707 = vset.pattern.permute.xlu0 0
  %2708 = vperm.xlu0 %2707, %v2687
  %v2709 = vpop.permute.xlu0 %2708
  %2712 = vset.pattern.permute.xlu0 0
  %2713 = vperm.xlu0 %2712, %v2689
  %v2714 = vpop.permute.xlu0 %2713
  %2717 = vset.pattern.permute.xlu0 0
  %2718 = vperm.xlu0 %2717, %v2691
  %v2719 = vpop.permute.xlu0 %2718
  %2722 = vset.pattern.permute.xlu0 0
  %2723 = vperm.xlu0 %2722, %v2693
  %v2724 = vpop.permute.xlu0 %2723
  %v2726 = vmul.f32 %v2709, %v2702
  %v2727 = vmul.f32 %v2714, %v2703
  %v2728 = vmul.f32 %v2719, %v2704
  %v2729 = vmul.f32 %v2724, %v2705
  %v2730 = vmul.f32 %v2698, %v2652
  %v2731 = vmul.f32 %v2699, %v2657
  %v2732 = vmul.f32 %v2700, %v2662
  %v2733 = vmul.f32 %v2701, %v2667
  %2735 = vset.pattern.permute.xlu0 1
  %2736 = vperm.xlu0 %2735, %v2730
  %v2737 = vpop.permute.xlu0 %2736
  %2740 = vset.pattern.permute.xlu0 1
  %2741 = vperm.xlu0 %2740, %v2731
  %v2742 = vpop.permute.xlu0 %2741
  %2745 = vset.pattern.permute.xlu0 1
  %2746 = vperm.xlu0 %2745, %v2732
  %v2747 = vpop.permute.xlu0 %2746
  %2750 = vset.pattern.permute.xlu0 1
  %2751 = vperm.xlu0 %2750, %v2733
  %v2752 = vpop.permute.xlu0 %2751
  %v2754 = vmul.f32 %v2266, %v2737
  %v2755 = vmul.f32 %v2267, %v2742
  %v2756 = vmul.f32 %v2268, %v2747
  %v2757 = vmul.f32 %v2269, %v2752
  %v2758 = vadd.f32 %v2726, %v2754
  %v2759 = vadd.f32 %v2727, %v2755
  %v2760 = vadd.f32 %v2728, %v2756
  %v2761 = vadd.f32 %v2729, %v2757
  %v2762 = vpack.c.bf16 %v2759, %v2758
  %v2763 = vpack.c.bf16 %v2761, %v2760
  %2764 = vmatprep.subr.bf16.mxu0 0
  %2765 = vmatpush1.bf16.msra.mxu0 0
  %2766 = vmatprep.subr.bf16.mxu0 0
  %2767 = vmatpush1.bf16.msra.mxu0 0
  %2768 = vmatprep.subr.bf16.mxu0 0
  %2769 = vmatpush1.bf16.msra.mxu0 0
  %2770 = vmatprep.subr.bf16.mxu0 0
  %2771 = vmatpush1.bf16.msra.mxu0 0
  %2772 = vmatprep.subr.bf16.mxu0 0
  %2773 = vmatpush1.bf16.msra.mxu0 0
  %2774 = vmatprep.subr.bf16.mxu0 0
  %2775 = vmatpush1.bf16.msra.mxu0 0
  %2776 = vmatprep.subr.bf16.mxu0 0
  %2777 = vmatpush1.bf16.msra.mxu0 %v2763
  %2778 = vmatprep.subr.bf16.mxu0 0
  %2779 = vmatpush1.bf16.msra.mxu0 %v2762
  %2780 = vmatprep.subr.bf16.mxu0 0
  %2781 = vmatpush2.bf16.msra.mxu0 0
  %2782 = vmatprep.subr.bf16.mxu0 0
  %2783 = vmatpush2.bf16.msra.mxu0 0
  %2784 = vmatprep.subr.bf16.mxu0 0
  %2785 = vmatpush2.bf16.msra.mxu0 0
  %2786 = vmatprep.subr.bf16.mxu0 0
  %2787 = vmatpush2.bf16.msra.mxu0 0
  %2788 = vmatprep.subr.bf16.mxu0 0
  %2789 = vmatpush2.bf16.msra.mxu0 0
  %2790 = vmatprep.subr.bf16.mxu0 0
  %2791 = vmatpush2.bf16.msra.mxu0 0
  %2792 = vmatprep.subr.bf16.mxu0 0
  %2793 = vmatpush2.bf16.msra.mxu0 0
  %2794 = vmatprep.subr.bf16.mxu0 0
  %2795 = vmatpush2.bf16.msra.mxu0 0
  %2796 = vmatprep.mubr.bf16.mxu0 0
  %2797 = vmatmul.mubr.bf16.gmra.mxu0 %v903
  %v2798 = vpop.f32.mrf.mxu0
  %v2799 = vadd.f32 0.0, %v2798
  %v2800 = vpop.f32.mrf.mxu0
  %v2801 = vpop.f32.mrf.mxu0
  %v2802 = vadd.f32 0.0, %v2801
  %v2803 = vpop.f32.mrf.mxu0
  %2804 = vdwg.mxu0
  %2807 = vrot.lane.b32.xlu0 %v2799, 14
  %v2808 = vpop.permute.xlu0 %2807
  %2809 = vrot.lane.b32.xlu0 %v2802, 14
  %v2810 = vpop.permute.xlu0 %2809
  %v2813 = vsel %vm199, %v2097, %v2808
  %v2814 = vsel %vm199, %v2098, %v2810
  %s2815 = scalar_lea.vmem %s13, 64
  %v2816 = vld [vmem:[%s2815] sm:$0xff]
  %v2817 = vld [vmem:[%s2815 + $0x8] sm:$0xff]
  %v2818 = vld [vmem:[%s2815 + $0x10] sm:$0xff]
  %v2819 = vld [vmem:[%s2815 + $0x18] sm:$0xf]
  %s2820 = scalar_lea.vmem %s14, 2
  %v2821 = vld [vmem:[%s2820] sm:$0x1]
  %v2823 = vlaneseq
  %v2824 = vshrl.u32 %v2823, 7
  %v2825 = vsub.s32 0, %v2824
  %v2826 = vrot.slane %v2821, %v2825
  %v2829 = vsel %vm967, %v2813, 0
  %v2832 = vsel %vm967, %v2814, 0
  %v2835 = vsel %vm108, %v2819, 0
  %2837 = vmatprep.subr.mxu0 0.0
  %2838 = vmatpush1.msra.mxu0 0.0
  %2839 = vmatprep.subr.mxu0 0.0
  %2840 = vmatpush1.msra.mxu0 0.0
  %2841 = vmatprep.subr.mxu0 0.0
  %2842 = vmatpush1.msra.mxu0 0.0
  %2843 = vmatprep.subr.mxu0 0.0
  %2844 = vmatpush1.msra.mxu0 0.0
  %2845 = vmatprep.subr.mxu0 0.0
  %2846 = vmatpush1.msra.mxu0 0.0
  %2847 = vmatprep.subr.mxu0 0.0
  %2848 = vmatpush1.msra.mxu0 0.0
  %2849 = vmatprep.subr.mxu0 0.0
  %2850 = vmatpush1.msra.mxu0 0.0
  %2851 = vmatprep.subr.mxu0 0.0
  %2852 = vmatpush1.msra.mxu0 0.0
  %2853 = vmatprep.subr.mxu0 0.0
  %2854 = vmatpush1.msra.mxu0 0.0
  %2855 = vmatprep.subr.mxu0 0.0
  %2856 = vmatpush1.msra.mxu0 0.0
  %2857 = vmatprep.subr.mxu0 0.0
  %2858 = vmatpush1.msra.mxu0 0.0
  %2859 = vmatprep.subr.mxu0 0.0
  %2860 = vmatpush1.msra.mxu0 0.0
  %2861 = vmatprep.subr.mxu0 0.0
  %2862 = vmatpush1.msra.mxu0 %v2835
  %2863 = vmatprep.subr.mxu0 0.0
  %2864 = vmatpush1.msra.mxu0 %v2818
  %2865 = vmatprep.subr.mxu0 0.0
  %2866 = vmatpush1.msra.mxu0 %v2817
  %2867 = vmatprep.subr.mxu0 0.0
  %2868 = vmatpush1.msra.mxu0 %v2816
  %2869 = vmatprep.subr.mxu0 0.0
  %2870 = vmatpush2.msra.mxu0 0.0
  %2871 = vmatprep.subr.mxu0 0.0
  %2872 = vmatpush2.msra.mxu0 0.0
  %2873 = vmatprep.subr.mxu0 0.0
  %2874 = vmatpush2.msra.mxu0 0.0
  %2875 = vmatprep.subr.mxu0 0.0
  %2876 = vmatpush2.msra.mxu0 0.0
  %2877 = vmatprep.subr.mxu0 0.0
  %2878 = vmatpush2.msra.mxu0 0.0
  %2879 = vmatprep.subr.mxu0 0.0
  %2880 = vmatpush2.msra.mxu0 0.0
  %2881 = vmatprep.subr.mxu0 0.0
  %2882 = vmatpush2.msra.mxu0 0.0
  %2883 = vmatprep.subr.mxu0 0.0
  %2884 = vmatpush2.msra.mxu0 0.0
  %2885 = vmatprep.subr.mxu0 0.0
  %2886 = vmatpush2.msra.mxu0 0.0
  %2887 = vmatprep.subr.mxu0 0.0
  %2888 = vmatpush2.msra.mxu0 0.0
  %2889 = vmatprep.subr.mxu0 0.0
  %2890 = vmatpush2.msra.mxu0 0.0
  %2891 = vmatprep.subr.mxu0 0.0
  %2892 = vmatpush2.msra.mxu0 0.0
  %2893 = vmatprep.subr.mxu0 0.0
  %2894 = vmatpush2.msra.mxu0 0.0
  %2895 = vmatprep.subr.mxu0 0.0
  %2896 = vmatpush2.msra.mxu0 0.0
  %2897 = vmatprep.subr.mxu0 0.0
  %2898 = vmatpush2.msra.mxu0 0.0
  %2899 = vmatprep.subr.mxu0 0.0
  %2900 = vmatpush2.msra.mxu0 0.0
  %2901 = vmatprep.mubr.f32.mxu0 0.0
  %2902 = vmatmul.mubr.f32.gmra.mxu0 %v2829
  %v2903 = vpop.f32.mrf.mxu0
  %v2904 = vadd.f32 %v2826, %v2903
  %v2905 = vpop.f32.mrf.mxu0
  %2906 = vmatprep.mubr.f32.mxu0 0.0
  %2907 = vmatmul.mubr.f32.gmra.mxu0 %v2832
  %v2908 = vpop.f32.mrf.mxu0
  %v2909 = vadd.f32 %v2826, %v2908
  %v2910 = vpop.f32.mrf.mxu0
  %2911 = vdwg.mxu0
  %v2912 = vxor.u32 %v2904, 2147483648
  %v2913 = vxor.u32 %v2909, 2147483648
  %v2914 = vmul.f32 %v2912, 1.442695
  %v2915 = vpow.pop %v2914
  %v2916 = vmul.f32 %v2913, 1.442695
  %v2917 = vpow.pop %v2916
  %v2918 = vadd.f32 %v2915, 1.0
  %v2919 = vadd.f32 %v2917, 1.0
  %v2920 = vrcp.pop %v2918
  %v2921 = vmul.f32 1.0, %v2920
  %v2922 = vrcp.pop %v2919
  %v2923 = vmul.f32 1.0, %v2922
  %v2924 = vmul.f32 %v2904, %v2921
  %v2925 = vmul.f32 %v2909, %v2923
  %s2926 = scalar_lea.vmem %s15, 32
  %v2927 = vld [vmem:[%s2926] sm:$0xff]
  %v2928 = vld [vmem:[%s2926 + $0x8] sm:$0x7]
  %v2930 = vsel %vm1068, %v2924, 0
  %v2933 = vsel %vm1068, %v2925, 0
  %v2936 = vsel %vm1075, %v2928, 0
  %2938 = vmatprep.subr.mxu0 0.0
  %2939 = vmatpush1.msra.mxu0 0.0
  %2940 = vmatprep.subr.mxu0 0.0
  %2941 = vmatpush1.msra.mxu0 0.0
  %2942 = vmatprep.subr.mxu0 0.0
  %2943 = vmatpush1.msra.mxu0 0.0
  %2944 = vmatprep.subr.mxu0 0.0
  %2945 = vmatpush1.msra.mxu0 0.0
  %2946 = vmatprep.subr.mxu0 0.0
  %2947 = vmatpush1.msra.mxu0 0.0
  %2948 = vmatprep.subr.mxu0 0.0
  %2949 = vmatpush1.msra.mxu0 0.0
  %2950 = vmatprep.subr.mxu0 0.0
  %2951 = vmatpush1.msra.mxu0 0.0
  %2952 = vmatprep.subr.mxu0 0.0
  %2953 = vmatpush1.msra.mxu0 0.0
  %2954 = vmatprep.subr.mxu0 0.0
  %2955 = vmatpush1.msra.mxu0 0.0
  %2956 = vmatprep.subr.mxu0 0.0
  %2957 = vmatpush1.msra.mxu0 0.0
  %2958 = vmatprep.subr.mxu0 0.0
  %2959 = vmatpush1.msra.mxu0 0.0
  %2960 = vmatprep.subr.mxu0 0.0
  %2961 = vmatpush1.msra.mxu0 0.0
  %2962 = vmatprep.subr.mxu0 0.0
  %2963 = vmatpush1.msra.mxu0 0.0
  %2964 = vmatprep.subr.mxu0 0.0
  %2965 = vmatpush1.msra.mxu0 0.0
  %2966 = vmatprep.subr.mxu0 0.0
  %2967 = vmatpush1.msra.mxu0 %v2936
  %2968 = vmatprep.subr.mxu0 0.0
  %2969 = vmatpush1.msra.mxu0 %v2927
  %2970 = vmatprep.subr.mxu0 0.0
  %2971 = vmatpush2.msra.mxu0 0.0
  %2972 = vmatprep.subr.mxu0 0.0
  %2973 = vmatpush2.msra.mxu0 0.0
  %2974 = vmatprep.subr.mxu0 0.0
  %2975 = vmatpush2.msra.mxu0 0.0
  %2976 = vmatprep.subr.mxu0 0.0
  %2977 = vmatpush2.msra.mxu0 0.0
  %2978 = vmatprep.subr.mxu0 0.0
  %2979 = vmatpush2.msra.mxu0 0.0
  %2980 = vmatprep.subr.mxu0 0.0
  %2981 = vmatpush2.msra.mxu0 0.0
  %2982 = vmatprep.subr.mxu0 0.0
  %2983 = vmatpush2.msra.mxu0 0.0
  %2984 = vmatprep.subr.mxu0 0.0
  %2985 = vmatpush2.msra.mxu0 0.0
  %2986 = vmatprep.subr.mxu0 0.0
  %2987 = vmatpush2.msra.mxu0 0.0
  %2988 = vmatprep.subr.mxu0 0.0
  %2989 = vmatpush2.msra.mxu0 0.0
  %2990 = vmatprep.subr.mxu0 0.0
  %2991 = vmatpush2.msra.mxu0 0.0
  %2992 = vmatprep.subr.mxu0 0.0
  %2993 = vmatpush2.msra.mxu0 0.0
  %2994 = vmatprep.subr.mxu0 0.0
  %2995 = vmatpush2.msra.mxu0 0.0
  %2996 = vmatprep.subr.mxu0 0.0
  %2997 = vmatpush2.msra.mxu0 0.0
  %2998 = vmatprep.subr.mxu0 0.0
  %2999 = vmatpush2.msra.mxu0 0.0
  %3000 = vmatprep.subr.mxu0 0.0
  %3001 = vmatpush2.msra.mxu0 0.0
  %3002 = vmatprep.mubr.f32.mxu0 0.0
  %3003 = vmatmul.mubr.f32.gmra.mxu0 %v2930
  %v3004 = vpop.f32.mrf.mxu0
  %v3005 = vadd.f32 0.0, %v3004
  %v3006 = vpop.f32.mrf.mxu0
  %3007 = vmatprep.mubr.f32.mxu0 0.0
  %3008 = vmatmul.mubr.f32.gmra.mxu0 %v2933
  %v3009 = vpop.f32.mrf.mxu0
  %v3010 = vadd.f32 0.0, %v3009
  %v3011 = vpop.f32.mrf.mxu0
  %3012 = vdwg.mxu0
  %v3013 = vadd.f32 %v2097, %v3005
  %v3014 = vadd.f32 %v2098, %v3010
  %s3015 = scalar_lea.vmem %s16, 2
  %v3016 = vld [vmem:[%s3015] sm:$0x1]
  %v3018 = vlaneseq
  %v3019 = vshrl.u32 %v3018, 7
  %v3020 = vsub.s32 0, %v3019
  %v3021 = vrot.slane %v3016, %v3020
  %v3023 = vadd.f32 %v3013, %v3021
  %v3024 = vadd.f32 %v3014, %v3021
  %v3025 = vmul.f32 %v2799, %v81
  %v3026 = vmul.f32 %v2802, %v81
  %v3027 = vadd.f32 %v3023, %v3025
  %v3028 = vadd.f32 %v3024, %v3026
  %s3029 = scalar_lea.vmem %s5, 48
  %v3030 = vld [vmem:[%s3029] sm:$0xff]
  %v3031 = vld [vmem:[%s3029 + $0x8] sm:$0x3f]
  %v3033 = vsel %vm199, %v3027, 0
  %v3036 = vsel %vm199, %v3028, 0
  %v3039 = vsel %vm206, %v3031, 0
  %3041 = vmatprep.subr.mxu0 0.0
  %3042 = vmatpush1.msra.mxu0 0.0
  %3043 = vmatprep.subr.mxu0 0.0
  %3044 = vmatpush1.msra.mxu0 0.0
  %3045 = vmatprep.subr.mxu0 0.0
  %3046 = vmatpush1.msra.mxu0 0.0
  %3047 = vmatprep.subr.mxu0 0.0
  %3048 = vmatpush1.msra.mxu0 0.0
  %3049 = vmatprep.subr.mxu0 0.0
  %3050 = vmatpush1.msra.mxu0 0.0
  %3051 = vmatprep.subr.mxu0 0.0
  %3052 = vmatpush1.msra.mxu0 0.0
  %3053 = vmatprep.subr.mxu0 0.0
  %3054 = vmatpush1.msra.mxu0 0.0
  %3055 = vmatprep.subr.mxu0 0.0
  %3056 = vmatpush1.msra.mxu0 0.0
  %3057 = vmatprep.subr.mxu0 0.0
  %3058 = vmatpush1.msra.mxu0 0.0
  %3059 = vmatprep.subr.mxu0 0.0
  %3060 = vmatpush1.msra.mxu0 0.0
  %3061 = vmatprep.subr.mxu0 0.0
  %3062 = vmatpush1.msra.mxu0 0.0
  %3063 = vmatprep.subr.mxu0 0.0
  %3064 = vmatpush1.msra.mxu0 0.0
  %3065 = vmatprep.subr.mxu0 0.0
  %3066 = vmatpush1.msra.mxu0 0.0
  %3067 = vmatprep.subr.mxu0 0.0
  %3068 = vmatpush1.msra.mxu0 0.0
  %3069 = vmatprep.subr.mxu0 0.0
  %3070 = vmatpush1.msra.mxu0 %v3039
  %3071 = vmatprep.subr.mxu0 0.0
  %3072 = vmatpush1.msra.mxu0 %v3030
  %3073 = vmatprep.subr.mxu0 0.0
  %3074 = vmatpush2.msra.mxu0 0.0
  %3075 = vmatprep.subr.mxu0 0.0
  %3076 = vmatpush2.msra.mxu0 0.0
  %3077 = vmatprep.subr.mxu0 0.0
  %3078 = vmatpush2.msra.mxu0 0.0
  %3079 = vmatprep.subr.mxu0 0.0
  %3080 = vmatpush2.msra.mxu0 0.0
  %3081 = vmatprep.subr.mxu0 0.0
  %3082 = vmatpush2.msra.mxu0 0.0
  %3083 = vmatprep.subr.mxu0 0.0
  %3084 = vmatpush2.msra.mxu0 0.0
  %3085 = vmatprep.subr.mxu0 0.0
  %3086 = vmatpush2.msra.mxu0 0.0
  %3087 = vmatprep.subr.mxu0 0.0
  %3088 = vmatpush2.msra.mxu0 0.0
  %3089 = vmatprep.subr.mxu0 0.0
  %3090 = vmatpush2.msra.mxu0 0.0
  %3091 = vmatprep.subr.mxu0 0.0
  %3092 = vmatpush2.msra.mxu0 0.0
  %3093 = vmatprep.subr.mxu0 0.0
  %3094 = vmatpush2.msra.mxu0 0.0
  %3095 = vmatprep.subr.mxu0 0.0
  %3096 = vmatpush2.msra.mxu0 0.0
  %3097 = vmatprep.subr.mxu0 0.0
  %3098 = vmatpush2.msra.mxu0 0.0
  %3099 = vmatprep.subr.mxu0 0.0
  %3100 = vmatpush2.msra.mxu0 0.0
  %3101 = vmatprep.subr.mxu0 0.0
  %3102 = vmatpush2.msra.mxu0 0.0
  %3103 = vmatprep.subr.mxu0 0.0
  %3104 = vmatpush2.msra.mxu0 0.0
  %3105 = vmatprep.mubr.f32.mxu0 0.0
  %3106 = vmatmul.mubr.f32.gmra.mxu0 %v3033
  %v3107 = vpop.f32.mrf.mxu0
  %v3108 = vadd.f32 0.0, %v3107
  %v3109 = vpop.f32.mrf.mxu0
  %3110 = vmatprep.mubr.f32.mxu0 0.0
  %3111 = vmatmul.mubr.f32.gmra.mxu0 %v3036
  %v3112 = vpop.f32.mrf.mxu0
  %v3113 = vadd.f32 0.0, %v3112
  %v3114 = vpop.f32.mrf.mxu0
  %3115 = vdwg.mxu0
  %3118 = vrot.lane.b32.xlu0 %v3108, 14
  %v3119 = vpop.permute.xlu0 %3118
  %3120 = vrot.lane.b32.xlu0 %v3113, 14
  %v3121 = vpop.permute.xlu0 %3120
  %v3124 = vsel %vm199, %v3027, %v3119
  %v3125 = vsel %vm199, %v3028, %v3121
  %v3126 = vpack.c.bf16 %v3125, %v3124
  %3127 = vmatprep.subr.bf16.mxu0 0
  %3128 = vmatpush1.bf16.msra.mxu0 0
  %3129 = vmatprep.subr.bf16.mxu0 0
  %3130 = vmatpush1.bf16.msra.mxu0 0
  %3131 = vmatprep.subr.bf16.mxu0 0
  %3132 = vmatpush1.bf16.msra.mxu0 0
  %3133 = vmatprep.subr.bf16.mxu0 0
  %3134 = vmatpush1.bf16.msra.mxu0 0
  %3135 = vmatprep.subr.bf16.mxu0 0
  %3136 = vmatpush1.bf16.msra.mxu0 0
  %3137 = vmatprep.subr.bf16.mxu0 0
  %3138 = vmatpush1.bf16.msra.mxu0 0
  %3139 = vmatprep.subr.bf16.mxu0 0
  %3140 = vmatpush1.bf16.msra.mxu0 0
  %3141 = vmatprep.subr.bf16.mxu0 0
  %3142 = vmatpush1.bf16.msra.mxu0 %v3126
  %3143 = vmatprep.subr.bf16.mxu0 0
  %3144 = vmatpush2.bf16.msra.mxu0 0
  %3145 = vmatprep.subr.bf16.mxu0 0
  %3146 = vmatpush2.bf16.msra.mxu0 0
  %3147 = vmatprep.subr.bf16.mxu0 0
  %3148 = vmatpush2.bf16.msra.mxu0 0
  %3149 = vmatprep.subr.bf16.mxu0 0
  %3150 = vmatpush2.bf16.msra.mxu0 0
  %3151 = vmatprep.subr.bf16.mxu0 0
  %3152 = vmatpush2.bf16.msra.mxu0 0
  %3153 = vmatprep.subr.bf16.mxu0 0
  %3154 = vmatpush2.bf16.msra.mxu0 0
  %3155 = vmatprep.subr.bf16.mxu0 0
  %3156 = vmatpush2.bf16.msra.mxu0 0
  %3157 = vmatprep.subr.bf16.mxu0 0
  %3158 = vmatpush2.bf16.msra.mxu0 0
  %3159 = vmatprep.mubr.bf16.mxu0 0
  %3160 = vmatmul.mubr.bf16.gmra.mxu0 %v318
  %v3161 = vpop.f32.mrf.mxu0
  %v3162 = vadd.f32 0.0, %v3161
  %v3163 = vpop.f32.mrf.mxu0
  %v3164 = vpop.f32.mrf.mxu0
  %v3165 = vadd.f32 0.0, %v3164
  %v3166 = vpop.f32.mrf.mxu0
  %3167 = vmatprep.mubr.bf16.mxu0 0
  %3168 = vmatmul.mubr.bf16.gmra.mxu0 %v321
  %v3169 = vpop.f32.mrf.mxu0
  %v3170 = vadd.f32 0.0, %v3169
  %v3171 = vpop.f32.mrf.mxu0
  %v3172 = vpop.f32.mrf.mxu0
  %v3173 = vadd.f32 0.0, %v3172
  %v3174 = vpop.f32.mrf.mxu0
  %3175 = vmatprep.mubr.bf16.mxu0 0
  %3176 = vmatmul.mubr.bf16.gmra.mxu0 %v324
  %v3177 = vpop.f32.mrf.mxu0
  %v3178 = vadd.f32 0.0, %v3177
  %v3179 = vpop.f32.mrf.mxu0
  %v3180 = vpop.f32.mrf.mxu0
  %v3181 = vadd.f32 0.0, %v3180
  %v3182 = vpop.f32.mrf.mxu0
  %3183 = vmatprep.mubr.bf16.mxu0 0
  %3184 = vmatmul.mubr.bf16.gmra.mxu0 %v327
  %v3185 = vpop.f32.mrf.mxu0
  %v3186 = vadd.f32 0.0, %v3185
  %v3187 = vpop.f32.mrf.mxu0
  %v3188 = vpop.f32.mrf.mxu0
  %v3189 = vadd.f32 0.0, %v3188
  %v3190 = vpop.f32.mrf.mxu0
  %3191 = vdwg.mxu0
  %v3192 = vsub.f32 %v3178, %v3162
  %v3193 = vsub.f32 %v3181, %v3165
  %v3194 = vsub.f32 %v3186, %v3170
  %v3195 = vsub.f32 %v3189, %v3173
  %v3196 = vmul.f32 %v3192, %v81
  %v3197 = vmul.f32 %v3193, %v81
  %v3198 = vmul.f32 %v3194, %v81
  %v3199 = vmul.f32 %v3195, %v81
  %v3200 = vmul.f32 %v3196, %v3196
  %v3201 = vmul.f32 %v3197, %v3197
  %v3202 = vmul.f32 %v3198, %v3198
  %v3203 = vmul.f32 %v3199, %v3199
  %v3204 = vsel %vm199, %v3200, 0.0
  %3205 = vadd.xlane.f32.xlu0 %v3204
  %v3206 = vpop.xlane.xlu0 %3205
  %v3207 = vsel %vm199, %v3201, 0.0
  %3208 = vadd.xlane.f32.xlu0 %v3207
  %v3209 = vpop.xlane.xlu0 %3208
  %v3210 = vsel %vm199, %v3202, 0.0
  %3211 = vadd.xlane.f32.xlu0 %v3210
  %v3212 = vpop.xlane.xlu0 %3211
  %v3213 = vsel %vm199, %v3203, 0.0
  %3214 = vadd.xlane.f32.xlu0 %v3213
  %v3215 = vpop.xlane.xlu0 %3214
  %v3216 = vrsqrt.pop %v3206
  %v3217 = vmul.f32 %v3206, %v3216
  %vm3218 = vcmp.eq.f32.partialorder %v3206, inf
  %v3219 = vsel %vm3218, %v3206, %v3217
  %vm3220 = vcmp.eq.f32.partialorder %v3206, 0.0
  %v3221 = vand.u32 %v3206, 2147483648
  %v3222 = vsel %vm3220, %v3221, %v3219
  %v3223 = vrsqrt.pop %v3209
  %v3224 = vmul.f32 %v3209, %v3223
  %vm3225 = vcmp.eq.f32.partialorder %v3209, inf
  %v3226 = vsel %vm3225, %v3209, %v3224
  %vm3227 = vcmp.eq.f32.partialorder %v3209, 0.0
  %v3228 = vand.u32 %v3209, 2147483648
  %v3229 = vsel %vm3227, %v3228, %v3226
  %v3230 = vrsqrt.pop %v3212
  %v3231 = vmul.f32 %v3212, %v3230
  %vm3232 = vcmp.eq.f32.partialorder %v3212, inf
  %v3233 = vsel %vm3232, %v3212, %v3231
  %vm3234 = vcmp.eq.f32.partialorder %v3212, 0.0
  %v3235 = vand.u32 %v3212, 2147483648
  %v3236 = vsel %vm3234, %v3235, %v3233
  %v3237 = vrsqrt.pop %v3215
  %v3238 = vmul.f32 %v3215, %v3237
  %vm3239 = vcmp.eq.f32.partialorder %v3215, inf
  %v3240 = vsel %vm3239, %v3215, %v3238
  %vm3241 = vcmp.eq.f32.partialorder %v3215, 0.0
  %v3242 = vand.u32 %v3215, 2147483648
  %v3243 = vsel %vm3241, %v3242, %v3240
  %3248 = vrot.lane.b32.xlu0 %v3162, 106
  %v3249 = vpop.permute.xlu0 %3248
  %3250 = vrot.lane.b32.xlu0 %v3165, 106
  %v3251 = vpop.permute.xlu0 %3250
  %3252 = vrot.lane.b32.xlu0 %v3170, 106
  %v3253 = vpop.permute.xlu0 %3252
  %3254 = vrot.lane.b32.xlu0 %v3173, 106
  %v3255 = vpop.permute.xlu0 %3254
  %v3260 = vadd.f32 %v3178, %v3249
  %v3261 = vadd.f32 %v3181, %v3251
  %v3262 = vadd.f32 %v3186, %v3253
  %v3263 = vadd.f32 %v3189, %v3255
  %s3264 = scalar_lea.vmem %s6, 3
  %v3265 = vld [vmem:[%s3264] sm:$0x1]
  %v3267 = vlaneseq
  %v3268 = vshrl.u32 %v3267, 7
  %v3269 = vsub.s32 0, %v3268
  %v3270 = vrot.slane %v3265, %v3269
  %v3272 = vmul.f32 %v3206, %v3270
  %v3273 = vmul.f32 %v3209, %v3270
  %v3274 = vmul.f32 %v3212, %v3270
  %v3275 = vmul.f32 %v3215, %v3270
  %3280 = vrot.lane.b32.xlu0 %v3272, 14
  %v3281 = vpop.permute.xlu0 %3280
  %3282 = vrot.lane.b32.xlu0 %v3273, 14
  %v3283 = vpop.permute.xlu0 %3282
  %3284 = vrot.lane.b32.xlu0 %v3274, 14
  %v3285 = vpop.permute.xlu0 %3284
  %3286 = vrot.lane.b32.xlu0 %v3275, 14
  %v3287 = vpop.permute.xlu0 %3286
  %v3292 = vadd.f32 %v3260, %v3281
  %v3293 = vadd.f32 %v3261, %v3283
  %v3294 = vadd.f32 %v3262, %v3285
  %v3295 = vadd.f32 %v3263, %v3287
  %3296 = vrot.lane.b32.xlu0 %v179, 76
  %v3297 = vpop.permute.xlu0 %3296
  %3298 = vrot.lane.b32.xlu0 %v184, 76
  %v3299 = vpop.permute.xlu0 %3298
  %3300 = vrot.lane.b32.xlu0 %v189, 76
  %v3301 = vpop.permute.xlu0 %3300
  %3302 = vrot.lane.b32.xlu0 %v194, 76
  %v3303 = vpop.permute.xlu0 %3302
  %v3308 = vadd.f32 %v3292, %v3297
  %v3309 = vadd.f32 %v3293, %v3299
  %v3310 = vadd.f32 %v3294, %v3301
  %v3311 = vadd.f32 %v3295, %v3303
  %v3312 = vxor.u32 %v3308, 2147483648
  %v3313 = vxor.u32 %v3309, 2147483648
  %v3314 = vxor.u32 %v3310, 2147483648
  %v3315 = vxor.u32 %v3311, 2147483648
  %v3316 = vmul.f32 %v3312, 1.442695
  %v3317 = vpow.pop %v3316
  %v3318 = vmul.f32 %v3313, 1.442695
  %v3319 = vpow.pop %v3318
  %v3320 = vmul.f32 %v3314, 1.442695
  %v3321 = vpow.pop %v3320
  %v3322 = vmul.f32 %v3315, 1.442695
  %v3323 = vpow.pop %v3322
  %v3324 = vadd.f32 %v3317, 1.0
  %v3325 = vadd.f32 %v3319, 1.0
  %v3326 = vadd.f32 %v3321, 1.0
  %v3327 = vadd.f32 %v3323, 1.0
  %v3328 = vrcp.pop %v3324
  %v3329 = vmul.f32 1.0, %v3328
  %v3330 = vrcp.pop %v3325
  %v3331 = vmul.f32 1.0, %v3330
  %v3332 = vrcp.pop %v3326
  %v3333 = vmul.f32 1.0, %v3332
  %v3334 = vrcp.pop %v3327
  %v3335 = vmul.f32 1.0, %v3334
  %v3336 = vmul.f32 %v3308, %v3329
  %v3337 = vmul.f32 %v3309, %v3331
  %v3338 = vmul.f32 %v3310, %v3333
  %v3339 = vmul.f32 %v3311, %v3335
  %s3340 = scalar_lea.vmem %s9, 72
  %v3341 = vld [vmem:[%s3340] sm:$0xff]
  %v3342 = vld [vmem:[%s3340 + $0x8] sm:$0xff]
  %v3343 = vld [vmem:[%s3340 + $0x10] sm:$0x3f]
  %s3344 = scalar_lea.vmem %s10, 3
  %v3345 = vld [vmem:[%s3344] sm:$0x1]
  %v3347 = vlaneseq
  %v3348 = vshrl.u32 %v3347, 7
  %v3349 = vsub.s32 0, %v3348
  %v3350 = vrot.slane %v3345, %v3349
  %3356 = vrot.lane.b32.xlu0 %v3336, 114
  %v3357 = vpop.permute.xlu0 %3356
  %3358 = vrot.lane.b32.xlu0 %v3337, 114
  %v3359 = vpop.permute.xlu0 %3358
  %3360 = vrot.lane.b32.xlu0 %v3338, 114
  %v3361 = vpop.permute.xlu0 %3360
  %3362 = vrot.lane.b32.xlu0 %v3339, 114
  %v3363 = vpop.permute.xlu0 %3362
  %v3364 = vsel %vm567, %v3357, 0
  %v3366 = vsel %vm567, %v3359, 0
  %v3368 = vsel %vm567, %v3361, 0
  %v3370 = vsel %vm567, %v3363, 0
  %v3373 = vsel %vm206, %v3343, 0
  %3375 = vmatprep.subr.mxu0 0.0
  %3376 = vmatpush1.msra.mxu0 0.0
  %3377 = vmatprep.subr.mxu0 0.0
  %3378 = vmatpush1.msra.mxu0 0.0
  %3379 = vmatprep.subr.mxu0 0.0
  %3380 = vmatpush1.msra.mxu0 0.0
  %3381 = vmatprep.subr.mxu0 0.0
  %3382 = vmatpush1.msra.mxu0 0.0
  %3383 = vmatprep.subr.mxu0 0.0
  %3384 = vmatpush1.msra.mxu0 0.0
  %3385 = vmatprep.subr.mxu0 0.0
  %3386 = vmatpush1.msra.mxu0 0.0
  %3387 = vmatprep.subr.mxu0 0.0
  %3388 = vmatpush1.msra.mxu0 0.0
  %3389 = vmatprep.subr.mxu0 0.0
  %3390 = vmatpush1.msra.mxu0 0.0
  %3391 = vmatprep.subr.mxu0 0.0
  %3392 = vmatpush1.msra.mxu0 0.0
  %3393 = vmatprep.subr.mxu0 0.0
  %3394 = vmatpush1.msra.mxu0 0.0
  %3395 = vmatprep.subr.mxu0 0.0
  %3396 = vmatpush1.msra.mxu0 0.0
  %3397 = vmatprep.subr.mxu0 0.0
  %3398 = vmatpush1.msra.mxu0 0.0
  %3399 = vmatprep.subr.mxu0 0.0
  %3400 = vmatpush1.msra.mxu0 0.0
  %3401 = vmatprep.subr.mxu0 0.0
  %3402 = vmatpush1.msra.mxu0 %v3373
  %3403 = vmatprep.subr.mxu0 0.0
  %3404 = vmatpush1.msra.mxu0 %v3342
  %3405 = vmatprep.subr.mxu0 0.0
  %3406 = vmatpush1.msra.mxu0 %v3341
  %3407 = vmatprep.subr.mxu0 0.0
  %3408 = vmatpush2.msra.mxu0 0.0
  %3409 = vmatprep.subr.mxu0 0.0
  %3410 = vmatpush2.msra.mxu0 0.0
  %3411 = vmatprep.subr.mxu0 0.0
  %3412 = vmatpush2.msra.mxu0 0.0
  %3413 = vmatprep.subr.mxu0 0.0
  %3414 = vmatpush2.msra.mxu0 0.0
  %3415 = vmatprep.subr.mxu0 0.0
  %3416 = vmatpush2.msra.mxu0 0.0
  %3417 = vmatprep.subr.mxu0 0.0
  %3418 = vmatpush2.msra.mxu0 0.0
  %3419 = vmatprep.subr.mxu0 0.0
  %3420 = vmatpush2.msra.mxu0 0.0
  %3421 = vmatprep.subr.mxu0 0.0
  %3422 = vmatpush2.msra.mxu0 0.0
  %3423 = vmatprep.subr.mxu0 0.0
  %3424 = vmatpush2.msra.mxu0 0.0
  %3425 = vmatprep.subr.mxu0 0.0
  %3426 = vmatpush2.msra.mxu0 0.0
  %3427 = vmatprep.subr.mxu0 0.0
  %3428 = vmatpush2.msra.mxu0 0.0
  %3429 = vmatprep.subr.mxu0 0.0
  %3430 = vmatpush2.msra.mxu0 0.0
  %3431 = vmatprep.subr.mxu0 0.0
  %3432 = vmatpush2.msra.mxu0 0.0
  %3433 = vmatprep.subr.mxu0 0.0
  %3434 = vmatpush2.msra.mxu0 0.0
  %3435 = vmatprep.subr.mxu0 0.0
  %3436 = vmatpush2.msra.mxu0 0.0
  %3437 = vmatprep.subr.mxu0 0.0
  %3438 = vmatpush2.msra.mxu0 0.0
  %3439 = vmatprep.mubr.f32.mxu0 0.0
  %3440 = vmatmul.mubr.f32.gmra.mxu0 %v3364
  %v3441 = vpop.f32.mrf.mxu0
  %v3442 = vadd.f32 %v3350, %v3441
  %v3443 = vpop.f32.mrf.mxu0
  %3444 = vmatprep.mubr.f32.mxu0 0.0
  %3445 = vmatmul.mubr.f32.gmra.mxu0 %v3366
  %v3446 = vpop.f32.mrf.mxu0
  %v3447 = vadd.f32 %v3350, %v3446
  %v3448 = vpop.f32.mrf.mxu0
  %3449 = vmatprep.mubr.f32.mxu0 0.0
  %3450 = vmatmul.mubr.f32.gmra.mxu0 %v3368
  %v3451 = vpop.f32.mrf.mxu0
  %v3452 = vadd.f32 %v3350, %v3451
  %v3453 = vpop.f32.mrf.mxu0
  %3454 = vmatprep.mubr.f32.mxu0 0.0
  %3455 = vmatmul.mubr.f32.gmra.mxu0 %v3370
  %v3456 = vpop.f32.mrf.mxu0
  %v3457 = vadd.f32 %v3350, %v3456
  %v3458 = vpop.f32.mrf.mxu0
  %3459 = vdwg.mxu0
  %v3460 = vxor.u32 %v3442, 2147483648
  %v3461 = vxor.u32 %v3447, 2147483648
  %v3462 = vxor.u32 %v3452, 2147483648
  %v3463 = vxor.u32 %v3457, 2147483648
  %v3464 = vmul.f32 %v3460, 1.442695
  %v3465 = vpow.pop %v3464
  %v3466 = vmul.f32 %v3461, 1.442695
  %v3467 = vpow.pop %v3466
  %v3468 = vmul.f32 %v3462, 1.442695
  %v3469 = vpow.pop %v3468
  %v3470 = vmul.f32 %v3463, 1.442695
  %v3471 = vpow.pop %v3470
  %v3472 = vadd.f32 %v3465, 1.0
  %v3473 = vadd.f32 %v3467, 1.0
  %v3474 = vadd.f32 %v3469, 1.0
  %v3475 = vadd.f32 %v3471, 1.0
  %v3476 = vrcp.pop %v3472
  %v3477 = vmul.f32 1.0, %v3476
  %v3478 = vrcp.pop %v3473
  %v3479 = vmul.f32 1.0, %v3478
  %v3480 = vrcp.pop %v3474
  %v3481 = vmul.f32 1.0, %v3480
  %v3482 = vrcp.pop %v3475
  %v3483 = vmul.f32 1.0, %v3482
  %v3484 = vmul.f32 %v3442, %v3477
  %v3485 = vmul.f32 %v3447, %v3479
  %v3486 = vmul.f32 %v3452, %v3481
  %v3487 = vmul.f32 %v3457, %v3483
  %s3488 = scalar_lea.vmem %s11, 72
  %v3489 = vld [vmem:[%s3488] sm:$0xff]
  %v3490 = vld [vmem:[%s3488 + $0x8] sm:$0xff]
  %v3491 = vld [vmem:[%s3488 + $0x10] sm:$0x3f]
  %s3492 = scalar_lea.vmem %s12, 3
  %v3493 = vld [vmem:[%s3492] sm:$0x1]
  %v3495 = vlaneseq
  %v3496 = vshrl.u32 %v3495, 7
  %v3497 = vsub.s32 0, %v3496
  %v3498 = vrot.slane %v3493, %v3497
  %v3501 = vsel %vm567, %v3484, 0
  %v3504 = vsel %vm567, %v3485, 0
  %v3507 = vsel %vm567, %v3486, 0
  %v3510 = vsel %vm567, %v3487, 0
  %v3513 = vsel %vm206, %v3491, 0
  %3515 = vmatprep.subr.mxu0 0.0
  %3516 = vmatpush1.msra.mxu0 0.0
  %3517 = vmatprep.subr.mxu0 0.0
  %3518 = vmatpush1.msra.mxu0 0.0
  %3519 = vmatprep.subr.mxu0 0.0
  %3520 = vmatpush1.msra.mxu0 0.0
  %3521 = vmatprep.subr.mxu0 0.0
  %3522 = vmatpush1.msra.mxu0 0.0
  %3523 = vmatprep.subr.mxu0 0.0
  %3524 = vmatpush1.msra.mxu0 0.0
  %3525 = vmatprep.subr.mxu0 0.0
  %3526 = vmatpush1.msra.mxu0 0.0
  %3527 = vmatprep.subr.mxu0 0.0
  %3528 = vmatpush1.msra.mxu0 0.0
  %3529 = vmatprep.subr.mxu0 0.0
  %3530 = vmatpush1.msra.mxu0 0.0
  %3531 = vmatprep.subr.mxu0 0.0
  %3532 = vmatpush1.msra.mxu0 0.0
  %3533 = vmatprep.subr.mxu0 0.0
  %3534 = vmatpush1.msra.mxu0 0.0
  %3535 = vmatprep.subr.mxu0 0.0
  %3536 = vmatpush1.msra.mxu0 0.0
  %3537 = vmatprep.subr.mxu0 0.0
  %3538 = vmatpush1.msra.mxu0 0.0
  %3539 = vmatprep.subr.mxu0 0.0
  %3540 = vmatpush1.msra.mxu0 0.0
  %3541 = vmatprep.subr.mxu0 0.0
  %3542 = vmatpush1.msra.mxu0 %v3513
  %3543 = vmatprep.subr.mxu0 0.0
  %3544 = vmatpush1.msra.mxu0 %v3490
  %3545 = vmatprep.subr.mxu0 0.0
  %3546 = vmatpush1.msra.mxu0 %v3489
  %3547 = vmatprep.subr.mxu0 0.0
  %3548 = vmatpush2.msra.mxu0 0.0
  %3549 = vmatprep.subr.mxu0 0.0
  %3550 = vmatpush2.msra.mxu0 0.0
  %3551 = vmatprep.subr.mxu0 0.0
  %3552 = vmatpush2.msra.mxu0 0.0
  %3553 = vmatprep.subr.mxu0 0.0
  %3554 = vmatpush2.msra.mxu0 0.0
  %3555 = vmatprep.subr.mxu0 0.0
  %3556 = vmatpush2.msra.mxu0 0.0
  %3557 = vmatprep.subr.mxu0 0.0
  %3558 = vmatpush2.msra.mxu0 0.0
  %3559 = vmatprep.subr.mxu0 0.0
  %3560 = vmatpush2.msra.mxu0 0.0
  %3561 = vmatprep.subr.mxu0 0.0
  %3562 = vmatpush2.msra.mxu0 0.0
  %3563 = vmatprep.subr.mxu0 0.0
  %3564 = vmatpush2.msra.mxu0 0.0
  %3565 = vmatprep.subr.mxu0 0.0
  %3566 = vmatpush2.msra.mxu0 0.0
  %3567 = vmatprep.subr.mxu0 0.0
  %3568 = vmatpush2.msra.mxu0 0.0
  %3569 = vmatprep.subr.mxu0 0.0
  %3570 = vmatpush2.msra.mxu0 0.0
  %3571 = vmatprep.subr.mxu0 0.0
  %3572 = vmatpush2.msra.mxu0 0.0
  %3573 = vmatprep.subr.mxu0 0.0
  %3574 = vmatpush2.msra.mxu0 0.0
  %3575 = vmatprep.subr.mxu0 0.0
  %3576 = vmatpush2.msra.mxu0 0.0
  %3577 = vmatprep.subr.mxu0 0.0
  %3578 = vmatpush2.msra.mxu0 0.0
  %3579 = vmatprep.mubr.f32.mxu0 0.0
  %3580 = vmatmul.mubr.f32.gmra.mxu0 %v3501
  %v3581 = vpop.f32.mrf.mxu0
  %v3582 = vadd.f32 %v3498, %v3581
  %v3583 = vpop.f32.mrf.mxu0
  %3584 = vmatprep.mubr.f32.mxu0 0.0
  %3585 = vmatmul.mubr.f32.gmra.mxu0 %v3504
  %v3586 = vpop.f32.mrf.mxu0
  %v3587 = vadd.f32 %v3498, %v3586
  %v3588 = vpop.f32.mrf.mxu0
  %3589 = vmatprep.mubr.f32.mxu0 0.0
  %3590 = vmatmul.mubr.f32.gmra.mxu0 %v3507
  %v3591 = vpop.f32.mrf.mxu0
  %v3592 = vadd.f32 %v3498, %v3591
  %v3593 = vpop.f32.mrf.mxu0
  %3594 = vmatprep.mubr.f32.mxu0 0.0
  %3595 = vmatmul.mubr.f32.gmra.mxu0 %v3510
  %v3596 = vpop.f32.mrf.mxu0
  %v3597 = vadd.f32 %v3498, %v3596
  %v3598 = vpop.f32.mrf.mxu0
  %3599 = vdwg.mxu0
  %v3600 = vxor.u32 %v3582, 2147483648
  %v3601 = vxor.u32 %v3587, 2147483648
  %v3602 = vxor.u32 %v3592, 2147483648
  %v3603 = vxor.u32 %v3597, 2147483648
  %v3604 = vmul.f32 %v3600, 1.442695
  %v3605 = vpow.pop %v3604
  %v3606 = vmul.f32 %v3601, 1.442695
  %v3607 = vpow.pop %v3606
  %v3608 = vmul.f32 %v3602, 1.442695
  %v3609 = vpow.pop %v3608
  %v3610 = vmul.f32 %v3603, 1.442695
  %v3611 = vpow.pop %v3610
  %v3612 = vadd.f32 %v3605, 1.0
  %v3613 = vadd.f32 %v3607, 1.0
  %v3614 = vadd.f32 %v3609, 1.0
  %v3615 = vadd.f32 %v3611, 1.0
  %v3616 = vrcp.pop %v3612
  %v3617 = vmul.f32 1.0, %v3616
  %v3618 = vrcp.pop %v3613
  %v3619 = vmul.f32 1.0, %v3618
  %v3620 = vrcp.pop %v3614
  %v3621 = vmul.f32 1.0, %v3620
  %v3622 = vrcp.pop %v3615
  %v3623 = vmul.f32 1.0, %v3622
  %v3624 = vadd.f32 %v3222, 1.0
  %v3625 = vadd.f32 %v3229, 1.0
  %v3626 = vadd.f32 %v3236, 1.0
  %v3627 = vadd.f32 %v3243, 1.0
  %v3628 = vrcp.pop %v3624
  %v3629 = vrcp.pop %v3625
  %v3630 = vrcp.pop %v3626
  %v3631 = vrcp.pop %v3627
  %v3632 = vmul.f32 %v3484, %v82
  %v3633 = vmul.f32 %v3485, %v82
  %v3634 = vmul.f32 %v3486, %v82
  %v3635 = vmul.f32 %v3487, %v82
  %3637 = vset.pattern.permute.xlu0 0
  %3638 = vperm.xlu0 %3637, %v3617
  %v3639 = vpop.permute.xlu0 %3638
  %3642 = vset.pattern.permute.xlu0 0
  %3643 = vperm.xlu0 %3642, %v3619
  %v3644 = vpop.permute.xlu0 %3643
  %3647 = vset.pattern.permute.xlu0 0
  %3648 = vperm.xlu0 %3647, %v3621
  %v3649 = vpop.permute.xlu0 %3648
  %3652 = vset.pattern.permute.xlu0 0
  %3653 = vperm.xlu0 %3652, %v3623
  %v3654 = vpop.permute.xlu0 %3653
  %v3656 = vmul.f32 %v3639, %v3632
  %v3657 = vmul.f32 %v3644, %v3633
  %v3658 = vmul.f32 %v3649, %v3634
  %v3659 = vmul.f32 %v3654, %v3635
  %v3660 = vmul.f32 %v3628, %v3582
  %v3661 = vmul.f32 %v3629, %v3587
  %v3662 = vmul.f32 %v3630, %v3592
  %v3663 = vmul.f32 %v3631, %v3597
  %3665 = vset.pattern.permute.xlu0 1
  %3666 = vperm.xlu0 %3665, %v3660
  %v3667 = vpop.permute.xlu0 %3666
  %3670 = vset.pattern.permute.xlu0 1
  %3671 = vperm.xlu0 %3670, %v3661
  %v3672 = vpop.permute.xlu0 %3671
  %3675 = vset.pattern.permute.xlu0 1
  %3676 = vperm.xlu0 %3675, %v3662
  %v3677 = vpop.permute.xlu0 %3676
  %3680 = vset.pattern.permute.xlu0 1
  %3681 = vperm.xlu0 %3680, %v3663
  %v3682 = vpop.permute.xlu0 %3681
  %v3684 = vmul.f32 %v3196, %v3667
  %v3685 = vmul.f32 %v3197, %v3672
  %v3686 = vmul.f32 %v3198, %v3677
  %v3687 = vmul.f32 %v3199, %v3682
  %v3688 = vadd.f32 %v3656, %v3684
  %v3689 = vadd.f32 %v3657, %v3685
  %v3690 = vadd.f32 %v3658, %v3686
  %v3691 = vadd.f32 %v3659, %v3687
  %v3692 = vpack.c.bf16 %v3689, %v3688
  %v3693 = vpack.c.bf16 %v3691, %v3690
  %3694 = vmatprep.subr.bf16.mxu0 0
  %3695 = vmatpush1.bf16.msra.mxu0 0
  %3696 = vmatprep.subr.bf16.mxu0 0
  %3697 = vmatpush1.bf16.msra.mxu0 0
  %3698 = vmatprep.subr.bf16.mxu0 0
  %3699 = vmatpush1.bf16.msra.mxu0 0
  %3700 = vmatprep.subr.bf16.mxu0 0
  %3701 = vmatpush1.bf16.msra.mxu0 0
  %3702 = vmatprep.subr.bf16.mxu0 0
  %3703 = vmatpush1.bf16.msra.mxu0 0
  %3704 = vmatprep.subr.bf16.mxu0 0
  %3705 = vmatpush1.bf16.msra.mxu0 0
  %3706 = vmatprep.subr.bf16.mxu0 0
  %3707 = vmatpush1.bf16.msra.mxu0 %v3693
  %3708 = vmatprep.subr.bf16.mxu0 0
  %3709 = vmatpush1.bf16.msra.mxu0 %v3692
  %3710 = vmatprep.subr.bf16.mxu0 0
  %3711 = vmatpush2.bf16.msra.mxu0 0
  %3712 = vmatprep.subr.bf16.mxu0 0
  %3713 = vmatpush2.bf16.msra.mxu0 0
  %3714 = vmatprep.subr.bf16.mxu0 0
  %3715 = vmatpush2.bf16.msra.mxu0 0
  %3716 = vmatprep.subr.bf16.mxu0 0
  %3717 = vmatpush2.bf16.msra.mxu0 0
  %3718 = vmatprep.subr.bf16.mxu0 0
  %3719 = vmatpush2.bf16.msra.mxu0 0
  %3720 = vmatprep.subr.bf16.mxu0 0
  %3721 = vmatpush2.bf16.msra.mxu0 0
  %3722 = vmatprep.subr.bf16.mxu0 0
  %3723 = vmatpush2.bf16.msra.mxu0 0
  %3724 = vmatprep.subr.bf16.mxu0 0
  %3725 = vmatpush2.bf16.msra.mxu0 0
  %3726 = vmatprep.mubr.bf16.mxu0 0
  %3727 = vmatmul.mubr.bf16.gmra.mxu0 %v903
  %v3728 = vpop.f32.mrf.mxu0
  %v3729 = vadd.f32 0.0, %v3728
  %v3730 = vpop.f32.mrf.mxu0
  %v3731 = vpop.f32.mrf.mxu0
  %v3732 = vadd.f32 0.0, %v3731
  %v3733 = vpop.f32.mrf.mxu0
  %3734 = vdwg.mxu0
  %3737 = vrot.lane.b32.xlu0 %v3729, 14
  %v3738 = vpop.permute.xlu0 %3737
  %3739 = vrot.lane.b32.xlu0 %v3732, 14
  %v3740 = vpop.permute.xlu0 %3739
  %v3743 = vsel %vm199, %v3027, %v3738
  %v3744 = vsel %vm199, %v3028, %v3740
  %s3745 = scalar_lea.vmem %s13, 96
  %v3746 = vld [vmem:[%s3745] sm:$0xff]
  %v3747 = vld [vmem:[%s3745 + $0x8] sm:$0xff]
  %v3748 = vld [vmem:[%s3745 + $0x10] sm:$0xff]
  %v3749 = vld [vmem:[%s3745 + $0x18] sm:$0xf]
  %s3750 = scalar_lea.vmem %s14, 3
  %v3751 = vld [vmem:[%s3750] sm:$0x1]
  %v3753 = vlaneseq
  %v3754 = vshrl.u32 %v3753, 7
  %v3755 = vsub.s32 0, %v3754
  %v3756 = vrot.slane %v3751, %v3755
  %v3759 = vsel %vm967, %v3743, 0
  %v3762 = vsel %vm967, %v3744, 0
  %v3765 = vsel %vm108, %v3749, 0
  %3767 = vmatprep.subr.mxu0 0.0
  %3768 = vmatpush1.msra.mxu0 0.0
  %3769 = vmatprep.subr.mxu0 0.0
  %3770 = vmatpush1.msra.mxu0 0.0
  %3771 = vmatprep.subr.mxu0 0.0
  %3772 = vmatpush1.msra.mxu0 0.0
  %3773 = vmatprep.subr.mxu0 0.0
  %3774 = vmatpush1.msra.mxu0 0.0
  %3775 = vmatprep.subr.mxu0 0.0
  %3776 = vmatpush1.msra.mxu0 0.0
  %3777 = vmatprep.subr.mxu0 0.0
  %3778 = vmatpush1.msra.mxu0 0.0
  %3779 = vmatprep.subr.mxu0 0.0
  %3780 = vmatpush1.msra.mxu0 0.0
  %3781 = vmatprep.subr.mxu0 0.0
  %3782 = vmatpush1.msra.mxu0 0.0
  %3783 = vmatprep.subr.mxu0 0.0
  %3784 = vmatpush1.msra.mxu0 0.0
  %3785 = vmatprep.subr.mxu0 0.0
  %3786 = vmatpush1.msra.mxu0 0.0
  %3787 = vmatprep.subr.mxu0 0.0
  %3788 = vmatpush1.msra.mxu0 0.0
  %3789 = vmatprep.subr.mxu0 0.0
  %3790 = vmatpush1.msra.mxu0 0.0
  %3791 = vmatprep.subr.mxu0 0.0
  %3792 = vmatpush1.msra.mxu0 %v3765
  %3793 = vmatprep.subr.mxu0 0.0
  %3794 = vmatpush1.msra.mxu0 %v3748
  %3795 = vmatprep.subr.mxu0 0.0
  %3796 = vmatpush1.msra.mxu0 %v3747
  %3797 = vmatprep.subr.mxu0 0.0
  %3798 = vmatpush1.msra.mxu0 %v3746
  %3799 = vmatprep.subr.mxu0 0.0
  %3800 = vmatpush2.msra.mxu0 0.0
  %3801 = vmatprep.subr.mxu0 0.0
  %3802 = vmatpush2.msra.mxu0 0.0
  %3803 = vmatprep.subr.mxu0 0.0
  %3804 = vmatpush2.msra.mxu0 0.0
  %3805 = vmatprep.subr.mxu0 0.0
  %3806 = vmatpush2.msra.mxu0 0.0
  %3807 = vmatprep.subr.mxu0 0.0
  %3808 = vmatpush2.msra.mxu0 0.0
  %3809 = vmatprep.subr.mxu0 0.0
  %3810 = vmatpush2.msra.mxu0 0.0
  %3811 = vmatprep.subr.mxu0 0.0
  %3812 = vmatpush2.msra.mxu0 0.0
  %3813 = vmatprep.subr.mxu0 0.0
  %3814 = vmatpush2.msra.mxu0 0.0
  %3815 = vmatprep.subr.mxu0 0.0
  %3816 = vmatpush2.msra.mxu0 0.0
  %3817 = vmatprep.subr.mxu0 0.0
  %3818 = vmatpush2.msra.mxu0 0.0
  %3819 = vmatprep.subr.mxu0 0.0
  %3820 = vmatpush2.msra.mxu0 0.0
  %3821 = vmatprep.subr.mxu0 0.0
  %3822 = vmatpush2.msra.mxu0 0.0
  %3823 = vmatprep.subr.mxu0 0.0
  %3824 = vmatpush2.msra.mxu0 0.0
  %3825 = vmatprep.subr.mxu0 0.0
  %3826 = vmatpush2.msra.mxu0 0.0
  %3827 = vmatprep.subr.mxu0 0.0
  %3828 = vmatpush2.msra.mxu0 0.0
  %3829 = vmatprep.subr.mxu0 0.0
  %3830 = vmatpush2.msra.mxu0 0.0
  %3831 = vmatprep.mubr.f32.mxu0 0.0
  %3832 = vmatmul.mubr.f32.gmra.mxu0 %v3759
  %v3833 = vpop.f32.mrf.mxu0
  %v3834 = vadd.f32 %v3756, %v3833
  %v3835 = vpop.f32.mrf.mxu0
  %3836 = vmatprep.mubr.f32.mxu0 0.0
  %3837 = vmatmul.mubr.f32.gmra.mxu0 %v3762
  %v3838 = vpop.f32.mrf.mxu0
  %v3839 = vadd.f32 %v3756, %v3838
  %v3840 = vpop.f32.mrf.mxu0
  %3841 = vdwg.mxu0
  %v3842 = vxor.u32 %v3834, 2147483648
  %v3843 = vxor.u32 %v3839, 2147483648
  %v3844 = vmul.f32 %v3842, 1.442695
  %v3845 = vpow.pop %v3844
  %v3846 = vmul.f32 %v3843, 1.442695
  %v3847 = vpow.pop %v3846
  %v3848 = vadd.f32 %v3845, 1.0
  %v3849 = vadd.f32 %v3847, 1.0
  %v3850 = vrcp.pop %v3848
  %v3851 = vmul.f32 1.0, %v3850
  %v3852 = vrcp.pop %v3849
  %v3853 = vmul.f32 1.0, %v3852
  %v3854 = vmul.f32 %v3834, %v3851
  %v3855 = vmul.f32 %v3839, %v3853
  %s3856 = scalar_lea.vmem %s15, 48
  %v3857 = vld [vmem:[%s3856] sm:$0xff]
  %v3858 = vld [vmem:[%s3856 + $0x8] sm:$0x7]
  %v3860 = vsel %vm1068, %v3854, 0
  %v3863 = vsel %vm1068, %v3855, 0
  %v3866 = vsel %vm1075, %v3858, 0
  %3868 = vmatprep.subr.mxu0 0.0
  %3869 = vmatpush1.msra.mxu0 0.0
  %3870 = vmatprep.subr.mxu0 0.0
  %3871 = vmatpush1.msra.mxu0 0.0
  %3872 = vmatprep.subr.mxu0 0.0
  %3873 = vmatpush1.msra.mxu0 0.0
  %3874 = vmatprep.subr.mxu0 0.0
  %3875 = vmatpush1.msra.mxu0 0.0
  %3876 = vmatprep.subr.mxu0 0.0
  %3877 = vmatpush1.msra.mxu0 0.0
  %3878 = vmatprep.subr.mxu0 0.0
  %3879 = vmatpush1.msra.mxu0 0.0
  %3880 = vmatprep.subr.mxu0 0.0
  %3881 = vmatpush1.msra.mxu0 0.0
  %3882 = vmatprep.subr.mxu0 0.0
  %3883 = vmatpush1.msra.mxu0 0.0
  %3884 = vmatprep.subr.mxu0 0.0
  %3885 = vmatpush1.msra.mxu0 0.0
  %3886 = vmatprep.subr.mxu0 0.0
  %3887 = vmatpush1.msra.mxu0 0.0
  %3888 = vmatprep.subr.mxu0 0.0
  %3889 = vmatpush1.msra.mxu0 0.0
  %3890 = vmatprep.subr.mxu0 0.0
  %3891 = vmatpush1.msra.mxu0 0.0
  %3892 = vmatprep.subr.mxu0 0.0
  %3893 = vmatpush1.msra.mxu0 0.0
  %3894 = vmatprep.subr.mxu0 0.0
  %3895 = vmatpush1.msra.mxu0 0.0
  %3896 = vmatprep.subr.mxu0 0.0
  %3897 = vmatpush1.msra.mxu0 %v3866
  %3898 = vmatprep.subr.mxu0 0.0
  %3899 = vmatpush1.msra.mxu0 %v3857
  %3900 = vmatprep.subr.mxu0 0.0
  %3901 = vmatpush2.msra.mxu0 0.0
  %3902 = vmatprep.subr.mxu0 0.0
  %3903 = vmatpush2.msra.mxu0 0.0
  %3904 = vmatprep.subr.mxu0 0.0
  %3905 = vmatpush2.msra.mxu0 0.0
  %3906 = vmatprep.subr.mxu0 0.0
  %3907 = vmatpush2.msra.mxu0 0.0
  %3908 = vmatprep.subr.mxu0 0.0
  %3909 = vmatpush2.msra.mxu0 0.0
  %3910 = vmatprep.subr.mxu0 0.0
  %3911 = vmatpush2.msra.mxu0 0.0
  %3912 = vmatprep.subr.mxu0 0.0
  %3913 = vmatpush2.msra.mxu0 0.0
  %3914 = vmatprep.subr.mxu0 0.0
  %3915 = vmatpush2.msra.mxu0 0.0
  %3916 = vmatprep.subr.mxu0 0.0
  %3917 = vmatpush2.msra.mxu0 0.0
  %3918 = vmatprep.subr.mxu0 0.0
  %3919 = vmatpush2.msra.mxu0 0.0
  %3920 = vmatprep.subr.mxu0 0.0
  %3921 = vmatpush2.msra.mxu0 0.0
  %3922 = vmatprep.subr.mxu0 0.0
  %3923 = vmatpush2.msra.mxu0 0.0
  %3924 = vmatprep.subr.mxu0 0.0
  %3925 = vmatpush2.msra.mxu0 0.0
  %3926 = vmatprep.subr.mxu0 0.0
  %3927 = vmatpush2.msra.mxu0 0.0
  %3928 = vmatprep.subr.mxu0 0.0
  %3929 = vmatpush2.msra.mxu0 0.0
  %3930 = vmatprep.subr.mxu0 0.0
  %3931 = vmatpush2.msra.mxu0 0.0
  %3932 = vmatprep.mubr.f32.mxu0 0.0
  %3933 = vmatmul.mubr.f32.gmra.mxu0 %v3860
  %v3934 = vpop.f32.mrf.mxu0
  %v3935 = vadd.f32 0.0, %v3934
  %v3936 = vpop.f32.mrf.mxu0
  %3937 = vmatprep.mubr.f32.mxu0 0.0
  %3938 = vmatmul.mubr.f32.gmra.mxu0 %v3863
  %v3939 = vpop.f32.mrf.mxu0
  %v3940 = vadd.f32 0.0, %v3939
  %v3941 = vpop.f32.mrf.mxu0
  %3942 = vdwg.mxu0
  %v3943 = vadd.f32 %v3027, %v3935
  %v3944 = vadd.f32 %v3028, %v3940
  %s3945 = scalar_lea.vmem %s16, 3
  %v3946 = vld [vmem:[%s3945] sm:$0x1]
  %v3948 = vlaneseq
  %v3949 = vshrl.u32 %v3948, 7
  %v3950 = vsub.s32 0, %v3949
  %v3951 = vrot.slane %v3946, %v3950
  %v3953 = vadd.f32 %v3943, %v3951
  %v3954 = vadd.f32 %v3944, %v3951
  %v3955 = vmul.f32 %v3729, %v81
  %v3956 = vmul.f32 %v3732, %v81
  %v3957 = vadd.f32 %v3953, %v3955
  %v3958 = vadd.f32 %v3954, %v3956
  %v3959 = vld [vmem:[%s4] sm:$0x3]
  %v3961 = vsel %vm316, %v3959, 0
  %3963 = vmatprep.subr.mxu0 0.0
  %3964 = vmatpush1.msra.mxu0 0.0
  %3965 = vmatprep.subr.mxu0 0.0
  %3966 = vmatpush1.msra.mxu0 0.0
  %3967 = vmatprep.subr.mxu0 0.0
  %3968 = vmatpush1.msra.mxu0 0.0
  %3969 = vmatprep.subr.mxu0 0.0
  %3970 = vmatpush1.msra.mxu0 0.0
  %3971 = vmatprep.subr.mxu0 0.0
  %3972 = vmatpush1.msra.mxu0 0.0
  %3973 = vmatprep.subr.mxu0 0.0
  %3974 = vmatpush1.msra.mxu0 0.0
  %3975 = vmatprep.subr.mxu0 0.0
  %3976 = vmatpush1.msra.mxu0 0.0
  %3977 = vmatprep.subr.mxu0 0.0
  %3978 = vmatpush1.msra.mxu0 0.0
  %3979 = vmatprep.subr.mxu0 0.0
  %3980 = vmatpush1.msra.mxu0 0.0
  %3981 = vmatprep.subr.mxu0 0.0
  %3982 = vmatpush1.msra.mxu0 0.0
  %3983 = vmatprep.subr.mxu0 0.0
  %3984 = vmatpush1.msra.mxu0 0.0
  %3985 = vmatprep.subr.mxu0 0.0
  %3986 = vmatpush1.msra.mxu0 0.0
  %3987 = vmatprep.subr.mxu0 0.0
  %3988 = vmatpush1.msra.mxu0 0.0
  %3989 = vmatprep.subr.mxu0 0.0
  %3990 = vmatpush1.msra.mxu0 0.0
  %3991 = vmatprep.subr.mxu0 0.0
  %3992 = vmatpush1.msra.mxu0 %v3958
  %3993 = vmatprep.subr.mxu0 0.0
  %3994 = vmatpush1.msra.mxu0 %v3957
  %3995 = vmatprep.subr.mxu0 0.0
  %3996 = vmatpush2.msra.mxu0 0.0
  %3997 = vmatprep.subr.mxu0 0.0
  %3998 = vmatpush2.msra.mxu0 0.0
  %3999 = vmatprep.subr.mxu0 0.0
  %4000 = vmatpush2.msra.mxu0 0.0
  %4001 = vmatprep.subr.mxu0 0.0
  %4002 = vmatpush2.msra.mxu0 0.0
  %4003 = vmatprep.subr.mxu0 0.0
  %4004 = vmatpush2.msra.mxu0 0.0
  %4005 = vmatprep.subr.mxu0 0.0
  %4006 = vmatpush2.msra.mxu0 0.0
  %4007 = vmatprep.subr.mxu0 0.0
  %4008 = vmatpush2.msra.mxu0 0.0
  %4009 = vmatprep.subr.mxu0 0.0
  %4010 = vmatpush2.msra.mxu0 0.0
  %4011 = vmatprep.subr.mxu0 0.0
  %4012 = vmatpush2.msra.mxu0 0.0
  %4013 = vmatprep.subr.mxu0 0.0
  %4014 = vmatpush2.msra.mxu0 0.0
  %4015 = vmatprep.subr.mxu0 0.0
  %4016 = vmatpush2.msra.mxu0 0.0
  %4017 = vmatprep.subr.mxu0 0.0
  %4018 = vmatpush2.msra.mxu0 0.0
  %4019 = vmatprep.subr.mxu0 0.0
  %4020 = vmatpush2.msra.mxu0 0.0
  %4021 = vmatprep.subr.mxu0 0.0
  %4022 = vmatpush2.msra.mxu0 0.0
  %4023 = vmatprep.subr.mxu0 0.0
  %4024 = vmatpush2.msra.mxu0 0.0
  %4025 = vmatprep.subr.mxu0 0.0
  %4026 = vmatpush2.msra.mxu0 0.0
  %4027 = vmatprep.mubr.f32.mxu0 0.0
  %4028 = vmatmul.mubr.f32.gmra.mxu0 %v3961
  %v4029 = vpop.f32.mrf.mxu0
  %v4030 = vadd.f32 0.0, %v4029
  %v4031 = vpop.f32.mrf.mxu0
  %4032 = vdwg.mxu0
  %v4033 = vld [vmem:[%s17] sm:$0xff]
  %v4034 = vld [vmem:[%s17 + $0x8] sm:$0x3f]
  %v4035 = vld [vmem:[#allocation2] sm:$0x1]
  %v4037 = vlaneseq
  %v4038 = vshrl.u32 %v4037, 7
  %v4039 = vsub.s32 0, %v4038
  %v4040 = vrot.slane %v4035, %v4039
  %v4043 = vsel %vm199, %v4030, 0
  %v4046 = vsel %vm206, %v4034, 0
  %4048 = vmatprep.subr.mxu0 0.0
  %4049 = vmatpush1.msra.mxu0 0.0
  %4050 = vmatprep.subr.mxu0 0.0
  %4051 = vmatpush1.msra.mxu0 0.0
  %4052 = vmatprep.subr.mxu0 0.0
  %4053 = vmatpush1.msra.mxu0 0.0
  %4054 = vmatprep.subr.mxu0 0.0
  %4055 = vmatpush1.msra.mxu0 0.0
  %4056 = vmatprep.subr.mxu0 0.0
  %4057 = vmatpush1.msra.mxu0 0.0
  %4058 = vmatprep.subr.mxu0 0.0
  %4059 = vmatpush1.msra.mxu0 0.0
  %4060 = vmatprep.subr.mxu0 0.0
  %4061 = vmatpush1.msra.mxu0 0.0
  %4062 = vmatprep.subr.mxu0 0.0
  %4063 = vmatpush1.msra.mxu0 0.0
  %4064 = vmatprep.subr.mxu0 0.0
  %4065 = vmatpush1.msra.mxu0 0.0
  %4066 = vmatprep.subr.mxu0 0.0
  %4067 = vmatpush1.msra.mxu0 0.0
  %4068 = vmatprep.subr.mxu0 0.0
  %4069 = vmatpush1.msra.mxu0 0.0
  %4070 = vmatprep.subr.mxu0 0.0
  %4071 = vmatpush1.msra.mxu0 0.0
  %4072 = vmatprep.subr.mxu0 0.0
  %4073 = vmatpush1.msra.mxu0 0.0
  %4074 = vmatprep.subr.mxu0 0.0
  %4075 = vmatpush1.msra.mxu0 0.0
  %4076 = vmatprep.subr.mxu0 0.0
  %4077 = vmatpush1.msra.mxu0 %v4046
  %4078 = vmatprep.subr.mxu0 0.0
  %4079 = vmatpush1.msra.mxu0 %v4033
  %4080 = vmatprep.subr.mxu0 0.0
  %4081 = vmatpush2.msra.mxu0 0.0
  %4082 = vmatprep.subr.mxu0 0.0
  %4083 = vmatpush2.msra.mxu0 0.0
  %4084 = vmatprep.subr.mxu0 0.0
  %4085 = vmatpush2.msra.mxu0 0.0
  %4086 = vmatprep.subr.mxu0 0.0
  %4087 = vmatpush2.msra.mxu0 0.0
  %4088 = vmatprep.subr.mxu0 0.0
  %4089 = vmatpush2.msra.mxu0 0.0
  %4090 = vmatprep.subr.mxu0 0.0
  %4091 = vmatpush2.msra.mxu0 0.0
  %4092 = vmatprep.subr.mxu0 0.0
  %4093 = vmatpush2.msra.mxu0 0.0
  %4094 = vmatprep.subr.mxu0 0.0
  %4095 = vmatpush2.msra.mxu0 0.0
  %4096 = vmatprep.subr.mxu0 0.0
  %4097 = vmatpush2.msra.mxu0 0.0
  %4098 = vmatprep.subr.mxu0 0.0
  %4099 = vmatpush2.msra.mxu0 0.0
  %4100 = vmatprep.subr.mxu0 0.0
  %4101 = vmatpush2.msra.mxu0 0.0
  %4102 = vmatprep.subr.mxu0 0.0
  %4103 = vmatpush2.msra.mxu0 0.0
  %4104 = vmatprep.subr.mxu0 0.0
  %4105 = vmatpush2.msra.mxu0 0.0
  %4106 = vmatprep.subr.mxu0 0.0
  %4107 = vmatpush2.msra.mxu0 0.0
  %4108 = vmatprep.subr.mxu0 0.0
  %4109 = vmatpush2.msra.mxu0 0.0
  %4110 = vmatprep.subr.mxu0 0.0
  %4111 = vmatpush2.msra.mxu0 0.0
  %4112 = vmatprep.mubr.f32.mxu0 0.0
  %4113 = vmatmul.mubr.f32.gmra.mxu0 %v4043
  %v4114 = vpop.f32.mrf.mxu0
  %v4115 = vadd.f32 %v4040, %v4114
  %v4116 = vpop.f32.mrf.mxu0
  %4117 = vdwg.mxu0
  %vm4118 = vcmask 1024
  %4119 = vst.msk [vmem:[%s19] sm:$0x3] %vm4118, %v4115
  // Predicated region
  $region78: #{e3egnn_edge_forward.1} parent=0 // pred_check
    _
  $region79: #{e3egnn_edge_forward.1} parent=0 // pred_check_branch
    %4121 = sbr.rel (0) target = $region81
  $region80: #{e3egnn_edge_forward.1} parent=0 // pred_region
    _
  $region81: #{e3egnn_edge_forward.1} parent=0 // pred_fallthru
    _
  // Predicated region
  $region82: #{e3egnn_edge_forward.1} parent=0 // pred_check
    _
  $region83: #{e3egnn_edge_forward.1} parent=0 // pred_check_branch
    %4123 = sbr.rel (0) target = $region85
  $region84: #{e3egnn_edge_forward.1} parent=0 // pred_region
    _
  $region85: #{e3egnn_edge_forward.1} parent=0 // pred_fallthru
    _

</llo_original>
